<compile_context>
chip_gen: v7x
topology: tpu7x:2x2x1
jax: 0.10.0
libtpu: 0.0.40
codegen_flags: <defaults>
</compile_context>

<pallas_src>
import math

import jax
import jax.numpy as jnp
from jax import lax
from jax.experimental import pallas as pl
from jax.experimental.pallas import tpu as pltpu

D_STATE = 2
EXPAND = 1
D_CONV = 4


# ----------------------------------------------------------------------------
# In-kernel helpers (traced into the single fused kernel, all values in VMEM)
# ----------------------------------------------------------------------------
def _silu(v):
    return v / (1.0 + jnp.exp(-v))


def _softplus(v):
    return jnp.maximum(v, 0.0) + jnp.log(1.0 + jnp.exp(-jnp.abs(v)))


def _linear_silu(x, w, b):
    return _silu(jnp.dot(x, w, preferred_element_type=jnp.float32) + b)


def _mamba_ln(x, w_in, conv_w, conv_b, w_xproj, dt_bias, a_flat, d_skip,
              w_out, ln_g, ln_b):
    """Mamba block + LayerNorm on one (L, d_model) slab, all in VMEM."""
    L = x.shape[0]
    d_conv, d_inner = conv_w.shape
    sd = a_flat.shape[1]
    d_state = sd // d_inner

    # in_proj: a single matmul, then split x / z halves (lane slices in-vreg).
    xz = jnp.dot(x, w_in, preferred_element_type=jnp.float32)     # (L, 2*di)
    xi = xz[:, :d_inner]
    z = xz[:, d_inner:]

    # Causal depthwise conv1d + bias + SiLU via XLU sublane rolls + iota mask.
    rows = lax.broadcasted_iota(jnp.int32, (L, d_inner), 0)
    acc = xi * conv_w[d_conv - 1:d_conv, :]
    for s in range(1, d_conv):                                    # static, =3
        xs = pltpu.roll(xi, shift=s, axis=0)                      # xs[t]=xi[t-s]
        xs = jnp.where(rows >= s, xs, 0.0)
        acc = acc + xs * conv_w[d_conv - 1 - s:d_conv - s, :]
    xc = _silu(acc + conv_b)                                      # (L, d_inner)

    # Merged x_proj matmul:  [ dt (dt_proj folded in) | B | C ]  in one dot.
    proj = jnp.dot(xc, w_xproj, preferred_element_type=jnp.float32)
    dt = _softplus(proj[:, :d_inner] + dt_bias)                   # (L, d_inner)
    Bc = proj[:, d_inner:d_inner + d_state]                       # (L, S)
    Cc = proj[:, d_inner + d_state:]                              # (L, S)

    # Scan coefficients: dA = exp(dt*A) in ONE EUP pass over (L, S*d_inner).
    dt_t = jnp.concatenate([dt] * d_state, axis=1)                # (L, sd)
    dA = jnp.exp(dt_t * a_flat)
    dtx = dt * xc
    dB = jnp.concatenate([dtx * Bc[:, n:n + 1] for n in range(d_state)], axis=1)

    # Log-depth Hillis-Steele scan:  h[t] = dA[t]*h[t-1] + dB[t],  h[-1] = 0.
    rows_sd = lax.broadcasted_iota(jnp.int32, (L, sd), 0)
    a, b = dA, dB
    off = 1
    while off < L:                                                # ceil(log2 L)
        a_sh = jnp.where(rows_sd >= off, pltpu.roll(a, shift=off, axis=0), 1.0)
        b_sh = jnp.where(rows_sd >= off, pltpu.roll(b, shift=off, axis=0), 0.0)
        b = a * b_sh + b
        a = a * a_sh
        off *= 2
    h = b                                                         # (L, sd)

    # y = D*x + sum_n C[:,n]*h_n ; gate with silu(z); out_proj; LayerNorm.
    y = xc * d_skip
    for n in range(d_state):
        y = y + Cc[:, n:n + 1] * h[:, n * d_inner:(n + 1) * d_inner]
    y = y * _silu(z)

    out = jnp.dot(y, w_out, preferred_element_type=jnp.float32)   # (L, out_c)
    mu = jnp.mean(out, axis=-1, keepdims=True)
    ctr = out - mu
    var = jnp.mean(ctr * ctr, axis=-1, keepdims=True)
    return ctr * lax.rsqrt(var + 1e-5) * ln_g + ln_b


# ----------------------------------------------------------------------------
# The single fused Branch12 kernel (grid over batch)
# ----------------------------------------------------------------------------
def _branch12_kernel(x_ref,
                     l1w, l1b,
                     m1_win, m1_cw, m1_cb, m1_wxp, m1_dtb, m1_A, m1_D, m1_wo,
                     m1_g, m1_b,
                     l2w, l2b,
                     m2_win, m2_cw, m2_cb, m2_wxp, m2_dtb, m2_A, m2_D, m2_wo,
                     m2_g, m2_b,
                     o_ref):
    x = x_ref[...]                                                # (L, C_in)

    # Branch 1: Linear + SiLU (dropout = identity).
    x1 = _linear_silu(x, l1w[...], l1b[...])

    # Branch 2: SSM_cha -> Linear + SiLU -> SSM_cha (dropouts = identity).
    t = _mamba_ln(x, m1_win[...], m1_cw[...], m1_cb[...], m1_wxp[...],
                  m1_dtb[...], m1_A[...], m1_D[...], m1_wo[...],
                  m1_g[...], m1_b[...])
    t = _linear_silu(t, l2w[...], l2b[...])
    x2 = _mamba_ln(t, m2_win[...], m2_cw[...], m2_cb[...], m2_wxp[...],
                   m2_dtb[...], m2_A[...], m2_D[...], m2_wo[...],
                   m2_g[...], m2_b[...])

    o_ref[...] = x1 + x2


def _ssm_weight_list(sp):
    m = sp["mamba"]
    return [m["w_in"], m["conv_w"], m["conv_b"], m["w_xproj"], m["dt_bias"],
            m["A_flat"], m["Dskip"], m["w_out"], sp["ln_g"], sp["ln_b"]]


def fused_branch12(x, P):
    """x: (B, L, C_in) f32 -> (B, L, out_c) f32.  One pallas_call, grid=(B,)."""
    B, L, d_model = x.shape
    out_c = P["lin"]["w"].shape[1]

    weights = ([P["lin"]["w"], P["lin"]["b"]]
               + _ssm_weight_list(P["br2"]["ssm1"])
               + [P["br2"]["lin"]["w"], P["br2"]["lin"]["b"]]
               + _ssm_weight_list(P["br2"]["ssm2"]))

    def w_spec(a):
        return pl.BlockSpec(a.shape, lambda i: (0, 0))            # all weights 2D

    return pl.pallas_call(
        _branch12_kernel,
        grid=(B,),
        out_shape=jax.ShapeDtypeStruct((B, L, out_c), jnp.float32),
        in_specs=[pl.BlockSpec((None, L, d_model), lambda i: (i, 0, 0))]
                 + [w_spec(a) for a in weights],
        out_specs=pl.BlockSpec((None, L, out_c), lambda i: (i, 0, 0)),
        compiler_params=pltpu.CompilerParams(
            dimension_semantics=("parallel",)),    # B>=2 blocks -> both v7x TCs
    )(x, *weights)


# ----------------------------------------------------------------------------
# Deterministic synthetic parameters + one-time preparation
# ----------------------------------------------------------------------------
def init_linear(key, n_in, n_out, bias=True, scale=0.1):
    kw, kb = jax.random.split(key)
    w = scale * jax.random.normal(kw, (n_in, n_out), jnp.float32)
    b = (scale * jax.random.normal(kb, (n_out,), jnp.float32)
         if bias else jnp.zeros((n_out,), jnp.float32))
    return {"w": w, "b": b}


def init_mamba(key, d_model, out_c, d_state=D_STATE, expand=EXPAND,
               d_conv=D_CONV):
    d_inner = expand * d_model
    dt_rank = math.ceil(d_model / 16)
    ks = jax.random.split(key, 6)
    p = {
        "in_proj": init_linear(ks[0], d_model, 2 * d_inner, bias=False),
        "conv_w": 0.3 * jax.random.normal(ks[1], (d_conv, d_inner), jnp.float32),
        "conv_b": 0.1 * jax.random.normal(ks[2], (d_inner,), jnp.float32),
        "x_proj": init_linear(ks[3], d_inner, dt_rank + 2 * d_state, bias=False),
        "dt_proj": init_linear(ks[4], dt_rank, d_inner, bias=True),
        "out_proj": init_linear(ks[5], d_inner, out_c, bias=False),
        "A_log": jnp.log(jnp.tile(
            jnp.arange(1, d_state + 1, dtype=jnp.float32)[None, :],
            (d_inner, 1))),
        "D": jnp.ones((d_inner,), jnp.float32),
    }
    cfg = {"d_inner": d_inner, "dt_rank": dt_rank, "d_state": d_state}
    return {"params": p, "cfg": cfg}


def init_ssm_cha(key, n_ch, out_ch):
    return {"mamba": init_mamba(key, n_ch, out_ch),
            "ln_g": jnp.ones((out_ch,), jnp.float32),
            "ln_b": jnp.zeros((out_ch,), jnp.float32)}


def init_down(key, in_c, out_c):
    ks = jax.random.split(key, 4)
    return {
        "lin": init_linear(ks[0], in_c, out_c),          # Branch12.linear
        "br2": {
            "ssm1": init_ssm_cha(ks[1], in_c, out_c),
            "lin": init_linear(ks[2], out_c, out_c),
            "ssm2": init_ssm_cha(ks[3], out_c, out_c),
        },
    }


def prep_linear(p):
    return {"w": p["w"], "b": p["b"].reshape(1, -1)}


def prep_mamba(m):
    """One-time weight prep: fold dt_proj into x_proj, merge dt/B/C weights
    into one matmul, materialize A = -exp(A_log) flattened to the scan layout."""
    p, cfg = m["params"], m["cfg"]
    d_inner, dt_rank, d_state = cfg["d_inner"], cfg["dt_rank"], cfg["d_state"]
    w_x = p["x_proj"]["w"]                            # (d_inner, dt_rank+2*S)
    w_dt = p["dt_proj"]["w"]                          # (dt_rank, d_inner)
    # x @ W_x[:, :dt_rank] @ W_dt == x @ (W_x[:, :dt_rank] @ W_dt)
    w_dt_comb = w_x[:, :dt_rank] @ w_dt               # (d_inner, d_inner)
    w_B = w_x[:, dt_rank:dt_rank + d_state]
    w_C = w_x[:, dt_rank + d_state:]
    A = -jnp.exp(p["A_log"])                          # (d_inner, d_state)
    return {
        "w_in": p["in_proj"]["w"],                    # (d_model, 2*d_inner)
        "conv_w": p["conv_w"],                        # (d_conv, d_inner)
        "conv_b": p["conv_b"].reshape(1, d_inner),
        "w_xproj": jnp.concatenate([w_dt_comb, w_B, w_C], axis=1),
        "dt_bias": p["dt_proj"]["b"].reshape(1, d_inner),
        "A_flat": A.T.reshape(1, d_state * d_inner),  # [n=0 chans..., n=1 ...]
        "Dskip": p["D"].reshape(1, d_inner),
        "w_out": p["out_proj"]["w"],                  # (d_inner, out_c)
    }


def prep_ssm_cha(p):
    return {"mamba": prep_mamba(p["mamba"]),
            "ln_g": p["ln_g"].reshape(1, -1),
            "ln_b": p["ln_b"].reshape(1, -1)}


def prep_down(p):
    return {"lin": prep_linear(p["lin"]),
            "br2": {"ssm1": prep_ssm_cha(p["br2"]["ssm1"]),
                    "lin": prep_linear(p["br2"]["lin"]),
                    "ssm2": prep_ssm_cha(p["br2"]["ssm2"])}}


# ----------------------------------------------------------------------------
# Down forward:  AvgPool2d(2)  ->  single fused Branch12 Pallas kernel
# ----------------------------------------------------------------------------
def down_fwd(x, P):
    """x: (B, C, H, W) NCHW -> (B, out_c, H//2, W//2)."""
    b, c, h, w = x.shape
    h2, w2 = h // 2, w // 2
    # AvgPool2d(2) + NCHW -> channels-last (B, L, C): tiny XLA glue; the whole
    # Branch12 then runs in ONE Pallas kernel with no intermediate HBM trips.
    xp = x.reshape(b, c, h2, 2, w2, 2).mean(axis=(3, 5))
    xt = jnp.transpose(xp, (0, 2, 3, 1)).reshape(b, h2 * w2, c)
    y = fused_branch12(xt, P)                         # (B, L, out_c)
    out_c = y.shape[-1]
    return jnp.transpose(y.reshape(b, h2, w2, out_c), (0, 3, 1, 2))


if __name__ == "__main__":
    key = jax.random.PRNGKey(0)
    kx, kp = jax.random.split(key)

    B, C_IN, H, W = 2, 4, 16, 16
    OUT_C = 8
    assert H % 2 == 0 and W % 2 == 0

    x = jax.random.normal(kx, (B, C_IN, H, W), jnp.float32)
    params = prep_down(init_down(kp, C_IN, OUT_C))

    fwd = jax.jit(down_fwd)
    y = jax.block_until_ready(fwd(x, params))

    assert y.shape == (B, OUT_C, H // 2, W // 2), y.shape
    assert bool(jnp.all(jnp.isfinite(y)))
    print("KERNEL_OK")
</pallas_src>

<mosaic_0001>
module attributes {stable_mosaic.version = 11 : i64} {
  func.func @_branch12_kernel(%arg0: i32, %arg1: memref<1x64x4xf32, #tpu.memory_space<vmem>>, %arg2: memref<4x8xf32, #tpu.memory_space<vmem>>, %arg3: memref<1x8xf32, #tpu.memory_space<vmem>>, %arg4: memref<4x8xf32, #tpu.memory_space<vmem>>, %arg5: memref<4x4xf32, #tpu.memory_space<vmem>>, %arg6: memref<1x4xf32, #tpu.memory_space<vmem>>, %arg7: memref<4x8xf32, #tpu.memory_space<vmem>>, %arg8: memref<1x4xf32, #tpu.memory_space<vmem>>, %arg9: memref<1x8xf32, #tpu.memory_space<vmem>>, %arg10: memref<1x4xf32, #tpu.memory_space<vmem>>, %arg11: memref<4x8xf32, #tpu.memory_space<vmem>>, %arg12: memref<1x8xf32, #tpu.memory_space<vmem>>, %arg13: memref<1x8xf32, #tpu.memory_space<vmem>>, %arg14: memref<8x8xf32, #tpu.memory_space<vmem>>, %arg15: memref<1x8xf32, #tpu.memory_space<vmem>>, %arg16: memref<8x16xf32, #tpu.memory_space<vmem>>, %arg17: memref<4x8xf32, #tpu.memory_space<vmem>>, %arg18: memref<1x8xf32, #tpu.memory_space<vmem>>, %arg19: memref<8x12xf32, #tpu.memory_space<vmem>>, %arg20: memref<1x8xf32, #tpu.memory_space<vmem>>, %arg21: memref<1x16xf32, #tpu.memory_space<vmem>>, %arg22: memref<1x8xf32, #tpu.memory_space<vmem>>, %arg23: memref<8x8xf32, #tpu.memory_space<vmem>>, %arg24: memref<1x8xf32, #tpu.memory_space<vmem>>, %arg25: memref<1x8xf32, #tpu.memory_space<vmem>>, %arg26: memref<1x64x8xf32, #tpu.memory_space<vmem>>) attributes {dimension_semantics = [#tpu.dimension_semantics<parallel>], iteration_bounds = array<i64: 2>, scalar_prefetch = 0 : i64, scratch_operands = 0 : i64, tpu.core_type = #tpu.core_type<tc>, window_params = [{transform_indices = @transform_0, window_bounds = array<i64: 1, 64, 4>}, {pipeline_mode = #tpu.pipeline_mode<synchronous>, transform_indices = @transform_1, window_bounds = array<i64: 4, 8>}, {pipeline_mode = #tpu.pipeline_mode<synchronous>, transform_indices = @transform_2, window_bounds = array<i64: 1, 8>}, {pipeline_mode = #tpu.pipeline_mode<synchronous>, transform_indices = @transform_3, window_bounds = array<i64: 4, 8>}, {pipeline_mode = #tpu.pipeline_mode<synchronous>, transform_indices = @transform_4, window_bounds = array<i64: 4, 4>}, {pipeline_mode = #tpu.pipeline_mode<synchronous>, transform_indices = @transform_5, window_bounds = array<i64: 1, 4>}, {pipeline_mode = #tpu.pipeline_mode<synchronous>, transform_indices = @transform_6, window_bounds = array<i64: 4, 8>}, {pipeline_mode = #tpu.pipeline_mode<synchronous>, transform_indices = @transform_7, window_bounds = array<i64: 1, 4>}, {pipeline_mode = #tpu.pipeline_mode<synchronous>, transform_indices = @transform_8, window_bounds = array<i64: 1, 8>}, {pipeline_mode = #tpu.pipeline_mode<synchronous>, transform_indices = @transform_9, window_bounds = array<i64: 1, 4>}, {pipeline_mode = #tpu.pipeline_mode<synchronous>, transform_indices = @transform_10, window_bounds = array<i64: 4, 8>}, {pipeline_mode = #tpu.pipeline_mode<synchronous>, transform_indices = @transform_11, window_bounds = array<i64: 1, 8>}, {pipeline_mode = #tpu.pipeline_mode<synchronous>, transform_indices = @transform_12, window_bounds = array<i64: 1, 8>}, {pipeline_mode = #tpu.pipeline_mode<synchronous>, transform_indices = @transform_13, window_bounds = array<i64: 8, 8>}, {pipeline_mode = #tpu.pipeline_mode<synchronous>, transform_indices = @transform_14, window_bounds = array<i64: 1, 8>}, {pipeline_mode = #tpu.pipeline_mode<synchronous>, transform_indices = @transform_15, window_bounds = array<i64: 8, 16>}, {pipeline_mode = #tpu.pipeline_mode<synchronous>, transform_indices = @transform_16, window_bounds = array<i64: 4, 8>}, {pipeline_mode = #tpu.pipeline_mode<synchronous>, transform_indices = @transform_17, window_bounds = array<i64: 1, 8>}, {pipeline_mode = #tpu.pipeline_mode<synchronous>, transform_indices = @transform_18, window_bounds = array<i64: 8, 12>}, {pipeline_mode = #tpu.pipeline_mode<synchronous>, transform_indices = @transform_19, window_bounds = array<i64: 1, 8>}, {pipeline_mode = #tpu.pipeline_mode<synchronous>, transform_indices = @transform_20, window_bounds = array<i64: 1, 16>}, {pipeline_mode = #tpu.pipeline_mode<synchronous>, transform_indices = @transform_21, window_bounds = array<i64: 1, 8>}, {pipeline_mode = #tpu.pipeline_mode<synchronous>, transform_indices = @transform_22, window_bounds = array<i64: 8, 8>}, {pipeline_mode = #tpu.pipeline_mode<synchronous>, transform_indices = @transform_23, window_bounds = array<i64: 1, 8>}, {pipeline_mode = #tpu.pipeline_mode<synchronous>, transform_indices = @transform_24, window_bounds = array<i64: 1, 8>}, {transform_indices = @transform_25, window_bounds = array<i64: 1, 64, 8>}]} {
    %c0 = arith.constant 0 : index
    %c0_0 = arith.constant 0 : index
    %c0_1 = arith.constant 0 : index
    %0 = vector.load %arg1[%c0, %c0_0, %c0_1] : memref<1x64x4xf32, #tpu.memory_space<vmem>>, vector<1x64x4xf32>
    %1 = vector.shape_cast %0 : vector<1x64x4xf32> to vector<64x4xf32>
    %c0_2 = arith.constant 0 : index
    %c0_3 = arith.constant 0 : index
    %2 = vector.load %arg2[%c0_2, %c0_3] : memref<4x8xf32, #tpu.memory_space<vmem>>, vector<4x8xf32>
    %c0_4 = arith.constant 0 : index
    %c0_5 = arith.constant 0 : index
    %3 = vector.load %arg3[%c0_4, %c0_5] : memref<1x8xf32, #tpu.memory_space<vmem>>, vector<1x8xf32>
    %cst = arith.constant dense<0.000000e+00> : vector<64x8xf32>
    %4 = tpu.matmul %1, %2, %cst {dimension_numbers = #tpu.dot_dimension_numbers<[1], [0], [0], [1], [0, 0, 1, 1], [], []>} : vector<64x4xf32>, vector<4x8xf32>, vector<64x8xf32> -> vector<64x8xf32>
    %5 = vector.broadcast %3 : vector<1x8xf32> to vector<64x8xf32>
    %6 = arith.addf %4, %5 : vector<64x8xf32>
    %cst_6 = arith.constant 0.000000e+00 : f32
    %7 = vector.broadcast %cst_6 : f32 to vector<64x8xf32>
    %8 = arith.subf %7, %6 : vector<64x8xf32>
    %9 = math.exp %8 : vector<64x8xf32>
    %cst_7 = arith.constant 1.000000e+00 : f32
    %10 = vector.broadcast %cst_7 : f32 to vector<64x8xf32>
    %11 = arith.addf %10, %9 : vector<64x8xf32>
    %12 = arith.divf %6, %11 : vector<64x8xf32>
    %c0_8 = arith.constant 0 : index
    %c0_9 = arith.constant 0 : index
    %13 = vector.load %arg4[%c0_8, %c0_9] : memref<4x8xf32, #tpu.memory_space<vmem>>, vector<4x8xf32>
    %c0_10 = arith.constant 0 : index
    %c0_11 = arith.constant 0 : index
    %14 = vector.load %arg5[%c0_10, %c0_11] : memref<4x4xf32, #tpu.memory_space<vmem>>, vector<4x4xf32>
    %c0_12 = arith.constant 0 : index
    %c0_13 = arith.constant 0 : index
    %15 = vector.load %arg6[%c0_12, %c0_13] : memref<1x4xf32, #tpu.memory_space<vmem>>, vector<1x4xf32>
    %c0_14 = arith.constant 0 : index
    %c0_15 = arith.constant 0 : index
    %16 = vector.load %arg7[%c0_14, %c0_15] : memref<4x8xf32, #tpu.memory_space<vmem>>, vector<4x8xf32>
    %c0_16 = arith.constant 0 : index
    %c0_17 = arith.constant 0 : index
    %17 = vector.load %arg8[%c0_16, %c0_17] : memref<1x4xf32, #tpu.memory_space<vmem>>, vector<1x4xf32>
    %c0_18 = arith.constant 0 : index
    %c0_19 = arith.constant 0 : index
    %18 = vector.load %arg9[%c0_18, %c0_19] : memref<1x8xf32, #tpu.memory_space<vmem>>, vector<1x8xf32>
    %c0_20 = arith.constant 0 : index
    %c0_21 = arith.constant 0 : index
    %19 = vector.load %arg10[%c0_20, %c0_21] : memref<1x4xf32, #tpu.memory_space<vmem>>, vector<1x4xf32>
    %c0_22 = arith.constant 0 : index
    %c0_23 = arith.constant 0 : index
    %20 = vector.load %arg11[%c0_22, %c0_23] : memref<4x8xf32, #tpu.memory_space<vmem>>, vector<4x8xf32>
    %c0_24 = arith.constant 0 : index
    %c0_25 = arith.constant 0 : index
    %21 = vector.load %arg12[%c0_24, %c0_25] : memref<1x8xf32, #tpu.memory_space<vmem>>, vector<1x8xf32>
    %c0_26 = arith.constant 0 : index
    %c0_27 = arith.constant 0 : index
    %22 = vector.load %arg13[%c0_26, %c0_27] : memref<1x8xf32, #tpu.memory_space<vmem>>, vector<1x8xf32>
    %cst_28 = arith.constant dense<0.000000e+00> : vector<64x8xf32>
    %23 = tpu.matmul %1, %13, %cst_28 {dimension_numbers = #tpu.dot_dimension_numbers<[1], [0], [0], [1], [0, 0, 1, 1], [], []>} : vector<64x4xf32>, vector<4x8xf32>, vector<64x8xf32> -> vector<64x8xf32>
    %24 = vector.extract_strided_slice %23 {offsets = [0, 0], sizes = [64, 4], strides = [1, 1]} : vector<64x8xf32> to vector<64x4xf32>
    %25 = vector.extract_strided_slice %23 {offsets = [0, 4], sizes = [64, 4], strides = [1, 1]} : vector<64x8xf32> to vector<64x4xf32>
    %26 = tpu.iota {dimensions = array<i32: 0>} : vector<64x4xi32>
    %27 = vector.extract_strided_slice %14 {offsets = [3, 0], sizes = [1, 4], strides = [1, 1]} : vector<4x4xf32> to vector<1x4xf32>
    %28 = vector.broadcast %27 : vector<1x4xf32> to vector<64x4xf32>
    %29 = arith.mulf %24, %28 : vector<64x4xf32>
    %c1_i32 = arith.constant 1 : i32
    %30 = tpu.dynamic_rotate %24 by %c1_i32 dim 0 : vector<64x4xf32>, i32 -> vector<64x4xf32>
    %c1_i32_29 = arith.constant 1 : i32
    %31 = vector.broadcast %c1_i32_29 : i32 to vector<64x4xi32>
    %32 = arith.cmpi sge, %26, %31 : vector<64x4xi32>
    %cst_30 = arith.constant 0.000000e+00 : f32
    %33 = vector.broadcast %cst_30 : f32 to vector<64x4xf32>
    %34 = arith.select %32, %30, %33 : vector<64x4xi1>, vector<64x4xf32>
    %35 = vector.extract_strided_slice %14 {offsets = [2, 0], sizes = [1, 4], strides = [1, 1]} : vector<4x4xf32> to vector<1x4xf32>
    %36 = vector.broadcast %35 : vector<1x4xf32> to vector<64x4xf32>
    %37 = arith.mulf %34, %36 : vector<64x4xf32>
    %38 = arith.addf %29, %37 : vector<64x4xf32>
    %c2_i32 = arith.constant 2 : i32
    %39 = tpu.dynamic_rotate %24 by %c2_i32 dim 0 : vector<64x4xf32>, i32 -> vector<64x4xf32>
    %c2_i32_31 = arith.constant 2 : i32
    %40 = vector.broadcast %c2_i32_31 : i32 to vector<64x4xi32>
    %41 = arith.cmpi sge, %26, %40 : vector<64x4xi32>
    %cst_32 = arith.constant 0.000000e+00 : f32
    %42 = vector.broadcast %cst_32 : f32 to vector<64x4xf32>
    %43 = arith.select %41, %39, %42 : vector<64x4xi1>, vector<64x4xf32>
    %44 = vector.extract_strided_slice %14 {offsets = [1, 0], sizes = [1, 4], strides = [1, 1]} : vector<4x4xf32> to vector<1x4xf32>
    %45 = vector.broadcast %44 : vector<1x4xf32> to vector<64x4xf32>
    %46 = arith.mulf %43, %45 : vector<64x4xf32>
    %47 = arith.addf %38, %46 : vector<64x4xf32>
    %c3_i32 = arith.constant 3 : i32
    %48 = tpu.dynamic_rotate %24 by %c3_i32 dim 0 : vector<64x4xf32>, i32 -> vector<64x4xf32>
    %c3_i32_33 = arith.constant 3 : i32
    %49 = vector.broadcast %c3_i32_33 : i32 to vector<64x4xi32>
    %50 = arith.cmpi sge, %26, %49 : vector<64x4xi32>
    %cst_34 = arith.constant 0.000000e+00 : f32
    %51 = vector.broadcast %cst_34 : f32 to vector<64x4xf32>
    %52 = arith.select %50, %48, %51 : vector<64x4xi1>, vector<64x4xf32>
    %53 = vector.extract_strided_slice %14 {offsets = [0, 0], sizes = [1, 4], strides = [1, 1]} : vector<4x4xf32> to vector<1x4xf32>
    %54 = vector.broadcast %53 : vector<1x4xf32> to vector<64x4xf32>
    %55 = arith.mulf %52, %54 : vector<64x4xf32>
    %56 = arith.addf %47, %55 : vector<64x4xf32>
    %57 = vector.broadcast %15 : vector<1x4xf32> to vector<64x4xf32>
    %58 = arith.addf %56, %57 : vector<64x4xf32>
    %cst_35 = arith.constant 0.000000e+00 : f32
    %59 = vector.broadcast %cst_35 : f32 to vector<64x4xf32>
    %60 = arith.subf %59, %58 : vector<64x4xf32>
    %61 = math.exp %60 : vector<64x4xf32>
    %cst_36 = arith.constant 1.000000e+00 : f32
    %62 = vector.broadcast %cst_36 : f32 to vector<64x4xf32>
    %63 = arith.addf %62, %61 : vector<64x4xf32>
    %64 = arith.divf %58, %63 : vector<64x4xf32>
    %cst_37 = arith.constant dense<0.000000e+00> : vector<64x8xf32>
    %65 = tpu.matmul %64, %16, %cst_37 {dimension_numbers = #tpu.dot_dimension_numbers<[1], [0], [0], [1], [0, 0, 1, 1], [], []>} : vector<64x4xf32>, vector<4x8xf32>, vector<64x8xf32> -> vector<64x8xf32>
    %66 = vector.extract_strided_slice %65 {offsets = [0, 0], sizes = [64, 4], strides = [1, 1]} : vector<64x8xf32> to vector<64x4xf32>
    %67 = vector.broadcast %17 : vector<1x4xf32> to vector<64x4xf32>
    %68 = arith.addf %66, %67 : vector<64x4xf32>
    %cst_38 = arith.constant 0.000000e+00 : f32
    %69 = vector.broadcast %cst_38 : f32 to vector<64x4xf32>
    %70 = arith.maximumf %68, %69 : vector<64x4xf32>
    %71 = math.absf %68 : vector<64x4xf32>
    %cst_39 = arith.constant 0.000000e+00 : f32
    %72 = vector.broadcast %cst_39 : f32 to vector<64x4xf32>
    %73 = arith.subf %72, %71 : vector<64x4xf32>
    %74 = math.exp %73 : vector<64x4xf32>
    %cst_40 = arith.constant 1.000000e+00 : f32
    %75 = vector.broadcast %cst_40 : f32 to vector<64x4xf32>
    %76 = arith.addf %75, %74 : vector<64x4xf32>
    %77 = math.log %76 : vector<64x4xf32>
    %78 = arith.addf %70, %77 : vector<64x4xf32>
    %79 = vector.extract_strided_slice %65 {offsets = [0, 4], sizes = [64, 2], strides = [1, 1]} : vector<64x8xf32> to vector<64x2xf32>
    %80 = vector.extract_strided_slice %65 {offsets = [0, 6], sizes = [64, 2], strides = [1, 1]} : vector<64x8xf32> to vector<64x2xf32>
    %81 = tpu.concatenate %78, %78 in 1 : vector<64x4xf32>, vector<64x4xf32> -> vector<64x8xf32>
    %82 = vector.broadcast %18 : vector<1x8xf32> to vector<64x8xf32>
    %83 = arith.mulf %81, %82 : vector<64x8xf32>
    %84 = math.exp %83 : vector<64x8xf32>
    %85 = arith.mulf %78, %64 : vector<64x4xf32>
    %86 = vector.extract_strided_slice %79 {offsets = [0, 0], sizes = [64, 1], strides = [1, 1]} : vector<64x2xf32> to vector<64x1xf32>
    %87 = vector.broadcast %86 : vector<64x1xf32> to vector<64x4xf32>
    %88 = arith.mulf %85, %87 : vector<64x4xf32>
    %89 = vector.extract_strided_slice %79 {offsets = [0, 1], sizes = [64, 1], strides = [1, 1]} : vector<64x2xf32> to vector<64x1xf32>
    %90 = vector.broadcast %89 : vector<64x1xf32> to vector<64x4xf32>
    %91 = arith.mulf %85, %90 : vector<64x4xf32>
    %92 = tpu.concatenate %88, %91 in 1 : vector<64x4xf32>, vector<64x4xf32> -> vector<64x8xf32>
    %93 = tpu.iota {dimensions = array<i32: 0>} : vector<64x8xi32>
    %c1_i32_41 = arith.constant 1 : i32
    %94 = vector.broadcast %c1_i32_41 : i32 to vector<64x8xi32>
    %95 = arith.cmpi sge, %93, %94 : vector<64x8xi32>
    %c1_i32_42 = arith.constant 1 : i32
    %96 = tpu.dynamic_rotate %84 by %c1_i32_42 dim 0 : vector<64x8xf32>, i32 -> vector<64x8xf32>
    %cst_43 = arith.constant 1.000000e+00 : f32
    %97 = vector.broadcast %cst_43 : f32 to vector<64x8xf32>
    %98 = arith.select %95, %96, %97 : vector<64x8xi1>, vector<64x8xf32>
    %c1_i32_44 = arith.constant 1 : i32
    %99 = vector.broadcast %c1_i32_44 : i32 to vector<64x8xi32>
    %100 = arith.cmpi sge, %93, %99 : vector<64x8xi32>
    %c1_i32_45 = arith.constant 1 : i32
    %101 = tpu.dynamic_rotate %92 by %c1_i32_45 dim 0 : vector<64x8xf32>, i32 -> vector<64x8xf32>
    %cst_46 = arith.constant 0.000000e+00 : f32
    %102 = vector.broadcast %cst_46 : f32 to vector<64x8xf32>
    %103 = arith.select %100, %101, %102 : vector<64x8xi1>, vector<64x8xf32>
    %104 = arith.mulf %84, %103 : vector<64x8xf32>
    %105 = arith.addf %104, %92 : vector<64x8xf32>
    %106 = arith.mulf %84, %98 : vector<64x8xf32>
    %c2_i32_47 = arith.constant 2 : i32
    %107 = vector.broadcast %c2_i32_47 : i32 to vector<64x8xi32>
    %108 = arith.cmpi sge, %93, %107 : vector<64x8xi32>
    %c2_i32_48 = arith.constant 2 : i32
    %109 = tpu.dynamic_rotate %106 by %c2_i32_48 dim 0 : vector<64x8xf32>, i32 -> vector<64x8xf32>
    %cst_49 = arith.constant 1.000000e+00 : f32
    %110 = vector.broadcast %cst_49 : f32 to vector<64x8xf32>
    %111 = arith.select %108, %109, %110 : vector<64x8xi1>, vector<64x8xf32>
    %c2_i32_50 = arith.constant 2 : i32
    %112 = vector.broadcast %c2_i32_50 : i32 to vector<64x8xi32>
    %113 = arith.cmpi sge, %93, %112 : vector<64x8xi32>
    %c2_i32_51 = arith.constant 2 : i32
    %114 = tpu.dynamic_rotate %105 by %c2_i32_51 dim 0 : vector<64x8xf32>, i32 -> vector<64x8xf32>
    %cst_52 = arith.constant 0.000000e+00 : f32
    %115 = vector.broadcast %cst_52 : f32 to vector<64x8xf32>
    %116 = arith.select %113, %114, %115 : vector<64x8xi1>, vector<64x8xf32>
    %117 = arith.mulf %106, %116 : vector<64x8xf32>
    %118 = arith.addf %117, %105 : vector<64x8xf32>
    %119 = arith.mulf %106, %111 : vector<64x8xf32>
    %c4_i32 = arith.constant 4 : i32
    %120 = vector.broadcast %c4_i32 : i32 to vector<64x8xi32>
    %121 = arith.cmpi sge, %93, %120 : vector<64x8xi32>
    %c4_i32_53 = arith.constant 4 : i32
    %122 = tpu.dynamic_rotate %119 by %c4_i32_53 dim 0 : vector<64x8xf32>, i32 -> vector<64x8xf32>
    %cst_54 = arith.constant 1.000000e+00 : f32
    %123 = vector.broadcast %cst_54 : f32 to vector<64x8xf32>
    %124 = arith.select %121, %122, %123 : vector<64x8xi1>, vector<64x8xf32>
    %c4_i32_55 = arith.constant 4 : i32
    %125 = vector.broadcast %c4_i32_55 : i32 to vector<64x8xi32>
    %126 = arith.cmpi sge, %93, %125 : vector<64x8xi32>
    %c4_i32_56 = arith.constant 4 : i32
    %127 = tpu.dynamic_rotate %118 by %c4_i32_56 dim 0 : vector<64x8xf32>, i32 -> vector<64x8xf32>
    %cst_57 = arith.constant 0.000000e+00 : f32
    %128 = vector.broadcast %cst_57 : f32 to vector<64x8xf32>
    %129 = arith.select %126, %127, %128 : vector<64x8xi1>, vector<64x8xf32>
    %130 = arith.mulf %119, %129 : vector<64x8xf32>
    %131 = arith.addf %130, %118 : vector<64x8xf32>
    %132 = arith.mulf %119, %124 : vector<64x8xf32>
    %c8_i32 = arith.constant 8 : i32
    %133 = vector.broadcast %c8_i32 : i32 to vector<64x8xi32>
    %134 = arith.cmpi sge, %93, %133 : vector<64x8xi32>
    %c8_i32_58 = arith.constant 8 : i32
    %135 = tpu.dynamic_rotate %132 by %c8_i32_58 dim 0 : vector<64x8xf32>, i32 -> vector<64x8xf32>
    %cst_59 = arith.constant 1.000000e+00 : f32
    %136 = vector.broadcast %cst_59 : f32 to vector<64x8xf32>
    %137 = arith.select %134, %135, %136 : vector<64x8xi1>, vector<64x8xf32>
    %c8_i32_60 = arith.constant 8 : i32
    %138 = vector.broadcast %c8_i32_60 : i32 to vector<64x8xi32>
    %139 = arith.cmpi sge, %93, %138 : vector<64x8xi32>
    %c8_i32_61 = arith.constant 8 : i32
    %140 = tpu.dynamic_rotate %131 by %c8_i32_61 dim 0 : vector<64x8xf32>, i32 -> vector<64x8xf32>
    %cst_62 = arith.constant 0.000000e+00 : f32
    %141 = vector.broadcast %cst_62 : f32 to vector<64x8xf32>
    %142 = arith.select %139, %140, %141 : vector<64x8xi1>, vector<64x8xf32>
    %143 = arith.mulf %132, %142 : vector<64x8xf32>
    %144 = arith.addf %143, %131 : vector<64x8xf32>
    %145 = arith.mulf %132, %137 : vector<64x8xf32>
    %c16_i32 = arith.constant 16 : i32
    %146 = vector.broadcast %c16_i32 : i32 to vector<64x8xi32>
    %147 = arith.cmpi sge, %93, %146 : vector<64x8xi32>
    %c16_i32_63 = arith.constant 16 : i32
    %148 = tpu.dynamic_rotate %145 by %c16_i32_63 dim 0 : vector<64x8xf32>, i32 -> vector<64x8xf32>
    %cst_64 = arith.constant 1.000000e+00 : f32
    %149 = vector.broadcast %cst_64 : f32 to vector<64x8xf32>
    %150 = arith.select %147, %148, %149 : vector<64x8xi1>, vector<64x8xf32>
    %c16_i32_65 = arith.constant 16 : i32
    %151 = vector.broadcast %c16_i32_65 : i32 to vector<64x8xi32>
    %152 = arith.cmpi sge, %93, %151 : vector<64x8xi32>
    %c16_i32_66 = arith.constant 16 : i32
    %153 = tpu.dynamic_rotate %144 by %c16_i32_66 dim 0 : vector<64x8xf32>, i32 -> vector<64x8xf32>
    %cst_67 = arith.constant 0.000000e+00 : f32
    %154 = vector.broadcast %cst_67 : f32 to vector<64x8xf32>
    %155 = arith.select %152, %153, %154 : vector<64x8xi1>, vector<64x8xf32>
    %156 = arith.mulf %145, %155 : vector<64x8xf32>
    %157 = arith.addf %156, %144 : vector<64x8xf32>
    %158 = arith.mulf %145, %150 : vector<64x8xf32>
    %c32_i32 = arith.constant 32 : i32
    %159 = vector.broadcast %c32_i32 : i32 to vector<64x8xi32>
    %160 = arith.cmpi sge, %93, %159 : vector<64x8xi32>
    %c32_i32_68 = arith.constant 32 : i32
    %161 = tpu.dynamic_rotate %157 by %c32_i32_68 dim 0 : vector<64x8xf32>, i32 -> vector<64x8xf32>
    %cst_69 = arith.constant 0.000000e+00 : f32
    %162 = vector.broadcast %cst_69 : f32 to vector<64x8xf32>
    %163 = arith.select %160, %161, %162 : vector<64x8xi1>, vector<64x8xf32>
    %164 = arith.mulf %158, %163 : vector<64x8xf32>
    %165 = arith.addf %164, %157 : vector<64x8xf32>
    %166 = vector.broadcast %19 : vector<1x4xf32> to vector<64x4xf32>
    %167 = arith.mulf %64, %166 : vector<64x4xf32>
    %168 = vector.extract_strided_slice %80 {offsets = [0, 0], sizes = [64, 1], strides = [1, 1]} : vector<64x2xf32> to vector<64x1xf32>
    %169 = vector.extract_strided_slice %165 {offsets = [0, 0], sizes = [64, 4], strides = [1, 1]} : vector<64x8xf32> to vector<64x4xf32>
    %170 = vector.broadcast %168 : vector<64x1xf32> to vector<64x4xf32>
    %171 = arith.mulf %170, %169 : vector<64x4xf32>
    %172 = arith.addf %167, %171 : vector<64x4xf32>
    %173 = vector.extract_strided_slice %80 {offsets = [0, 1], sizes = [64, 1], strides = [1, 1]} : vector<64x2xf32> to vector<64x1xf32>
    %174 = vector.extract_strided_slice %165 {offsets = [0, 4], sizes = [64, 4], strides = [1, 1]} : vector<64x8xf32> to vector<64x4xf32>
    %175 = vector.broadcast %173 : vector<64x1xf32> to vector<64x4xf32>
    %176 = arith.mulf %175, %174 : vector<64x4xf32>
    %177 = arith.addf %172, %176 : vector<64x4xf32>
    %cst_70 = arith.constant 0.000000e+00 : f32
    %178 = vector.broadcast %cst_70 : f32 to vector<64x4xf32>
    %179 = arith.subf %178, %25 : vector<64x4xf32>
    %180 = math.exp %179 : vector<64x4xf32>
    %cst_71 = arith.constant 1.000000e+00 : f32
    %181 = vector.broadcast %cst_71 : f32 to vector<64x4xf32>
    %182 = arith.addf %181, %180 : vector<64x4xf32>
    %183 = arith.divf %25, %182 : vector<64x4xf32>
    %184 = arith.mulf %177, %183 : vector<64x4xf32>
    %cst_72 = arith.constant dense<0.000000e+00> : vector<64x8xf32>
    %185 = tpu.matmul %184, %20, %cst_72 {dimension_numbers = #tpu.dot_dimension_numbers<[1], [0], [0], [1], [0, 0, 1, 1], [], []>} : vector<64x4xf32>, vector<4x8xf32>, vector<64x8xf32> -> vector<64x8xf32>
    %cst_73 = arith.constant dense<0.000000e+00> : vector<64xf32>
    %186 = vector.multi_reduction <add>, %185, %cst_73 [1] : vector<64x8xf32> to vector<64xf32>
    %187 = vector.shape_cast %186 : vector<64xf32> to vector<64x1xf32>
    %cst_74 = arith.constant 8.000000e+00 : f32
    %188 = vector.broadcast %cst_74 : f32 to vector<64x1xf32>
    %189 = arith.divf %187, %188 : vector<64x1xf32>
    %190 = vector.broadcast %189 : vector<64x1xf32> to vector<64x8xf32>
    %191 = arith.subf %185, %190 : vector<64x8xf32>
    %192 = arith.mulf %191, %191 : vector<64x8xf32>
    %cst_75 = arith.constant dense<0.000000e+00> : vector<64xf32>
    %193 = vector.multi_reduction <add>, %192, %cst_75 [1] : vector<64x8xf32> to vector<64xf32>
    %194 = vector.shape_cast %193 : vector<64xf32> to vector<64x1xf32>
    %cst_76 = arith.constant 8.000000e+00 : f32
    %195 = vector.broadcast %cst_76 : f32 to vector<64x1xf32>
    %196 = arith.divf %194, %195 : vector<64x1xf32>
    %cst_77 = arith.constant 9.99999974E-6 : f32
    %197 = vector.broadcast %cst_77 : f32 to vector<64x1xf32>
    %198 = arith.addf %196, %197 : vector<64x1xf32>
    %199 = math.rsqrt %198 : vector<64x1xf32>
    %200 = vector.broadcast %199 : vector<64x1xf32> to vector<64x8xf32>
    %201 = arith.mulf %191, %200 : vector<64x8xf32>
    %202 = vector.broadcast %21 : vector<1x8xf32> to vector<64x8xf32>
    %203 = arith.mulf %201, %202 : vector<64x8xf32>
    %204 = vector.broadcast %22 : vector<1x8xf32> to vector<64x8xf32>
    %205 = arith.addf %203, %204 : vector<64x8xf32>
    %c0_78 = arith.constant 0 : index
    %c0_79 = arith.constant 0 : index
    %206 = vector.load %arg14[%c0_78, %c0_79] : memref<8x8xf32, #tpu.memory_space<vmem>>, vector<8x8xf32>
    %c0_80 = arith.constant 0 : index
    %c0_81 = arith.constant 0 : index
    %207 = vector.load %arg15[%c0_80, %c0_81] : memref<1x8xf32, #tpu.memory_space<vmem>>, vector<1x8xf32>
    %cst_82 = arith.constant dense<0.000000e+00> : vector<64x8xf32>
    %208 = tpu.matmul %205, %206, %cst_82 {dimension_numbers = #tpu.dot_dimension_numbers<[1], [0], [0], [1], [0, 0, 1, 1], [], []>} : vector<64x8xf32>, vector<8x8xf32>, vector<64x8xf32> -> vector<64x8xf32>
    %209 = vector.broadcast %207 : vector<1x8xf32> to vector<64x8xf32>
    %210 = arith.addf %208, %209 : vector<64x8xf32>
    %cst_83 = arith.constant 0.000000e+00 : f32
    %211 = vector.broadcast %cst_83 : f32 to vector<64x8xf32>
    %212 = arith.subf %211, %210 : vector<64x8xf32>
    %213 = math.exp %212 : vector<64x8xf32>
    %cst_84 = arith.constant 1.000000e+00 : f32
    %214 = vector.broadcast %cst_84 : f32 to vector<64x8xf32>
    %215 = arith.addf %214, %213 : vector<64x8xf32>
    %216 = arith.divf %210, %215 : vector<64x8xf32>
    %c0_85 = arith.constant 0 : index
    %c0_86 = arith.constant 0 : index
    %217 = vector.load %arg16[%c0_85, %c0_86] : memref<8x16xf32, #tpu.memory_space<vmem>>, vector<8x16xf32>
    %c0_87 = arith.constant 0 : index
    %c0_88 = arith.constant 0 : index
    %218 = vector.load %arg17[%c0_87, %c0_88] : memref<4x8xf32, #tpu.memory_space<vmem>>, vector<4x8xf32>
    %c0_89 = arith.constant 0 : index
    %c0_90 = arith.constant 0 : index
    %219 = vector.load %arg18[%c0_89, %c0_90] : memref<1x8xf32, #tpu.memory_space<vmem>>, vector<1x8xf32>
    %c0_91 = arith.constant 0 : index
    %c0_92 = arith.constant 0 : index
    %220 = vector.load %arg19[%c0_91, %c0_92] : memref<8x12xf32, #tpu.memory_space<vmem>>, vector<8x12xf32>
    %c0_93 = arith.constant 0 : index
    %c0_94 = arith.constant 0 : index
    %221 = vector.load %arg20[%c0_93, %c0_94] : memref<1x8xf32, #tpu.memory_space<vmem>>, vector<1x8xf32>
    %c0_95 = arith.constant 0 : index
    %c0_96 = arith.constant 0 : index
    %222 = vector.load %arg21[%c0_95, %c0_96] : memref<1x16xf32, #tpu.memory_space<vmem>>, vector<1x16xf32>
    %c0_97 = arith.constant 0 : index
    %c0_98 = arith.constant 0 : index
    %223 = vector.load %arg22[%c0_97, %c0_98] : memref<1x8xf32, #tpu.memory_space<vmem>>, vector<1x8xf32>
    %c0_99 = arith.constant 0 : index
    %c0_100 = arith.constant 0 : index
    %224 = vector.load %arg23[%c0_99, %c0_100] : memref<8x8xf32, #tpu.memory_space<vmem>>, vector<8x8xf32>
    %c0_101 = arith.constant 0 : index
    %c0_102 = arith.constant 0 : index
    %225 = vector.load %arg24[%c0_101, %c0_102] : memref<1x8xf32, #tpu.memory_space<vmem>>, vector<1x8xf32>
    %c0_103 = arith.constant 0 : index
    %c0_104 = arith.constant 0 : index
    %226 = vector.load %arg25[%c0_103, %c0_104] : memref<1x8xf32, #tpu.memory_space<vmem>>, vector<1x8xf32>
    %cst_105 = arith.constant dense<0.000000e+00> : vector<64x16xf32>
    %227 = tpu.matmul %216, %217, %cst_105 {dimension_numbers = #tpu.dot_dimension_numbers<[1], [0], [0], [1], [0, 0, 1, 1], [], []>} : vector<64x8xf32>, vector<8x16xf32>, vector<64x16xf32> -> vector<64x16xf32>
    %228 = vector.extract_strided_slice %227 {offsets = [0, 0], sizes = [64, 8], strides = [1, 1]} : vector<64x16xf32> to vector<64x8xf32>
    %229 = vector.extract_strided_slice %227 {offsets = [0, 8], sizes = [64, 8], strides = [1, 1]} : vector<64x16xf32> to vector<64x8xf32>
    %230 = tpu.iota {dimensions = array<i32: 0>} : vector<64x8xi32>
    %231 = vector.extract_strided_slice %218 {offsets = [3, 0], sizes = [1, 8], strides = [1, 1]} : vector<4x8xf32> to vector<1x8xf32>
    %232 = vector.broadcast %231 : vector<1x8xf32> to vector<64x8xf32>
    %233 = arith.mulf %228, %232 : vector<64x8xf32>
    %c1_i32_106 = arith.constant 1 : i32
    %234 = tpu.dynamic_rotate %228 by %c1_i32_106 dim 0 : vector<64x8xf32>, i32 -> vector<64x8xf32>
    %c1_i32_107 = arith.constant 1 : i32
    %235 = vector.broadcast %c1_i32_107 : i32 to vector<64x8xi32>
    %236 = arith.cmpi sge, %230, %235 : vector<64x8xi32>
    %cst_108 = arith.constant 0.000000e+00 : f32
    %237 = vector.broadcast %cst_108 : f32 to vector<64x8xf32>
    %238 = arith.select %236, %234, %237 : vector<64x8xi1>, vector<64x8xf32>
    %239 = vector.extract_strided_slice %218 {offsets = [2, 0], sizes = [1, 8], strides = [1, 1]} : vector<4x8xf32> to vector<1x8xf32>
    %240 = vector.broadcast %239 : vector<1x8xf32> to vector<64x8xf32>
    %241 = arith.mulf %238, %240 : vector<64x8xf32>
    %242 = arith.addf %233, %241 : vector<64x8xf32>
    %c2_i32_109 = arith.constant 2 : i32
    %243 = tpu.dynamic_rotate %228 by %c2_i32_109 dim 0 : vector<64x8xf32>, i32 -> vector<64x8xf32>
    %c2_i32_110 = arith.constant 2 : i32
    %244 = vector.broadcast %c2_i32_110 : i32 to vector<64x8xi32>
    %245 = arith.cmpi sge, %230, %244 : vector<64x8xi32>
    %cst_111 = arith.constant 0.000000e+00 : f32
    %246 = vector.broadcast %cst_111 : f32 to vector<64x8xf32>
    %247 = arith.select %245, %243, %246 : vector<64x8xi1>, vector<64x8xf32>
    %248 = vector.extract_strided_slice %218 {offsets = [1, 0], sizes = [1, 8], strides = [1, 1]} : vector<4x8xf32> to vector<1x8xf32>
    %249 = vector.broadcast %248 : vector<1x8xf32> to vector<64x8xf32>
    %250 = arith.mulf %247, %249 : vector<64x8xf32>
    %251 = arith.addf %242, %250 : vector<64x8xf32>
    %c3_i32_112 = arith.constant 3 : i32
    %252 = tpu.dynamic_rotate %228 by %c3_i32_112 dim 0 : vector<64x8xf32>, i32 -> vector<64x8xf32>
    %c3_i32_113 = arith.constant 3 : i32
    %253 = vector.broadcast %c3_i32_113 : i32 to vector<64x8xi32>
    %254 = arith.cmpi sge, %230, %253 : vector<64x8xi32>
    %cst_114 = arith.constant 0.000000e+00 : f32
    %255 = vector.broadcast %cst_114 : f32 to vector<64x8xf32>
    %256 = arith.select %254, %252, %255 : vector<64x8xi1>, vector<64x8xf32>
    %257 = vector.extract_strided_slice %218 {offsets = [0, 0], sizes = [1, 8], strides = [1, 1]} : vector<4x8xf32> to vector<1x8xf32>
    %258 = vector.broadcast %257 : vector<1x8xf32> to vector<64x8xf32>
    %259 = arith.mulf %256, %258 : vector<64x8xf32>
    %260 = arith.addf %251, %259 : vector<64x8xf32>
    %261 = vector.broadcast %219 : vector<1x8xf32> to vector<64x8xf32>
    %262 = arith.addf %260, %261 : vector<64x8xf32>
    %cst_115 = arith.constant 0.000000e+00 : f32
    %263 = vector.broadcast %cst_115 : f32 to vector<64x8xf32>
    %264 = arith.subf %263, %262 : vector<64x8xf32>
    %265 = math.exp %264 : vector<64x8xf32>
    %cst_116 = arith.constant 1.000000e+00 : f32
    %266 = vector.broadcast %cst_116 : f32 to vector<64x8xf32>
    %267 = arith.addf %266, %265 : vector<64x8xf32>
    %268 = arith.divf %262, %267 : vector<64x8xf32>
    %cst_117 = arith.constant dense<0.000000e+00> : vector<64x12xf32>
    %269 = tpu.matmul %268, %220, %cst_117 {dimension_numbers = #tpu.dot_dimension_numbers<[1], [0], [0], [1], [0, 0, 1, 1], [], []>} : vector<64x8xf32>, vector<8x12xf32>, vector<64x12xf32> -> vector<64x12xf32>
    %270 = vector.extract_strided_slice %269 {offsets = [0, 0], sizes = [64, 8], strides = [1, 1]} : vector<64x12xf32> to vector<64x8xf32>
    %271 = vector.broadcast %221 : vector<1x8xf32> to vector<64x8xf32>
    %272 = arith.addf %270, %271 : vector<64x8xf32>
    %cst_118 = arith.constant 0.000000e+00 : f32
    %273 = vector.broadcast %cst_118 : f32 to vector<64x8xf32>
    %274 = arith.maximumf %272, %273 : vector<64x8xf32>
    %275 = math.absf %272 : vector<64x8xf32>
    %cst_119 = arith.constant 0.000000e+00 : f32
    %276 = vector.broadcast %cst_119 : f32 to vector<64x8xf32>
    %277 = arith.subf %276, %275 : vector<64x8xf32>
    %278 = math.exp %277 : vector<64x8xf32>
    %cst_120 = arith.constant 1.000000e+00 : f32
    %279 = vector.broadcast %cst_120 : f32 to vector<64x8xf32>
    %280 = arith.addf %279, %278 : vector<64x8xf32>
    %281 = math.log %280 : vector<64x8xf32>
    %282 = arith.addf %274, %281 : vector<64x8xf32>
    %283 = vector.extract_strided_slice %269 {offsets = [0, 8], sizes = [64, 2], strides = [1, 1]} : vector<64x12xf32> to vector<64x2xf32>
    %284 = vector.extract_strided_slice %269 {offsets = [0, 10], sizes = [64, 2], strides = [1, 1]} : vector<64x12xf32> to vector<64x2xf32>
    %285 = tpu.concatenate %282, %282 in 1 : vector<64x8xf32>, vector<64x8xf32> -> vector<64x16xf32>
    %286 = vector.broadcast %222 : vector<1x16xf32> to vector<64x16xf32>
    %287 = arith.mulf %285, %286 : vector<64x16xf32>
    %288 = math.exp %287 : vector<64x16xf32>
    %289 = arith.mulf %282, %268 : vector<64x8xf32>
    %290 = vector.extract_strided_slice %283 {offsets = [0, 0], sizes = [64, 1], strides = [1, 1]} : vector<64x2xf32> to vector<64x1xf32>
    %291 = vector.broadcast %290 : vector<64x1xf32> to vector<64x8xf32>
    %292 = arith.mulf %289, %291 : vector<64x8xf32>
    %293 = vector.extract_strided_slice %283 {offsets = [0, 1], sizes = [64, 1], strides = [1, 1]} : vector<64x2xf32> to vector<64x1xf32>
    %294 = vector.broadcast %293 : vector<64x1xf32> to vector<64x8xf32>
    %295 = arith.mulf %289, %294 : vector<64x8xf32>
    %296 = tpu.concatenate %292, %295 in 1 : vector<64x8xf32>, vector<64x8xf32> -> vector<64x16xf32>
    %297 = tpu.iota {dimensions = array<i32: 0>} : vector<64x16xi32>
    %c1_i32_121 = arith.constant 1 : i32
    %298 = vector.broadcast %c1_i32_121 : i32 to vector<64x16xi32>
    %299 = arith.cmpi sge, %297, %298 : vector<64x16xi32>
    %c1_i32_122 = arith.constant 1 : i32
    %300 = tpu.dynamic_rotate %288 by %c1_i32_122 dim 0 : vector<64x16xf32>, i32 -> vector<64x16xf32>
    %cst_123 = arith.constant 1.000000e+00 : f32
    %301 = vector.broadcast %cst_123 : f32 to vector<64x16xf32>
    %302 = arith.select %299, %300, %301 : vector<64x16xi1>, vector<64x16xf32>
    %c1_i32_124 = arith.constant 1 : i32
    %303 = vector.broadcast %c1_i32_124 : i32 to vector<64x16xi32>
    %304 = arith.cmpi sge, %297, %303 : vector<64x16xi32>
    %c1_i32_125 = arith.constant 1 : i32
    %305 = tpu.dynamic_rotate %296 by %c1_i32_125 dim 0 : vector<64x16xf32>, i32 -> vector<64x16xf32>
    %cst_126 = arith.constant 0.000000e+00 : f32
    %306 = vector.broadcast %cst_126 : f32 to vector<64x16xf32>
    %307 = arith.select %304, %305, %306 : vector<64x16xi1>, vector<64x16xf32>
    %308 = arith.mulf %288, %307 : vector<64x16xf32>
    %309 = arith.addf %308, %296 : vector<64x16xf32>
    %310 = arith.mulf %288, %302 : vector<64x16xf32>
    %c2_i32_127 = arith.constant 2 : i32
    %311 = vector.broadcast %c2_i32_127 : i32 to vector<64x16xi32>
    %312 = arith.cmpi sge, %297, %311 : vector<64x16xi32>
    %c2_i32_128 = arith.constant 2 : i32
    %313 = tpu.dynamic_rotate %310 by %c2_i32_128 dim 0 : vector<64x16xf32>, i32 -> vector<64x16xf32>
    %cst_129 = arith.constant 1.000000e+00 : f32
    %314 = vector.broadcast %cst_129 : f32 to vector<64x16xf32>
    %315 = arith.select %312, %313, %314 : vector<64x16xi1>, vector<64x16xf32>
    %c2_i32_130 = arith.constant 2 : i32
    %316 = vector.broadcast %c2_i32_130 : i32 to vector<64x16xi32>
    %317 = arith.cmpi sge, %297, %316 : vector<64x16xi32>
    %c2_i32_131 = arith.constant 2 : i32
    %318 = tpu.dynamic_rotate %309 by %c2_i32_131 dim 0 : vector<64x16xf32>, i32 -> vector<64x16xf32>
    %cst_132 = arith.constant 0.000000e+00 : f32
    %319 = vector.broadcast %cst_132 : f32 to vector<64x16xf32>
    %320 = arith.select %317, %318, %319 : vector<64x16xi1>, vector<64x16xf32>
    %321 = arith.mulf %310, %320 : vector<64x16xf32>
    %322 = arith.addf %321, %309 : vector<64x16xf32>
    %323 = arith.mulf %310, %315 : vector<64x16xf32>
    %c4_i32_133 = arith.constant 4 : i32
    %324 = vector.broadcast %c4_i32_133 : i32 to vector<64x16xi32>
    %325 = arith.cmpi sge, %297, %324 : vector<64x16xi32>
    %c4_i32_134 = arith.constant 4 : i32
    %326 = tpu.dynamic_rotate %323 by %c4_i32_134 dim 0 : vector<64x16xf32>, i32 -> vector<64x16xf32>
    %cst_135 = arith.constant 1.000000e+00 : f32
    %327 = vector.broadcast %cst_135 : f32 to vector<64x16xf32>
    %328 = arith.select %325, %326, %327 : vector<64x16xi1>, vector<64x16xf32>
    %c4_i32_136 = arith.constant 4 : i32
    %329 = vector.broadcast %c4_i32_136 : i32 to vector<64x16xi32>
    %330 = arith.cmpi sge, %297, %329 : vector<64x16xi32>
    %c4_i32_137 = arith.constant 4 : i32
    %331 = tpu.dynamic_rotate %322 by %c4_i32_137 dim 0 : vector<64x16xf32>, i32 -> vector<64x16xf32>
    %cst_138 = arith.constant 0.000000e+00 : f32
    %332 = vector.broadcast %cst_138 : f32 to vector<64x16xf32>
    %333 = arith.select %330, %331, %332 : vector<64x16xi1>, vector<64x16xf32>
    %334 = arith.mulf %323, %333 : vector<64x16xf32>
    %335 = arith.addf %334, %322 : vector<64x16xf32>
    %336 = arith.mulf %323, %328 : vector<64x16xf32>
    %c8_i32_139 = arith.constant 8 : i32
    %337 = vector.broadcast %c8_i32_139 : i32 to vector<64x16xi32>
    %338 = arith.cmpi sge, %297, %337 : vector<64x16xi32>
    %c8_i32_140 = arith.constant 8 : i32
    %339 = tpu.dynamic_rotate %336 by %c8_i32_140 dim 0 : vector<64x16xf32>, i32 -> vector<64x16xf32>
    %cst_141 = arith.constant 1.000000e+00 : f32
    %340 = vector.broadcast %cst_141 : f32 to vector<64x16xf32>
    %341 = arith.select %338, %339, %340 : vector<64x16xi1>, vector<64x16xf32>
    %c8_i32_142 = arith.constant 8 : i32
    %342 = vector.broadcast %c8_i32_142 : i32 to vector<64x16xi32>
    %343 = arith.cmpi sge, %297, %342 : vector<64x16xi32>
    %c8_i32_143 = arith.constant 8 : i32
    %344 = tpu.dynamic_rotate %335 by %c8_i32_143 dim 0 : vector<64x16xf32>, i32 -> vector<64x16xf32>
    %cst_144 = arith.constant 0.000000e+00 : f32
    %345 = vector.broadcast %cst_144 : f32 to vector<64x16xf32>
    %346 = arith.select %343, %344, %345 : vector<64x16xi1>, vector<64x16xf32>
    %347 = arith.mulf %336, %346 : vector<64x16xf32>
    %348 = arith.addf %347, %335 : vector<64x16xf32>
    %349 = arith.mulf %336, %341 : vector<64x16xf32>
    %c16_i32_145 = arith.constant 16 : i32
    %350 = vector.broadcast %c16_i32_145 : i32 to vector<64x16xi32>
    %351 = arith.cmpi sge, %297, %350 : vector<64x16xi32>
    %c16_i32_146 = arith.constant 16 : i32
    %352 = tpu.dynamic_rotate %349 by %c16_i32_146 dim 0 : vector<64x16xf32>, i32 -> vector<64x16xf32>
    %cst_147 = arith.constant 1.000000e+00 : f32
    %353 = vector.broadcast %cst_147 : f32 to vector<64x16xf32>
    %354 = arith.select %351, %352, %353 : vector<64x16xi1>, vector<64x16xf32>
    %c16_i32_148 = arith.constant 16 : i32
    %355 = vector.broadcast %c16_i32_148 : i32 to vector<64x16xi32>
    %356 = arith.cmpi sge, %297, %355 : vector<64x16xi32>
    %c16_i32_149 = arith.constant 16 : i32
    %357 = tpu.dynamic_rotate %348 by %c16_i32_149 dim 0 : vector<64x16xf32>, i32 -> vector<64x16xf32>
    %cst_150 = arith.constant 0.000000e+00 : f32
    %358 = vector.broadcast %cst_150 : f32 to vector<64x16xf32>
    %359 = arith.select %356, %357, %358 : vector<64x16xi1>, vector<64x16xf32>
    %360 = arith.mulf %349, %359 : vector<64x16xf32>
    %361 = arith.addf %360, %348 : vector<64x16xf32>
    %362 = arith.mulf %349, %354 : vector<64x16xf32>
    %c32_i32_151 = arith.constant 32 : i32
    %363 = vector.broadcast %c32_i32_151 : i32 to vector<64x16xi32>
    %364 = arith.cmpi sge, %297, %363 : vector<64x16xi32>
    %c32_i32_152 = arith.constant 32 : i32
    %365 = tpu.dynamic_rotate %361 by %c32_i32_152 dim 0 : vector<64x16xf32>, i32 -> vector<64x16xf32>
    %cst_153 = arith.constant 0.000000e+00 : f32
    %366 = vector.broadcast %cst_153 : f32 to vector<64x16xf32>
    %367 = arith.select %364, %365, %366 : vector<64x16xi1>, vector<64x16xf32>
    %368 = arith.mulf %362, %367 : vector<64x16xf32>
    %369 = arith.addf %368, %361 : vector<64x16xf32>
    %370 = vector.broadcast %223 : vector<1x8xf32> to vector<64x8xf32>
    %371 = arith.mulf %268, %370 : vector<64x8xf32>
    %372 = vector.extract_strided_slice %284 {offsets = [0, 0], sizes = [64, 1], strides = [1, 1]} : vector<64x2xf32> to vector<64x1xf32>
    %373 = vector.extract_strided_slice %369 {offsets = [0, 0], sizes = [64, 8], strides = [1, 1]} : vector<64x16xf32> to vector<64x8xf32>
    %374 = vector.broadcast %372 : vector<64x1xf32> to vector<64x8xf32>
    %375 = arith.mulf %374, %373 : vector<64x8xf32>
    %376 = arith.addf %371, %375 : vector<64x8xf32>
    %377 = vector.extract_strided_slice %284 {offsets = [0, 1], sizes = [64, 1], strides = [1, 1]} : vector<64x2xf32> to vector<64x1xf32>
    %378 = vector.extract_strided_slice %369 {offsets = [0, 8], sizes = [64, 8], strides = [1, 1]} : vector<64x16xf32> to vector<64x8xf32>
    %379 = vector.broadcast %377 : vector<64x1xf32> to vector<64x8xf32>
    %380 = arith.mulf %379, %378 : vector<64x8xf32>
    %381 = arith.addf %376, %380 : vector<64x8xf32>
    %cst_154 = arith.constant 0.000000e+00 : f32
    %382 = vector.broadcast %cst_154 : f32 to vector<64x8xf32>
    %383 = arith.subf %382, %229 : vector<64x8xf32>
    %384 = math.exp %383 : vector<64x8xf32>
    %cst_155 = arith.constant 1.000000e+00 : f32
    %385 = vector.broadcast %cst_155 : f32 to vector<64x8xf32>
    %386 = arith.addf %385, %384 : vector<64x8xf32>
    %387 = arith.divf %229, %386 : vector<64x8xf32>
    %388 = arith.mulf %381, %387 : vector<64x8xf32>
    %cst_156 = arith.constant dense<0.000000e+00> : vector<64x8xf32>
    %389 = tpu.matmul %388, %224, %cst_156 {dimension_numbers = #tpu.dot_dimension_numbers<[1], [0], [0], [1], [0, 0, 1, 1], [], []>} : vector<64x8xf32>, vector<8x8xf32>, vector<64x8xf32> -> vector<64x8xf32>
    %cst_157 = arith.constant dense<0.000000e+00> : vector<64xf32>
    %390 = vector.multi_reduction <add>, %389, %cst_157 [1] : vector<64x8xf32> to vector<64xf32>
    %391 = vector.shape_cast %390 : vector<64xf32> to vector<64x1xf32>
    %cst_158 = arith.constant 8.000000e+00 : f32
    %392 = vector.broadcast %cst_158 : f32 to vector<64x1xf32>
    %393 = arith.divf %391, %392 : vector<64x1xf32>
    %394 = vector.broadcast %393 : vector<64x1xf32> to vector<64x8xf32>
    %395 = arith.subf %389, %394 : vector<64x8xf32>
    %396 = arith.mulf %395, %395 : vector<64x8xf32>
    %cst_159 = arith.constant dense<0.000000e+00> : vector<64xf32>
    %397 = vector.multi_reduction <add>, %396, %cst_159 [1] : vector<64x8xf32> to vector<64xf32>
    %398 = vector.shape_cast %397 : vector<64xf32> to vector<64x1xf32>
    %cst_160 = arith.constant 8.000000e+00 : f32
    %399 = vector.broadcast %cst_160 : f32 to vector<64x1xf32>
    %400 = arith.divf %398, %399 : vector<64x1xf32>
    %cst_161 = arith.constant 9.99999974E-6 : f32
    %401 = vector.broadcast %cst_161 : f32 to vector<64x1xf32>
    %402 = arith.addf %400, %401 : vector<64x1xf32>
    %403 = math.rsqrt %402 : vector<64x1xf32>
    %404 = vector.broadcast %403 : vector<64x1xf32> to vector<64x8xf32>
    %405 = arith.mulf %395, %404 : vector<64x8xf32>
    %406 = vector.broadcast %225 : vector<1x8xf32> to vector<64x8xf32>
    %407 = arith.mulf %405, %406 : vector<64x8xf32>
    %408 = vector.broadcast %226 : vector<1x8xf32> to vector<64x8xf32>
    %409 = arith.addf %407, %408 : vector<64x8xf32>
    %410 = arith.addf %12, %409 : vector<64x8xf32>
    %c0_162 = arith.constant 0 : index
    %c0_163 = arith.constant 0 : index
    %c0_164 = arith.constant 0 : index
    %411 = vector.load %arg26[%c0_162, %c0_163, %c0_164] : memref<1x64x8xf32, #tpu.memory_space<vmem>>, vector<1x64x8xf32>
    %412 = vector.shape_cast %411 : vector<1x64x8xf32> to vector<64x8xf32>
    %413 = vector.shape_cast %410 : vector<64x8xf32> to vector<1x64x8xf32>
    tpu.vector_store %arg26[%c0_162, %c0_163, %c0_164], %413 {strides = array<i32>} : memref<1x64x8xf32, #tpu.memory_space<vmem>>, vector<1x64x8xf32>,
    return
  }
  func.func @transform_0(%arg0: i32) -> (i32, i32, i32) {
    %c0_i32 = arith.constant 0 : i32
    %c0_i32_0 = arith.constant 0 : i32
    %c0_i32_1 = arith.constant 0 : i32
    return %arg0, %c0_i32, %c0_i32_0 : i32, i32, i32
  }
  func.func @transform_1(%arg0: i32) -> (i32, i32) {
    %c0_i32 = arith.constant 0 : i32
    %c0_i32_0 = arith.constant 0 : i32
    %c0_i32_1 = arith.constant 0 : i32
    return %c0_i32, %c0_i32_0 : i32, i32
  }
  func.func @transform_2(%arg0: i32) -> (i32, i32) {
    %c0_i32 = arith.constant 0 : i32
    %c0_i32_0 = arith.constant 0 : i32
    %c0_i32_1 = arith.constant 0 : i32
    return %c0_i32, %c0_i32_0 : i32, i32
  }
  func.func @transform_3(%arg0: i32) -> (i32, i32) {
    %c0_i32 = arith.constant 0 : i32
    %c0_i32_0 = arith.constant 0 : i32
    %c0_i32_1 = arith.constant 0 : i32
    return %c0_i32, %c0_i32_0 : i32, i32
  }
  func.func @transform_4(%arg0: i32) -> (i32, i32) {
    %c0_i32 = arith.constant 0 : i32
    %c0_i32_0 = arith.constant 0 : i32
    %c0_i32_1 = arith.constant 0 : i32
    return %c0_i32, %c0_i32_0 : i32, i32
  }
  func.func @transform_5(%arg0: i32) -> (i32, i32) {
    %c0_i32 = arith.constant 0 : i32
    %c0_i32_0 = arith.constant 0 : i32
    %c0_i32_1 = arith.constant 0 : i32
    return %c0_i32, %c0_i32_0 : i32, i32
  }
  func.func @transform_6(%arg0: i32) -> (i32, i32) {
    %c0_i32 = arith.constant 0 : i32
    %c0_i32_0 = arith.constant 0 : i32
    %c0_i32_1 = arith.constant 0 : i32
    return %c0_i32, %c0_i32_0 : i32, i32
  }
  func.func @transform_7(%arg0: i32) -> (i32, i32) {
    %c0_i32 = arith.constant 0 : i32
    %c0_i32_0 = arith.constant 0 : i32
    %c0_i32_1 = arith.constant 0 : i32
    return %c0_i32, %c0_i32_0 : i32, i32
  }
  func.func @transform_8(%arg0: i32) -> (i32, i32) {
    %c0_i32 = arith.constant 0 : i32
    %c0_i32_0 = arith.constant 0 : i32
    %c0_i32_1 = arith.constant 0 : i32
    return %c0_i32, %c0_i32_0 : i32, i32
  }
  func.func @transform_9(%arg0: i32) -> (i32, i32) {
    %c0_i32 = arith.constant 0 : i32
    %c0_i32_0 = arith.constant 0 : i32
    %c0_i32_1 = arith.constant 0 : i32
    return %c0_i32, %c0_i32_0 : i32, i32
  }
  func.func @transform_10(%arg0: i32) -> (i32, i32) {
    %c0_i32 = arith.constant 0 : i32
    %c0_i32_0 = arith.constant 0 : i32
    %c0_i32_1 = arith.constant 0 : i32
    return %c0_i32, %c0_i32_0 : i32, i32
  }
  func.func @transform_11(%arg0: i32) -> (i32, i32) {
    %c0_i32 = arith.constant 0 : i32
    %c0_i32_0 = arith.constant 0 : i32
    %c0_i32_1 = arith.constant 0 : i32
    return %c0_i32, %c0_i32_0 : i32, i32
  }
  func.func @transform_12(%arg0: i32) -> (i32, i32) {
    %c0_i32 = arith.constant 0 : i32
    %c0_i32_0 = arith.constant 0 : i32
    %c0_i32_1 = arith.constant 0 : i32
    return %c0_i32, %c0_i32_0 : i32, i32
  }
  func.func @transform_13(%arg0: i32) -> (i32, i32) {
    %c0_i32 = arith.constant 0 : i32
    %c0_i32_0 = arith.constant 0 : i32
    %c0_i32_1 = arith.constant 0 : i32
    return %c0_i32, %c0_i32_0 : i32, i32
  }
  func.func @transform_14(%arg0: i32) -> (i32, i32) {
    %c0_i32 = arith.constant 0 : i32
    %c0_i32_0 = arith.constant 0 : i32
    %c0_i32_1 = arith.constant 0 : i32
    return %c0_i32, %c0_i32_0 : i32, i32
  }
  func.func @transform_15(%arg0: i32) -> (i32, i32) {
    %c0_i32 = arith.constant 0 : i32
    %c0_i32_0 = arith.constant 0 : i32
    %c0_i32_1 = arith.constant 0 : i32
    return %c0_i32, %c0_i32_0 : i32, i32
  }
  func.func @transform_16(%arg0: i32) -> (i32, i32) {
    %c0_i32 = arith.constant 0 : i32
    %c0_i32_0 = arith.constant 0 : i32
    %c0_i32_1 = arith.constant 0 : i32
    return %c0_i32, %c0_i32_0 : i32, i32
  }
  func.func @transform_17(%arg0: i32) -> (i32, i32) {
    %c0_i32 = arith.constant 0 : i32
    %c0_i32_0 = arith.constant 0 : i32
    %c0_i32_1 = arith.constant 0 : i32
    return %c0_i32, %c0_i32_0 : i32, i32
  }
  func.func @transform_18(%arg0: i32) -> (i32, i32) {
    %c0_i32 = arith.constant 0 : i32
    %c0_i32_0 = arith.constant 0 : i32
    %c0_i32_1 = arith.constant 0 : i32
    return %c0_i32, %c0_i32_0 : i32, i32
  }
  func.func @transform_19(%arg0: i32) -> (i32, i32) {
    %c0_i32 = arith.constant 0 : i32
    %c0_i32_0 = arith.constant 0 : i32
    %c0_i32_1 = arith.constant 0 : i32
    return %c0_i32, %c0_i32_0 : i32, i32
  }
  func.func @transform_20(%arg0: i32) -> (i32, i32) {
    %c0_i32 = arith.constant 0 : i32
    %c0_i32_0 = arith.constant 0 : i32
    %c0_i32_1 = arith.constant 0 : i32
    return %c0_i32, %c0_i32_0 : i32, i32
  }
  func.func @transform_21(%arg0: i32) -> (i32, i32) {
    %c0_i32 = arith.constant 0 : i32
    %c0_i32_0 = arith.constant 0 : i32
    %c0_i32_1 = arith.constant 0 : i32
    return %c0_i32, %c0_i32_0 : i32, i32
  }
  func.func @transform_22(%arg0: i32) -> (i32, i32) {
    %c0_i32 = arith.constant 0 : i32
    %c0_i32_0 = arith.constant 0 : i32
    %c0_i32_1 = arith.constant 0 : i32
    return %c0_i32, %c0_i32_0 : i32, i32
  }
  func.func @transform_23(%arg0: i32) -> (i32, i32) {
    %c0_i32 = arith.constant 0 : i32
    %c0_i32_0 = arith.constant 0 : i32
    %c0_i32_1 = arith.constant 0 : i32
    return %c0_i32, %c0_i32_0 : i32, i32
  }
  func.func @transform_24(%arg0: i32) -> (i32, i32) {
    %c0_i32 = arith.constant 0 : i32
    %c0_i32_0 = arith.constant 0 : i32
    %c0_i32_1 = arith.constant 0 : i32
    return %c0_i32, %c0_i32_0 : i32, i32
  }
  func.func @transform_25(%arg0: i32) -> (i32, i32, i32) {
    %c0_i32 = arith.constant 0 : i32
    %c0_i32_0 = arith.constant 0 : i32
    %c0_i32_1 = arith.constant 0 : i32
    return %arg0, %c0_i32, %c0_i32_0 : i32, i32, i32
  }
}

</mosaic_0001>

<llo_original>
// kernel: down_fwd.1
$region0: #{down_fwd.1}
  #allocation0 [shape = 'u32[]', space=smem, size = 0x4, offset = 0x4, fixed_abs, tag = 'smem constant byte address 0x4 - core index']
  #allocation1 [shape = 'u32[144,128]{1,0:T(1,128)}', space=vmem, size = 0x12000, scoped, tag = 'internal scratch']
  %s0 = inlined_call_operand.vmem [shape: f32[2,64,4], index: 0, kind: input, shape index: {}]
  %s1 = inlined_call_operand.vmem [shape: f32[4,8], index: 1, kind: input, shape index: {}]
  %s2 = inlined_call_operand.vmem [shape: f32[1,8], index: 2, kind: input, shape index: {}]
  %s3 = inlined_call_operand.vmem [shape: f32[4,8], index: 3, kind: input, shape index: {}]
  %s4 = inlined_call_operand.vmem [shape: f32[4,4], index: 4, kind: input, shape index: {}]
  %s5 = inlined_call_operand.vmem [shape: f32[1,4], index: 5, kind: input, shape index: {}]
  %s6 = inlined_call_operand.vmem [shape: f32[4,8], index: 6, kind: input, shape index: {}]
  %s7 = inlined_call_operand.vmem [shape: f32[1,4], index: 7, kind: input, shape index: {}]
  %s8 = inlined_call_operand.vmem [shape: f32[1,8], index: 8, kind: input, shape index: {}]
  %s9 = inlined_call_operand.vmem [shape: f32[1,4], index: 9, kind: input, shape index: {}]
  %s10 = inlined_call_operand.vmem [shape: f32[4,8], index: 10, kind: input, shape index: {}]
  %s11 = inlined_call_operand.vmem [shape: f32[1,8], index: 11, kind: input, shape index: {}]
  %s12 = inlined_call_operand.vmem [shape: f32[1,8], index: 12, kind: input, shape index: {}]
  %s13 = inlined_call_operand.vmem [shape: f32[8,8], index: 13, kind: input, shape index: {}]
  %s14 = inlined_call_operand.vmem [shape: f32[1,8], index: 14, kind: input, shape index: {}]
  %s15 = inlined_call_operand.vmem [shape: f32[8,16], index: 15, kind: input, shape index: {}]
  %s16 = inlined_call_operand.vmem [shape: f32[4,8], index: 16, kind: input, shape index: {}]
  %s17 = inlined_call_operand.vmem [shape: f32[1,8], index: 17, kind: input, shape index: {}]
  %s18 = inlined_call_operand.vmem [shape: f32[8,12], index: 18, kind: input, shape index: {}]
  %s19 = inlined_call_operand.vmem [shape: f32[1,8], index: 19, kind: input, shape index: {}]
  %s20 = inlined_call_operand.vmem [shape: f32[1,16], index: 20, kind: input, shape index: {}]
  %s21 = inlined_call_operand.vmem [shape: f32[1,8], index: 21, kind: input, shape index: {}]
  %s22 = inlined_call_operand.vmem [shape: f32[8,8], index: 22, kind: input, shape index: {}]
  %s23 = inlined_call_operand.vmem [shape: f32[1,8], index: 23, kind: input, shape index: {}]
  %s24 = inlined_call_operand.vmem [shape: f32[1,8], index: 24, kind: input, shape index: {}]
  %s25 = inlined_call_operand.vmem [shape: f32[2,64,8], index: 25, kind: output, shape index: {}]
  %s26 = sld [smem:[#allocation0]]
  $region133: #{down_fwd.1} parent=0
    _
  %s28 = ssub.s32 1, %s26
  %s29 = scalar_select 0, %s28, %s26
  loop: start=0, step=1, limit=4
  $region2: #{down_fwd.1} parent=0 // loop_pre_header
    _
  $region3: #{down_fwd.1} parent=0 // loop_header
    %s31 = sphi 0, %s35
    %p32 = scmp.ge.s32.totalorder %s31, 4
    %s41 = sphi 0, %s43
    %s44 = sphi 0, %s41
    %s45 = sphi 0, %s44
    %s61 = sphi 0, %s45
    %s65 = sphi 0, %s65
    %s67 = sphi 0, %s65
    %s68 = sphi 0, %s67
    %s82 = sphi 0, %s68
    %s86 = sphi 0, %s86
    %s88 = sphi 0, %s86
    %s89 = sphi 0, %s88
    %s103 = sphi 0, %s89
    %s107 = sphi 0, %s107
    %s109 = sphi 0, %s107
    %s110 = sphi 0, %s109
    %s124 = sphi 0, %s110
    %s128 = sphi 0, %s128
    %s130 = sphi 0, %s128
    %s131 = sphi 0, %s130
    %s145 = sphi 0, %s131
    %s149 = sphi 0, %s149
    %s151 = sphi 0, %s149
    %s152 = sphi 0, %s151
    %s166 = sphi 0, %s152
    %s170 = sphi 0, %s170
    %s172 = sphi 0, %s170
    %s173 = sphi 0, %s172
    %s187 = sphi 0, %s173
    %s191 = sphi 0, %s191
    %s193 = sphi 0, %s191
    %s194 = sphi 0, %s193
    %s208 = sphi 0, %s194
    %s212 = sphi 0, %s212
    %s214 = sphi 0, %s212
    %s215 = sphi 0, %s214
    %s229 = sphi 0, %s215
    %s233 = sphi 0, %s233
    %s235 = sphi 0, %s233
    %s236 = sphi 0, %s235
    %s250 = sphi 0, %s236
    %s254 = sphi 0, %s254
    %s256 = sphi 0, %s254
    %s257 = sphi 0, %s256
    %s271 = sphi 0, %s257
    %s275 = sphi 0, %s275
    %s277 = sphi 0, %s275
    %s278 = sphi 0, %s277
    %s292 = sphi 0, %s278
    %s296 = sphi 0, %s296
    %s298 = sphi 0, %s296
    %s299 = sphi 0, %s298
    %s313 = sphi 0, %s299
    %s317 = sphi 0, %s317
    %s319 = sphi 0, %s317
    %s320 = sphi 0, %s319
    %s334 = sphi 0, %s320
    %s338 = sphi 0, %s338
    %s340 = sphi 0, %s338
    %s341 = sphi 0, %s340
    %s355 = sphi 0, %s341
    %s359 = sphi 0, %s359
    %s361 = sphi 0, %s359
    %s362 = sphi 0, %s361
    %s376 = sphi 0, %s362
    %s380 = sphi 0, %s380
    %s382 = sphi 0, %s380
    %s383 = sphi 0, %s382
    %s397 = sphi 0, %s383
    %s401 = sphi 0, %s401
    %s403 = sphi 0, %s401
    %s404 = sphi 0, %s403
    %s418 = sphi 0, %s404
    %s422 = sphi 0, %s422
    %s424 = sphi 0, %s422
    %s425 = sphi 0, %s424
    %s439 = sphi 0, %s425
    %s443 = sphi 0, %s443
    %s445 = sphi 0, %s443
    %s446 = sphi 0, %s445
    %s460 = sphi 0, %s446
    %s464 = sphi 0, %s464
    %s466 = sphi 0, %s464
    %s467 = sphi 0, %s466
    %s481 = sphi 0, %s467
    %s485 = sphi 0, %s485
    %s487 = sphi 0, %s485
    %s488 = sphi 0, %s487
    %s502 = sphi 0, %s488
    %s506 = sphi 0, %s506
    %s508 = sphi 0, %s506
    %s509 = sphi 0, %s508
    %s523 = sphi 0, %s509
    %s527 = sphi 0, %s527
    %s529 = sphi 0, %s527
    %s530 = sphi 0, %s529
    %s544 = sphi 0, %s530
    %s548 = sphi 0, %s548
    %s550 = sphi 0, %s548
    %s551 = sphi 0, %s550
    %s565 = sphi 0, %s551
    %s571 = sphi 0, %s573
    %s574 = sphi 0, %s571
    %s575 = sphi 0, %s574
    %s591 = sphi 0, %s575
  $region4: #{down_fwd.1} parent=0 // loop_header_branch
    %34 = sbr.rel (%p32) target = $region8
  $region5: #{down_fwd.1} parent=0 // loop_body
    %s36 = ssub.s32 %s31, 1
    %s37 = ssub.s32 %s31, 2
    %s38 = sadd.s32 %s31, 1
    %s39 = ssub.s32 %s31, %s38
    %p40 = scmp.eq.s32.totalorder %s39, 0
    %s42 = sadd.s32 %s41, 1
    %s43 = scalar_select %p40, %s41, %s42
    %p46 = pneg %p40
    %p47 = scmp.eq.s32.totalorder %s31, 1
    %p48 = por %p46, %p47
    %p49 = scmp.ne.s32.totalorder %s41, %s44
    %p50 = scmp.eq.s32.totalorder %s31, 0
    %p51 = por %p49, %p50
    %p52 = scmp.ne.s32.totalorder %s41, %s44
    %p53 = scmp.eq.s32.totalorder %s36, 1
    %p54 = por %p52, %p53
    %p55 = scmp.ne.s32.totalorder %s44, %s45
    %p56 = scmp.eq.s32.totalorder %s36, 0
    %p57 = por %p55, %p56
    %p58 = scmp.ne.s32.totalorder %s44, %s45
    %p59 = scmp.eq.s32.totalorder %s37, 1
    %p60 = por %p58, %p59
    %p62 = scmp.ne.s32.totalorder %s45, %s61
    %p63 = scmp.eq.s32.totalorder %s37, 0
    %p64 = por %p62, %p63
    %s66 = sadd.s32 %s65, 1
    %p69 = scmp.eq.s32.totalorder %s31, 1
    %p70 = scmp.ne.s32.totalorder %s65, %s67
    %p71 = scmp.eq.s32.totalorder %s31, 0
    %p72 = por %p70, %p71
    %p73 = scmp.ne.s32.totalorder %s65, %s67
    %p74 = scmp.eq.s32.totalorder %s36, 1
    %p75 = por %p73, %p74
    %p76 = scmp.ne.s32.totalorder %s67, %s68
    %p77 = scmp.eq.s32.totalorder %s36, 0
    %p78 = por %p76, %p77
    %p79 = scmp.ne.s32.totalorder %s67, %s68
    %p80 = scmp.eq.s32.totalorder %s37, 1
    %p81 = por %p79, %p80
    %p83 = scmp.ne.s32.totalorder %s68, %s82
    %p84 = scmp.eq.s32.totalorder %s37, 0
    %p85 = por %p83, %p84
    %s87 = sadd.s32 %s86, 1
    %p90 = scmp.eq.s32.totalorder %s31, 1
    %p91 = scmp.ne.s32.totalorder %s86, %s88
    %p92 = scmp.eq.s32.totalorder %s31, 0
    %p93 = por %p91, %p92
    %p94 = scmp.ne.s32.totalorder %s86, %s88
    %p95 = scmp.eq.s32.totalorder %s36, 1
    %p96 = por %p94, %p95
    %p97 = scmp.ne.s32.totalorder %s88, %s89
    %p98 = scmp.eq.s32.totalorder %s36, 0
    %p99 = por %p97, %p98
    %p100 = scmp.ne.s32.totalorder %s88, %s89
    %p101 = scmp.eq.s32.totalorder %s37, 1
    %p102 = por %p100, %p101
    %p104 = scmp.ne.s32.totalorder %s89, %s103
    %p105 = scmp.eq.s32.totalorder %s37, 0
    %p106 = por %p104, %p105
    %s108 = sadd.s32 %s107, 1
    %p111 = scmp.eq.s32.totalorder %s31, 1
    %p112 = scmp.ne.s32.totalorder %s107, %s109
    %p113 = scmp.eq.s32.totalorder %s31, 0
    %p114 = por %p112, %p113
    %p115 = scmp.ne.s32.totalorder %s107, %s109
    %p116 = scmp.eq.s32.totalorder %s36, 1
    %p117 = por %p115, %p116
    %p118 = scmp.ne.s32.totalorder %s109, %s110
    %p119 = scmp.eq.s32.totalorder %s36, 0
    %p120 = por %p118, %p119
    %p121 = scmp.ne.s32.totalorder %s109, %s110
    %p122 = scmp.eq.s32.totalorder %s37, 1
    %p123 = por %p121, %p122
    %p125 = scmp.ne.s32.totalorder %s110, %s124
    %p126 = scmp.eq.s32.totalorder %s37, 0
    %p127 = por %p125, %p126
    %s129 = sadd.s32 %s128, 1
    %p132 = scmp.eq.s32.totalorder %s31, 1
    %p133 = scmp.ne.s32.totalorder %s128, %s130
    %p134 = scmp.eq.s32.totalorder %s31, 0
    %p135 = por %p133, %p134
    %p136 = scmp.ne.s32.totalorder %s128, %s130
    %p137 = scmp.eq.s32.totalorder %s36, 1
    %p138 = por %p136, %p137
    %p139 = scmp.ne.s32.totalorder %s130, %s131
    %p140 = scmp.eq.s32.totalorder %s36, 0
    %p141 = por %p139, %p140
    %p142 = scmp.ne.s32.totalorder %s130, %s131
    %p143 = scmp.eq.s32.totalorder %s37, 1
    %p144 = por %p142, %p143
    %p146 = scmp.ne.s32.totalorder %s131, %s145
    %p147 = scmp.eq.s32.totalorder %s37, 0
    %p148 = por %p146, %p147
    %s150 = sadd.s32 %s149, 1
    %p153 = scmp.eq.s32.totalorder %s31, 1
    %p154 = scmp.ne.s32.totalorder %s149, %s151
    %p155 = scmp.eq.s32.totalorder %s31, 0
    %p156 = por %p154, %p155
    %p157 = scmp.ne.s32.totalorder %s149, %s151
    %p158 = scmp.eq.s32.totalorder %s36, 1
    %p159 = por %p157, %p158
    %p160 = scmp.ne.s32.totalorder %s151, %s152
    %p161 = scmp.eq.s32.totalorder %s36, 0
    %p162 = por %p160, %p161
    %p163 = scmp.ne.s32.totalorder %s151, %s152
    %p164 = scmp.eq.s32.totalorder %s37, 1
    %p165 = por %p163, %p164
    %p167 = scmp.ne.s32.totalorder %s152, %s166
    %p168 = scmp.eq.s32.totalorder %s37, 0
    %p169 = por %p167, %p168
    %s171 = sadd.s32 %s170, 1
    %p174 = scmp.eq.s32.totalorder %s31, 1
    %p175 = scmp.ne.s32.totalorder %s170, %s172
    %p176 = scmp.eq.s32.totalorder %s31, 0
    %p177 = por %p175, %p176
    %p178 = scmp.ne.s32.totalorder %s170, %s172
    %p179 = scmp.eq.s32.totalorder %s36, 1
    %p180 = por %p178, %p179
    %p181 = scmp.ne.s32.totalorder %s172, %s173
    %p182 = scmp.eq.s32.totalorder %s36, 0
    %p183 = por %p181, %p182
    %p184 = scmp.ne.s32.totalorder %s172, %s173
    %p185 = scmp.eq.s32.totalorder %s37, 1
    %p186 = por %p184, %p185
    %p188 = scmp.ne.s32.totalorder %s173, %s187
    %p189 = scmp.eq.s32.totalorder %s37, 0
    %p190 = por %p188, %p189
    %s192 = sadd.s32 %s191, 1
    %p195 = scmp.eq.s32.totalorder %s31, 1
    %p196 = scmp.ne.s32.totalorder %s191, %s193
    %p197 = scmp.eq.s32.totalorder %s31, 0
    %p198 = por %p196, %p197
    %p199 = scmp.ne.s32.totalorder %s191, %s193
    %p200 = scmp.eq.s32.totalorder %s36, 1
    %p201 = por %p199, %p200
    %p202 = scmp.ne.s32.totalorder %s193, %s194
    %p203 = scmp.eq.s32.totalorder %s36, 0
    %p204 = por %p202, %p203
    %p205 = scmp.ne.s32.totalorder %s193, %s194
    %p206 = scmp.eq.s32.totalorder %s37, 1
    %p207 = por %p205, %p206
    %p209 = scmp.ne.s32.totalorder %s194, %s208
    %p210 = scmp.eq.s32.totalorder %s37, 0
    %p211 = por %p209, %p210
    %s213 = sadd.s32 %s212, 1
    %p216 = scmp.eq.s32.totalorder %s31, 1
    %p217 = scmp.ne.s32.totalorder %s212, %s214
    %p218 = scmp.eq.s32.totalorder %s31, 0
    %p219 = por %p217, %p218
    %p220 = scmp.ne.s32.totalorder %s212, %s214
    %p221 = scmp.eq.s32.totalorder %s36, 1
    %p222 = por %p220, %p221
    %p223 = scmp.ne.s32.totalorder %s214, %s215
    %p224 = scmp.eq.s32.totalorder %s36, 0
    %p225 = por %p223, %p224
    %p226 = scmp.ne.s32.totalorder %s214, %s215
    %p227 = scmp.eq.s32.totalorder %s37, 1
    %p228 = por %p226, %p227
    %p230 = scmp.ne.s32.totalorder %s215, %s229
    %p231 = scmp.eq.s32.totalorder %s37, 0
    %p232 = por %p230, %p231
    %s234 = sadd.s32 %s233, 1
    %p237 = scmp.eq.s32.totalorder %s31, 1
    %p238 = scmp.ne.s32.totalorder %s233, %s235
    %p239 = scmp.eq.s32.totalorder %s31, 0
    %p240 = por %p238, %p239
    %p241 = scmp.ne.s32.totalorder %s233, %s235
    %p242 = scmp.eq.s32.totalorder %s36, 1
    %p243 = por %p241, %p242
    %p244 = scmp.ne.s32.totalorder %s235, %s236
    %p245 = scmp.eq.s32.totalorder %s36, 0
    %p246 = por %p244, %p245
    %p247 = scmp.ne.s32.totalorder %s235, %s236
    %p248 = scmp.eq.s32.totalorder %s37, 1
    %p249 = por %p247, %p248
    %p251 = scmp.ne.s32.totalorder %s236, %s250
    %p252 = scmp.eq.s32.totalorder %s37, 0
    %p253 = por %p251, %p252
    %s255 = sadd.s32 %s254, 1
    %p258 = scmp.eq.s32.totalorder %s31, 1
    %p259 = scmp.ne.s32.totalorder %s254, %s256
    %p260 = scmp.eq.s32.totalorder %s31, 0
    %p261 = por %p259, %p260
    %p262 = scmp.ne.s32.totalorder %s254, %s256
    %p263 = scmp.eq.s32.totalorder %s36, 1
    %p264 = por %p262, %p263
    %p265 = scmp.ne.s32.totalorder %s256, %s257
    %p266 = scmp.eq.s32.totalorder %s36, 0
    %p267 = por %p265, %p266
    %p268 = scmp.ne.s32.totalorder %s256, %s257
    %p269 = scmp.eq.s32.totalorder %s37, 1
    %p270 = por %p268, %p269
    %p272 = scmp.ne.s32.totalorder %s257, %s271
    %p273 = scmp.eq.s32.totalorder %s37, 0
    %p274 = por %p272, %p273
    %s276 = sadd.s32 %s275, 1
    %p279 = scmp.eq.s32.totalorder %s31, 1
    %p280 = scmp.ne.s32.totalorder %s275, %s277
    %p281 = scmp.eq.s32.totalorder %s31, 0
    %p282 = por %p280, %p281
    %p283 = scmp.ne.s32.totalorder %s275, %s277
    %p284 = scmp.eq.s32.totalorder %s36, 1
    %p285 = por %p283, %p284
    %p286 = scmp.ne.s32.totalorder %s277, %s278
    %p287 = scmp.eq.s32.totalorder %s36, 0
    %p288 = por %p286, %p287
    %p289 = scmp.ne.s32.totalorder %s277, %s278
    %p290 = scmp.eq.s32.totalorder %s37, 1
    %p291 = por %p289, %p290
    %p293 = scmp.ne.s32.totalorder %s278, %s292
    %p294 = scmp.eq.s32.totalorder %s37, 0
    %p295 = por %p293, %p294
    %s297 = sadd.s32 %s296, 1
    %p300 = scmp.eq.s32.totalorder %s31, 1
    %p301 = scmp.ne.s32.totalorder %s296, %s298
    %p302 = scmp.eq.s32.totalorder %s31, 0
    %p303 = por %p301, %p302
    %p304 = scmp.ne.s32.totalorder %s296, %s298
    %p305 = scmp.eq.s32.totalorder %s36, 1
    %p306 = por %p304, %p305
    %p307 = scmp.ne.s32.totalorder %s298, %s299
    %p308 = scmp.eq.s32.totalorder %s36, 0
    %p309 = por %p307, %p308
    %p310 = scmp.ne.s32.totalorder %s298, %s299
    %p311 = scmp.eq.s32.totalorder %s37, 1
    %p312 = por %p310, %p311
    %p314 = scmp.ne.s32.totalorder %s299, %s313
    %p315 = scmp.eq.s32.totalorder %s37, 0
    %p316 = por %p314, %p315
    %s318 = sadd.s32 %s317, 1
    %p321 = scmp.eq.s32.totalorder %s31, 1
    %p322 = scmp.ne.s32.totalorder %s317, %s319
    %p323 = scmp.eq.s32.totalorder %s31, 0
    %p324 = por %p322, %p323
    %p325 = scmp.ne.s32.totalorder %s317, %s319
    %p326 = scmp.eq.s32.totalorder %s36, 1
    %p327 = por %p325, %p326
    %p328 = scmp.ne.s32.totalorder %s319, %s320
    %p329 = scmp.eq.s32.totalorder %s36, 0
    %p330 = por %p328, %p329
    %p331 = scmp.ne.s32.totalorder %s319, %s320
    %p332 = scmp.eq.s32.totalorder %s37, 1
    %p333 = por %p331, %p332
    %p335 = scmp.ne.s32.totalorder %s320, %s334
    %p336 = scmp.eq.s32.totalorder %s37, 0
    %p337 = por %p335, %p336
    %s339 = sadd.s32 %s338, 1
    %p342 = scmp.eq.s32.totalorder %s31, 1
    %p343 = scmp.ne.s32.totalorder %s338, %s340
    %p344 = scmp.eq.s32.totalorder %s31, 0
    %p345 = por %p343, %p344
    %p346 = scmp.ne.s32.totalorder %s338, %s340
    %p347 = scmp.eq.s32.totalorder %s36, 1
    %p348 = por %p346, %p347
    %p349 = scmp.ne.s32.totalorder %s340, %s341
    %p350 = scmp.eq.s32.totalorder %s36, 0
    %p351 = por %p349, %p350
    %p352 = scmp.ne.s32.totalorder %s340, %s341
    %p353 = scmp.eq.s32.totalorder %s37, 1
    %p354 = por %p352, %p353
    %p356 = scmp.ne.s32.totalorder %s341, %s355
    %p357 = scmp.eq.s32.totalorder %s37, 0
    %p358 = por %p356, %p357
    %s360 = sadd.s32 %s359, 1
    %p363 = scmp.eq.s32.totalorder %s31, 1
    %p364 = scmp.ne.s32.totalorder %s359, %s361
    %p365 = scmp.eq.s32.totalorder %s31, 0
    %p366 = por %p364, %p365
    %p367 = scmp.ne.s32.totalorder %s359, %s361
    %p368 = scmp.eq.s32.totalorder %s36, 1
    %p369 = por %p367, %p368
    %p370 = scmp.ne.s32.totalorder %s361, %s362
    %p371 = scmp.eq.s32.totalorder %s36, 0
    %p372 = por %p370, %p371
    %p373 = scmp.ne.s32.totalorder %s361, %s362
    %p374 = scmp.eq.s32.totalorder %s37, 1
    %p375 = por %p373, %p374
    %p377 = scmp.ne.s32.totalorder %s362, %s376
    %p378 = scmp.eq.s32.totalorder %s37, 0
    %p379 = por %p377, %p378
    %s381 = sadd.s32 %s380, 1
    %p384 = scmp.eq.s32.totalorder %s31, 1
    %p385 = scmp.ne.s32.totalorder %s380, %s382
    %p386 = scmp.eq.s32.totalorder %s31, 0
    %p387 = por %p385, %p386
    %p388 = scmp.ne.s32.totalorder %s380, %s382
    %p389 = scmp.eq.s32.totalorder %s36, 1
    %p390 = por %p388, %p389
    %p391 = scmp.ne.s32.totalorder %s382, %s383
    %p392 = scmp.eq.s32.totalorder %s36, 0
    %p393 = por %p391, %p392
    %p394 = scmp.ne.s32.totalorder %s382, %s383
    %p395 = scmp.eq.s32.totalorder %s37, 1
    %p396 = por %p394, %p395
    %p398 = scmp.ne.s32.totalorder %s383, %s397
    %p399 = scmp.eq.s32.totalorder %s37, 0
    %p400 = por %p398, %p399
    %s402 = sadd.s32 %s401, 1
    %p405 = scmp.eq.s32.totalorder %s31, 1
    %p406 = scmp.ne.s32.totalorder %s401, %s403
    %p407 = scmp.eq.s32.totalorder %s31, 0
    %p408 = por %p406, %p407
    %p409 = scmp.ne.s32.totalorder %s401, %s403
    %p410 = scmp.eq.s32.totalorder %s36, 1
    %p411 = por %p409, %p410
    %p412 = scmp.ne.s32.totalorder %s403, %s404
    %p413 = scmp.eq.s32.totalorder %s36, 0
    %p414 = por %p412, %p413
    %p415 = scmp.ne.s32.totalorder %s403, %s404
    %p416 = scmp.eq.s32.totalorder %s37, 1
    %p417 = por %p415, %p416
    %p419 = scmp.ne.s32.totalorder %s404, %s418
    %p420 = scmp.eq.s32.totalorder %s37, 0
    %p421 = por %p419, %p420
    %s423 = sadd.s32 %s422, 1
    %p426 = scmp.eq.s32.totalorder %s31, 1
    %p427 = scmp.ne.s32.totalorder %s422, %s424
    %p428 = scmp.eq.s32.totalorder %s31, 0
    %p429 = por %p427, %p428
    %p430 = scmp.ne.s32.totalorder %s422, %s424
    %p431 = scmp.eq.s32.totalorder %s36, 1
    %p432 = por %p430, %p431
    %p433 = scmp.ne.s32.totalorder %s424, %s425
    %p434 = scmp.eq.s32.totalorder %s36, 0
    %p435 = por %p433, %p434
    %p436 = scmp.ne.s32.totalorder %s424, %s425
    %p437 = scmp.eq.s32.totalorder %s37, 1
    %p438 = por %p436, %p437
    %p440 = scmp.ne.s32.totalorder %s425, %s439
    %p441 = scmp.eq.s32.totalorder %s37, 0
    %p442 = por %p440, %p441
    %s444 = sadd.s32 %s443, 1
    %p447 = scmp.eq.s32.totalorder %s31, 1
    %p448 = scmp.ne.s32.totalorder %s443, %s445
    %p449 = scmp.eq.s32.totalorder %s31, 0
    %p450 = por %p448, %p449
    %p451 = scmp.ne.s32.totalorder %s443, %s445
    %p452 = scmp.eq.s32.totalorder %s36, 1
    %p453 = por %p451, %p452
    %p454 = scmp.ne.s32.totalorder %s445, %s446
    %p455 = scmp.eq.s32.totalorder %s36, 0
    %p456 = por %p454, %p455
    %p457 = scmp.ne.s32.totalorder %s445, %s446
    %p458 = scmp.eq.s32.totalorder %s37, 1
    %p459 = por %p457, %p458
    %p461 = scmp.ne.s32.totalorder %s446, %s460
    %p462 = scmp.eq.s32.totalorder %s37, 0
    %p463 = por %p461, %p462
    %s465 = sadd.s32 %s464, 1
    %p468 = scmp.eq.s32.totalorder %s31, 1
    %p469 = scmp.ne.s32.totalorder %s464, %s466
    %p470 = scmp.eq.s32.totalorder %s31, 0
    %p471 = por %p469, %p470
    %p472 = scmp.ne.s32.totalorder %s464, %s466
    %p473 = scmp.eq.s32.totalorder %s36, 1
    %p474 = por %p472, %p473
    %p475 = scmp.ne.s32.totalorder %s466, %s467
    %p476 = scmp.eq.s32.totalorder %s36, 0
    %p477 = por %p475, %p476
    %p478 = scmp.ne.s32.totalorder %s466, %s467
    %p479 = scmp.eq.s32.totalorder %s37, 1
    %p480 = por %p478, %p479
    %p482 = scmp.ne.s32.totalorder %s467, %s481
    %p483 = scmp.eq.s32.totalorder %s37, 0
    %p484 = por %p482, %p483
    %s486 = sadd.s32 %s485, 1
    %p489 = scmp.eq.s32.totalorder %s31, 1
    %p490 = scmp.ne.s32.totalorder %s485, %s487
    %p491 = scmp.eq.s32.totalorder %s31, 0
    %p492 = por %p490, %p491
    %p493 = scmp.ne.s32.totalorder %s485, %s487
    %p494 = scmp.eq.s32.totalorder %s36, 1
    %p495 = por %p493, %p494
    %p496 = scmp.ne.s32.totalorder %s487, %s488
    %p497 = scmp.eq.s32.totalorder %s36, 0
    %p498 = por %p496, %p497
    %p499 = scmp.ne.s32.totalorder %s487, %s488
    %p500 = scmp.eq.s32.totalorder %s37, 1
    %p501 = por %p499, %p500
    %p503 = scmp.ne.s32.totalorder %s488, %s502
    %p504 = scmp.eq.s32.totalorder %s37, 0
    %p505 = por %p503, %p504
    %s507 = sadd.s32 %s506, 1
    %p510 = scmp.eq.s32.totalorder %s31, 1
    %p511 = scmp.ne.s32.totalorder %s506, %s508
    %p512 = scmp.eq.s32.totalorder %s31, 0
    %p513 = por %p511, %p512
    %p514 = scmp.ne.s32.totalorder %s506, %s508
    %p515 = scmp.eq.s32.totalorder %s36, 1
    %p516 = por %p514, %p515
    %p517 = scmp.ne.s32.totalorder %s508, %s509
    %p518 = scmp.eq.s32.totalorder %s36, 0
    %p519 = por %p517, %p518
    %p520 = scmp.ne.s32.totalorder %s508, %s509
    %p521 = scmp.eq.s32.totalorder %s37, 1
    %p522 = por %p520, %p521
    %p524 = scmp.ne.s32.totalorder %s509, %s523
    %p525 = scmp.eq.s32.totalorder %s37, 0
    %p526 = por %p524, %p525
    %s528 = sadd.s32 %s527, 1
    %p531 = scmp.eq.s32.totalorder %s31, 1
    %p532 = scmp.ne.s32.totalorder %s527, %s529
    %p533 = scmp.eq.s32.totalorder %s31, 0
    %p534 = por %p532, %p533
    %p535 = scmp.ne.s32.totalorder %s527, %s529
    %p536 = scmp.eq.s32.totalorder %s36, 1
    %p537 = por %p535, %p536
    %p538 = scmp.ne.s32.totalorder %s529, %s530
    %p539 = scmp.eq.s32.totalorder %s36, 0
    %p540 = por %p538, %p539
    %p541 = scmp.ne.s32.totalorder %s529, %s530
    %p542 = scmp.eq.s32.totalorder %s37, 1
    %p543 = por %p541, %p542
    %p545 = scmp.ne.s32.totalorder %s530, %s544
    %p546 = scmp.eq.s32.totalorder %s37, 0
    %p547 = por %p545, %p546
    %s549 = sadd.s32 %s548, 1
    %p552 = scmp.eq.s32.totalorder %s31, 1
    %p553 = scmp.ne.s32.totalorder %s548, %s550
    %p554 = scmp.eq.s32.totalorder %s31, 0
    %p555 = por %p553, %p554
    %p556 = scmp.ne.s32.totalorder %s548, %s550
    %p557 = scmp.eq.s32.totalorder %s36, 1
    %p558 = por %p556, %p557
    %p559 = scmp.ne.s32.totalorder %s550, %s551
    %p560 = scmp.eq.s32.totalorder %s36, 0
    %p561 = por %p559, %p560
    %p562 = scmp.ne.s32.totalorder %s550, %s551
    %p563 = scmp.eq.s32.totalorder %s37, 1
    %p564 = por %p562, %p563
    %p566 = scmp.ne.s32.totalorder %s551, %s565
    %p567 = scmp.eq.s32.totalorder %s37, 0
    %p568 = por %p566, %p567
    %s569 = ssub.s32 %s31, %s38
    %p570 = scmp.eq.s32.totalorder %s569, 0
    %s572 = sadd.s32 %s571, 1
    %s573 = scalar_select %p570, %s571, %s572
    %p576 = pneg %p570
    %p577 = scmp.eq.s32.totalorder %s31, 1
    %p578 = por %p576, %p577
    %p579 = scmp.ne.s32.totalorder %s571, %s574
    %p580 = scmp.eq.s32.totalorder %s31, 0
    %p581 = por %p579, %p580
    %p582 = scmp.ne.s32.totalorder %s571, %s574
    %p583 = scmp.eq.s32.totalorder %s36, 1
    %p584 = por %p582, %p583
    %p585 = scmp.ne.s32.totalorder %s574, %s575
    %p586 = scmp.eq.s32.totalorder %s36, 0
    %p587 = por %p585, %p586
    %p588 = scmp.ne.s32.totalorder %s574, %s575
    %p589 = scmp.eq.s32.totalorder %s37, 1
    %p590 = por %p588, %p589
    %p592 = scmp.ne.s32.totalorder %s575, %s591
    %p593 = scmp.eq.s32.totalorder %s37, 0
    %p594 = por %p592, %p593
    %p595 = scmp.le.s32.totalorder 1, %s31
    %p596 = scmp.lt.s32.totalorder %s31, 3
    %p597 = pnand %p595, %p596
    %p598 = pneg %p597
    // Predicated region
    $region9: #{down_fwd.1} parent=5 // pred_check
      _
    $region10: #{down_fwd.1} parent=5 // pred_check_branch
      %600 = sbr.rel (%p597) target = $region12
    $region11: #{down_fwd.1} parent=5 // pred_region
      %s601 = ssub.s32 %s31, 1
      // Predicated region
      $region13: #{down_fwd.1} parent=11 // pred_check
        %p602 = pneg %p78
      $region14: #{down_fwd.1} parent=11 // pred_check_branch
        %604 = sbr.rel (%p602) target = $region16
      $region15: #{down_fwd.1} parent=11 // pred_region
        _
      $region16: #{down_fwd.1} parent=11 // pred_fallthru
        _
      // Predicated region
      $region17: #{down_fwd.1} parent=11 // pred_check
        %p605 = pneg %p99
      $region18: #{down_fwd.1} parent=11 // pred_check_branch
        %607 = sbr.rel (%p605) target = $region20
      $region19: #{down_fwd.1} parent=11 // pred_region
        _
      $region20: #{down_fwd.1} parent=11 // pred_fallthru
        _
      // Predicated region
      $region21: #{down_fwd.1} parent=11 // pred_check
        %p608 = pneg %p120
      $region22: #{down_fwd.1} parent=11 // pred_check_branch
        %610 = sbr.rel (%p608) target = $region24
      $region23: #{down_fwd.1} parent=11 // pred_region
        _
      $region24: #{down_fwd.1} parent=11 // pred_fallthru
        _
      // Predicated region
      $region25: #{down_fwd.1} parent=11 // pred_check
        %p611 = pneg %p141
      $region26: #{down_fwd.1} parent=11 // pred_check_branch
        %613 = sbr.rel (%p611) target = $region28
      $region27: #{down_fwd.1} parent=11 // pred_region
        _
      $region28: #{down_fwd.1} parent=11 // pred_fallthru
        _
      // Predicated region
      $region29: #{down_fwd.1} parent=11 // pred_check
        %p614 = pneg %p162
      $region30: #{down_fwd.1} parent=11 // pred_check_branch
        %616 = sbr.rel (%p614) target = $region32
      $region31: #{down_fwd.1} parent=11 // pred_region
        _
      $region32: #{down_fwd.1} parent=11 // pred_fallthru
        _
      // Predicated region
      $region33: #{down_fwd.1} parent=11 // pred_check
        %p617 = pneg %p183
      $region34: #{down_fwd.1} parent=11 // pred_check_branch
        %619 = sbr.rel (%p617) target = $region36
      $region35: #{down_fwd.1} parent=11 // pred_region
        _
      $region36: #{down_fwd.1} parent=11 // pred_fallthru
        _
      // Predicated region
      $region37: #{down_fwd.1} parent=11 // pred_check
        %p620 = pneg %p204
      $region38: #{down_fwd.1} parent=11 // pred_check_branch
        %622 = sbr.rel (%p620) target = $region40
      $region39: #{down_fwd.1} parent=11 // pred_region
        _
      $region40: #{down_fwd.1} parent=11 // pred_fallthru
        _
      // Predicated region
      $region41: #{down_fwd.1} parent=11 // pred_check
        %p623 = pneg %p225
      $region42: #{down_fwd.1} parent=11 // pred_check_branch
        %625 = sbr.rel (%p623) target = $region44
      $region43: #{down_fwd.1} parent=11 // pred_region
        _
      $region44: #{down_fwd.1} parent=11 // pred_fallthru
        _
      // Predicated region
      $region45: #{down_fwd.1} parent=11 // pred_check
        %p626 = pneg %p246
      $region46: #{down_fwd.1} parent=11 // pred_check_branch
        %628 = sbr.rel (%p626) target = $region48
      $region47: #{down_fwd.1} parent=11 // pred_region
        _
      $region48: #{down_fwd.1} parent=11 // pred_fallthru
        _
      // Predicated region
      $region49: #{down_fwd.1} parent=11 // pred_check
        %p629 = pneg %p267
      $region50: #{down_fwd.1} parent=11 // pred_check_branch
        %631 = sbr.rel (%p629) target = $region52
      $region51: #{down_fwd.1} parent=11 // pred_region
        _
      $region52: #{down_fwd.1} parent=11 // pred_fallthru
        _
      // Predicated region
      $region53: #{down_fwd.1} parent=11 // pred_check
        %p632 = pneg %p288
      $region54: #{down_fwd.1} parent=11 // pred_check_branch
        %634 = sbr.rel (%p632) target = $region56
      $region55: #{down_fwd.1} parent=11 // pred_region
        _
      $region56: #{down_fwd.1} parent=11 // pred_fallthru
        _
      // Predicated region
      $region57: #{down_fwd.1} parent=11 // pred_check
        %p635 = pneg %p309
      $region58: #{down_fwd.1} parent=11 // pred_check_branch
        %637 = sbr.rel (%p635) target = $region60
      $region59: #{down_fwd.1} parent=11 // pred_region
        _
      $region60: #{down_fwd.1} parent=11 // pred_fallthru
        _
      // Predicated region
      $region61: #{down_fwd.1} parent=11 // pred_check
        %p638 = pneg %p330
      $region62: #{down_fwd.1} parent=11 // pred_check_branch
        %640 = sbr.rel (%p638) target = $region64
      $region63: #{down_fwd.1} parent=11 // pred_region
        _
      $region64: #{down_fwd.1} parent=11 // pred_fallthru
        _
      // Predicated region
      $region65: #{down_fwd.1} parent=11 // pred_check
        %p641 = pneg %p351
      $region66: #{down_fwd.1} parent=11 // pred_check_branch
        %643 = sbr.rel (%p641) target = $region68
      $region67: #{down_fwd.1} parent=11 // pred_region
        _
      $region68: #{down_fwd.1} parent=11 // pred_fallthru
        _
      // Predicated region
      $region69: #{down_fwd.1} parent=11 // pred_check
        %p644 = pneg %p372
      $region70: #{down_fwd.1} parent=11 // pred_check_branch
        %646 = sbr.rel (%p644) target = $region72
      $region71: #{down_fwd.1} parent=11 // pred_region
        _
      $region72: #{down_fwd.1} parent=11 // pred_fallthru
        _
      // Predicated region
      $region73: #{down_fwd.1} parent=11 // pred_check
        %p647 = pneg %p393
      $region74: #{down_fwd.1} parent=11 // pred_check_branch
        %649 = sbr.rel (%p647) target = $region76
      $region75: #{down_fwd.1} parent=11 // pred_region
        _
      $region76: #{down_fwd.1} parent=11 // pred_fallthru
        _
      // Predicated region
      $region77: #{down_fwd.1} parent=11 // pred_check
        %p650 = pneg %p414
      $region78: #{down_fwd.1} parent=11 // pred_check_branch
        %652 = sbr.rel (%p650) target = $region80
      $region79: #{down_fwd.1} parent=11 // pred_region
        _
      $region80: #{down_fwd.1} parent=11 // pred_fallthru
        _
      // Predicated region
      $region81: #{down_fwd.1} parent=11 // pred_check
        %p653 = pneg %p435
      $region82: #{down_fwd.1} parent=11 // pred_check_branch
        %655 = sbr.rel (%p653) target = $region84
      $region83: #{down_fwd.1} parent=11 // pred_region
        _
      $region84: #{down_fwd.1} parent=11 // pred_fallthru
        _
      // Predicated region
      $region85: #{down_fwd.1} parent=11 // pred_check
        %p656 = pneg %p456
      $region86: #{down_fwd.1} parent=11 // pred_check_branch
        %658 = sbr.rel (%p656) target = $region88
      $region87: #{down_fwd.1} parent=11 // pred_region
        _
      $region88: #{down_fwd.1} parent=11 // pred_fallthru
        _
      // Predicated region
      $region89: #{down_fwd.1} parent=11 // pred_check
        %p659 = pneg %p477
      $region90: #{down_fwd.1} parent=11 // pred_check_branch
        %661 = sbr.rel (%p659) target = $region92
      $region91: #{down_fwd.1} parent=11 // pred_region
        _
      $region92: #{down_fwd.1} parent=11 // pred_fallthru
        _
      // Predicated region
      $region93: #{down_fwd.1} parent=11 // pred_check
        %p662 = pneg %p498
      $region94: #{down_fwd.1} parent=11 // pred_check_branch
        %664 = sbr.rel (%p662) target = $region96
      $region95: #{down_fwd.1} parent=11 // pred_region
        _
      $region96: #{down_fwd.1} parent=11 // pred_fallthru
        _
      // Predicated region
      $region97: #{down_fwd.1} parent=11 // pred_check
        %p665 = pneg %p519
      $region98: #{down_fwd.1} parent=11 // pred_check_branch
        %667 = sbr.rel (%p665) target = $region100
      $region99: #{down_fwd.1} parent=11 // pred_region
        _
      $region100: #{down_fwd.1} parent=11 // pred_fallthru
        _
      // Predicated region
      $region101: #{down_fwd.1} parent=11 // pred_check
        %p668 = pneg %p540
      $region102: #{down_fwd.1} parent=11 // pred_check_branch
        %670 = sbr.rel (%p668) target = $region104
      $region103: #{down_fwd.1} parent=11 // pred_region
        _
      $region104: #{down_fwd.1} parent=11 // pred_fallthru
        _
      // Predicated region
      $region105: #{down_fwd.1} parent=11 // pred_check
        %p671 = pneg %p561
      $region106: #{down_fwd.1} parent=11 // pred_check_branch
        %673 = sbr.rel (%p671) target = $region108
      $region107: #{down_fwd.1} parent=11 // pred_region
        _
      $region108: #{down_fwd.1} parent=11 // pred_fallthru
        _
    $region12: #{down_fwd.1} parent=5 // pred_fallthru
      _
    %p674 = scmp.lt.s32.totalorder %s31, 2
    // Predicated region
    $region109: #{down_fwd.1} parent=5 // pred_check
      %p675 = pneg %p674
    $region110: #{down_fwd.1} parent=5 // pred_check_branch
      %677 = sbr.rel (%p675) target = $region112
    $region111: #{down_fwd.1} parent=5 // pred_region
      // Predicated region
      $region113: #{down_fwd.1} parent=111 // pred_check
        %p678 = pneg %p51
      $region114: #{down_fwd.1} parent=111 // pred_check_branch
        %680 = sbr.rel (%p678) target = $region116
      $region115: #{down_fwd.1} parent=111 // pred_region
        %p681 = scmp.lt.s32.totalorder %s31, 1
        %s682 = scalar_select %p681, %s31, 1
        %s683 = smul.addr %s682, 8
        %s684 = smul.addr %s683, 8
        %s685 = scalar_lea.vmem %s0, %s684
      $region116: #{down_fwd.1} parent=111 // pred_fallthru
        _
    $region112: #{down_fwd.1} parent=5 // pred_fallthru
      _
    %p686 = scmp.le.s32.totalorder 1, %s31
    %p687 = scmp.lt.s32.totalorder %s31, 3
    %p688 = pnand %p686, %p687
    %p689 = pneg %p688
    // Predicated region
    $region117: #{down_fwd.1} parent=5 // pred_check
      _
    $region118: #{down_fwd.1} parent=5 // pred_check_branch
      %691 = sbr.rel (%p688) target = $region120
    $region119: #{down_fwd.1} parent=5 // pred_region
      %s692 = ssub.s32 %s31, 1
      %p693 = scmp.lt.s32.totalorder %s36, 1
      %s694 = scalar_select %p693, %s36, 1
      %s695 = smul.addr %s694, 8
      %s696 = smul.addr %s695, 8
      %s697 = scalar_lea.vmem %s0, %s696
      %p698 = pneg %p57
      %p699 = pneg %p54
      %p700 = pneg %p78
      %p701 = pneg %p75
      %p702 = pneg %p99
      %p703 = pneg %p96
      %p704 = pneg %p120
      %p705 = pneg %p117
      %p706 = pneg %p141
      %p707 = pneg %p138
      %p708 = pneg %p162
      %p709 = pneg %p159
      %p710 = pneg %p183
      %p711 = pneg %p180
      %p712 = pneg %p204
      %p713 = pneg %p201
      %p714 = pneg %p225
      %p715 = pneg %p222
      %p716 = pneg %p246
      %p717 = pneg %p243
      %p718 = pneg %p267
      %p719 = pneg %p264
      %p720 = pneg %p288
      %p721 = pneg %p285
      %p722 = pneg %p309
      %p723 = pneg %p306
      %p724 = pneg %p330
      %p725 = pneg %p327
      %p726 = pneg %p351
      %p727 = pneg %p348
      %p728 = pneg %p372
      %p729 = pneg %p369
      %p730 = pneg %p393
      %p731 = pneg %p390
      %p732 = pneg %p414
      %p733 = pneg %p411
      %p734 = pneg %p435
      %p735 = pneg %p432
      %p736 = pneg %p456
      %p737 = pneg %p453
      %p738 = pneg %p477
      %p739 = pneg %p474
      %p740 = pneg %p498
      %p741 = pneg %p495
      %p742 = pneg %p519
      %p743 = pneg %p516
      %p744 = pneg %p540
      %p745 = pneg %p537
      %p746 = pneg %p561
      %p747 = pneg %p558
      %p748 = pneg %p587
      %p749 = pneg %p584
      %p750 = scmp.lt.s32.totalorder %s36, 1
      %s751 = scalar_select %p750, %s36, 1
      %s752 = smul.addr %s751, 8
      %s753 = smul.addr %s752, 8
      %s754 = scalar_lea.vmem %s25, %s753
      %p755 = scmp.lt.s32.totalorder %s36, 1
      %s756 = scalar_select %p755, %s36, 1
      %s757 = smul.addr %s756, 8
      %s758 = smul.addr %s757, 8
      %s759 = scalar_lea.vmem %s0, %s758
      %p760 = scmp.lt.s32.totalorder %s36, 1
      %s761 = scalar_select %p760, %s36, 1
      %s762 = smul.addr %s761, 8
      %s763 = smul.addr %s762, 8
      %s764 = scalar_lea.vmem %s25, %s763
      %v765 = vld [vmem:[%s759] sm:$0xff]
      %v766 = vld [vmem:[%s759 + $0x8] sm:$0xff]
      %v767 = vld [vmem:[%s759 + $0x10] sm:$0xff]
      %v768 = vld [vmem:[%s759 + $0x18] sm:$0xff]
      %v769 = vld [vmem:[%s759 + $0x20] sm:$0xff]
      %v770 = vld [vmem:[%s759 + $0x28] sm:$0xff]
      %v771 = vld [vmem:[%s759 + $0x30] sm:$0xff]
      %v772 = vld [vmem:[%s759 + $0x38] sm:$0xff]
      %v773 = vld [vmem:[%s1] sm:$0xf]
      %v774 = vld [vmem:[%s2] sm:$0x1]
      %v776 = vlaneseq
      %v777 = vshrl.u32 %v776, 7
      %v778 = vsub.s32 0, %v777
      %v779 = vrot.slane %v774, %v778
      %vm781 = vcmask 31744
      %v783 = vsel %vm781, %v765, 0
      %v786 = vsel %vm781, %v766, 0
      %v789 = vsel %vm781, %v767, 0
      %v792 = vsel %vm781, %v768, 0
      %v795 = vsel %vm781, %v769, 0
      %v798 = vsel %vm781, %v770, 0
      %v801 = vsel %vm781, %v771, 0
      %v804 = vsel %vm781, %v772, 0
      %vm806 = vcmask 1043456
      %v808 = vsel %vm806, %v773, 0
      %810 = vmatprep.subr.mxu0 0.0
      %811 = vmatpush1.msra.mxu0 %v808
      %812 = vmatprep.subr.mxu0 0.0
      %813 = vmatpush1.msra.mxu0 0.0
      %814 = vmatprep.subr.mxu0 0.0
      %815 = vmatpush1.msra.mxu0 0.0
      %816 = vmatprep.subr.mxu0 0.0
      %817 = vmatpush1.msra.mxu0 0.0
      %818 = vmatprep.subr.mxu0 0.0
      %819 = vmatpush1.msra.mxu0 0.0
      %820 = vmatprep.subr.mxu0 0.0
      %821 = vmatpush1.msra.mxu0 0.0
      %822 = vmatprep.subr.mxu0 0.0
      %823 = vmatpush1.msra.mxu0 0.0
      %824 = vmatprep.subr.mxu0 0.0
      %825 = vmatpush1.msra.mxu0 0.0
      %826 = vmatprep.subr.mxu0 0.0
      %827 = vmatpush1.msra.mxu0 0.0
      %828 = vmatprep.subr.mxu0 0.0
      %829 = vmatpush1.msra.mxu0 0.0
      %830 = vmatprep.subr.mxu0 0.0
      %831 = vmatpush1.msra.mxu0 0.0
      %832 = vmatprep.subr.mxu0 0.0
      %833 = vmatpush1.msra.mxu0 0.0
      %834 = vmatprep.subr.mxu0 0.0
      %835 = vmatpush1.msra.mxu0 0.0
      %836 = vmatprep.subr.mxu0 0.0
      %837 = vmatpush1.msra.mxu0 0.0
      %838 = vmatprep.subr.mxu0 0.0
      %839 = vmatpush1.msra.mxu0 0.0
      %840 = vmatprep.subr.mxu0 0.0
      %841 = vmatpush1.msra.mxu0 0.0
      %842 = vmatprep.subr.mxu0 0.0
      %843 = vmatpush1.msra.mxu0 0.0
      %844 = vmatprep.subr.mxu0 0.0
      %845 = vmatpush1.msra.mxu0 0.0
      %846 = vmatprep.subr.mxu0 0.0
      %847 = vmatpush1.msra.mxu0 0.0
      %848 = vmatprep.subr.mxu0 0.0
      %849 = vmatpush1.msra.mxu0 0.0
      %850 = vmatprep.subr.mxu0 0.0
      %851 = vmatpush1.msra.mxu0 0.0
      %852 = vmatprep.subr.mxu0 0.0
      %853 = vmatpush1.msra.mxu0 0.0
      %854 = vmatprep.subr.mxu0 0.0
      %855 = vmatpush1.msra.mxu0 0.0
      %856 = vmatprep.subr.mxu0 0.0
      %857 = vmatpush1.msra.mxu0 0.0
      %858 = vmatprep.subr.mxu0 0.0
      %859 = vmatpush1.msra.mxu0 0.0
      %860 = vmatprep.subr.mxu0 0.0
      %861 = vmatpush1.msra.mxu0 0.0
      %862 = vmatprep.subr.mxu0 0.0
      %863 = vmatpush1.msra.mxu0 0.0
      %864 = vmatprep.subr.mxu0 0.0
      %865 = vmatpush1.msra.mxu0 0.0
      %866 = vmatprep.subr.mxu0 0.0
      %867 = vmatpush1.msra.mxu0 0.0
      %868 = vmatprep.subr.mxu0 0.0
      %869 = vmatpush1.msra.mxu0 0.0
      %870 = vmatprep.subr.mxu0 0.0
      %871 = vmatpush1.msra.mxu0 0.0
      %872 = vmatprep.subr.mxu0 0.0
      %873 = vmatpush1.msra.mxu0 0.0
      %874 = vmatprep.mubr.f32.mxu0 0.0
      %875 = vmatmul.mubr.f32.gmra.mrb[0].mxu0 %v783
      %v876 = vpop.f32.mrb[0].mxu0
      %v877 = vadd.f32 %v779, %v876
      %v878 = vpop.f32.mrb[0].mxu0
      %879 = vmatprep.mubr.f32.mxu0 0.0
      %880 = vmatmul.mubr.f32.gmra.mrb[0].mxu0 %v786
      %v881 = vpop.f32.mrb[0].mxu0
      %v882 = vadd.f32 %v779, %v881
      %v883 = vpop.f32.mrb[0].mxu0
      %884 = vmatprep.mubr.f32.mxu0 0.0
      %885 = vmatmul.mubr.f32.gmra.mrb[0].mxu0 %v789
      %v886 = vpop.f32.mrb[0].mxu0
      %v887 = vadd.f32 %v779, %v886
      %v888 = vpop.f32.mrb[0].mxu0
      %889 = vmatprep.mubr.f32.mxu0 0.0
      %890 = vmatmul.mubr.f32.gmra.mrb[0].mxu0 %v792
      %v891 = vpop.f32.mrb[0].mxu0
      %v892 = vadd.f32 %v779, %v891
      %v893 = vpop.f32.mrb[0].mxu0
      %894 = vmatprep.mubr.f32.mxu0 0.0
      %895 = vmatmul.mubr.f32.gmra.mrb[0].mxu0 %v795
      %v896 = vpop.f32.mrb[0].mxu0
      %v897 = vadd.f32 %v779, %v896
      %v898 = vpop.f32.mrb[0].mxu0
      %899 = vmatprep.mubr.f32.mxu0 0.0
      %900 = vmatmul.mubr.f32.gmra.mrb[0].mxu0 %v798
      %v901 = vpop.f32.mrb[0].mxu0
      %v902 = vadd.f32 %v779, %v901
      %v903 = vpop.f32.mrb[0].mxu0
      %904 = vmatprep.mubr.f32.mxu0 0.0
      %905 = vmatmul.mubr.f32.gmra.mrb[0].mxu0 %v801
      %v906 = vpop.f32.mrb[0].mxu0
      %v907 = vadd.f32 %v779, %v906
      %v908 = vpop.f32.mrb[0].mxu0
      %909 = vmatprep.mubr.f32.mxu0 0.0
      %910 = vmatmul.mubr.f32.gmra.mrb[0].mxu0 %v804
      %v911 = vpop.f32.mrb[0].mxu0
      %v912 = vadd.f32 %v779, %v911
      %v913 = vpop.f32.mrb[0].mxu0
      %914 = vdwg.mxu0
      %v915 = vsub.f32 0.0, %v877
      %v916 = vsub.f32 0.0, %v882
      %v917 = vsub.f32 0.0, %v887
      %v918 = vsub.f32 0.0, %v892
      %v919 = vsub.f32 0.0, %v897
      %v920 = vsub.f32 0.0, %v902
      %v921 = vsub.f32 0.0, %v907
      %v922 = vsub.f32 0.0, %v912
      %v923 = vmul.f32 %v915, 1.442695
      %v924 = vpow.pop %v923
      %v925 = vmul.f32 %v916, 1.442695
      %v926 = vpow.pop %v925
      %v927 = vmul.f32 %v917, 1.442695
      %v928 = vpow.pop %v927
      %v929 = vmul.f32 %v918, 1.442695
      %v930 = vpow.pop %v929
      %v931 = vmul.f32 %v919, 1.442695
      %v932 = vpow.pop %v931
      %v933 = vmul.f32 %v920, 1.442695
      %v934 = vpow.pop %v933
      %v935 = vmul.f32 %v921, 1.442695
      %v936 = vpow.pop %v935
      %v937 = vmul.f32 %v922, 1.442695
      %v938 = vpow.pop %v937
      %v939 = vadd.f32 %v924, 1.0
      %v940 = vadd.f32 %v926, 1.0
      %v941 = vadd.f32 %v928, 1.0
      %v942 = vadd.f32 %v930, 1.0
      %v943 = vadd.f32 %v932, 1.0
      %v944 = vadd.f32 %v934, 1.0
      %v945 = vadd.f32 %v936, 1.0
      %v946 = vadd.f32 %v938, 1.0
      %v947 = vrcp.pop %v939
      %v948 = vmul.f32 %v877, %v947
      %v949 = vrcp.pop %v940
      %v950 = vmul.f32 %v882, %v949
      %v951 = vrcp.pop %v941
      %v952 = vmul.f32 %v887, %v951
      %v953 = vrcp.pop %v942
      %v954 = vmul.f32 %v892, %v953
      %v955 = vrcp.pop %v943
      %v956 = vmul.f32 %v897, %v955
      %v957 = vrcp.pop %v944
      %v958 = vmul.f32 %v902, %v957
      %v959 = vrcp.pop %v945
      %v960 = vmul.f32 %v907, %v959
      %v961 = vrcp.pop %v946
      %v962 = vmul.f32 %v912, %v961
      %v963 = vld [vmem:[%s3] sm:$0xf]
      %v964 = vld [vmem:[%s4] sm:$0xf]
      %v965 = vld [vmem:[%s5] sm:$0x1]
      %v966 = vld [vmem:[%s6] sm:$0xf]
      %v967 = vld [vmem:[%s7] sm:$0x1]
      %v968 = vld [vmem:[%s8] sm:$0x1]
      %v969 = vld [vmem:[%s9] sm:$0x1]
      %v970 = vld [vmem:[%s10] sm:$0xf]
      %v971 = vld [vmem:[%s11] sm:$0x1]
      %v972 = vld [vmem:[%s12] sm:$0x1]
      %v974 = vsel %vm806, %v963, 0
      %976 = vmatprep.subr.mxu0 0.0
      %977 = vmatpush1.msra.mxu0 %v974
      %978 = vmatprep.subr.mxu0 0.0
      %979 = vmatpush1.msra.mxu0 0.0
      %980 = vmatprep.subr.mxu0 0.0
      %981 = vmatpush1.msra.mxu0 0.0
      %982 = vmatprep.subr.mxu0 0.0
      %983 = vmatpush1.msra.mxu0 0.0
      %984 = vmatprep.subr.mxu0 0.0
      %985 = vmatpush1.msra.mxu0 0.0
      %986 = vmatprep.subr.mxu0 0.0
      %987 = vmatpush1.msra.mxu0 0.0
      %988 = vmatprep.subr.mxu0 0.0
      %989 = vmatpush1.msra.mxu0 0.0
      %990 = vmatprep.subr.mxu0 0.0
      %991 = vmatpush1.msra.mxu0 0.0
      %992 = vmatprep.subr.mxu0 0.0
      %993 = vmatpush1.msra.mxu0 0.0
      %994 = vmatprep.subr.mxu0 0.0
      %995 = vmatpush1.msra.mxu0 0.0
      %996 = vmatprep.subr.mxu0 0.0
      %997 = vmatpush1.msra.mxu0 0.0
      %998 = vmatprep.subr.mxu0 0.0
      %999 = vmatpush1.msra.mxu0 0.0
      %1000 = vmatprep.subr.mxu0 0.0
      %1001 = vmatpush1.msra.mxu0 0.0
      %1002 = vmatprep.subr.mxu0 0.0
      %1003 = vmatpush1.msra.mxu0 0.0
      %1004 = vmatprep.subr.mxu0 0.0
      %1005 = vmatpush1.msra.mxu0 0.0
      %1006 = vmatprep.subr.mxu0 0.0
      %1007 = vmatpush1.msra.mxu0 0.0
      %1008 = vmatprep.subr.mxu0 0.0
      %1009 = vmatpush1.msra.mxu0 0.0
      %1010 = vmatprep.subr.mxu0 0.0
      %1011 = vmatpush1.msra.mxu0 0.0
      %1012 = vmatprep.subr.mxu0 0.0
      %1013 = vmatpush1.msra.mxu0 0.0
      %1014 = vmatprep.subr.mxu0 0.0
      %1015 = vmatpush1.msra.mxu0 0.0
      %1016 = vmatprep.subr.mxu0 0.0
      %1017 = vmatpush1.msra.mxu0 0.0
      %1018 = vmatprep.subr.mxu0 0.0
      %1019 = vmatpush1.msra.mxu0 0.0
      %1020 = vmatprep.subr.mxu0 0.0
      %1021 = vmatpush1.msra.mxu0 0.0
      %1022 = vmatprep.subr.mxu0 0.0
      %1023 = vmatpush1.msra.mxu0 0.0
      %1024 = vmatprep.subr.mxu0 0.0
      %1025 = vmatpush1.msra.mxu0 0.0
      %1026 = vmatprep.subr.mxu0 0.0
      %1027 = vmatpush1.msra.mxu0 0.0
      %1028 = vmatprep.subr.mxu0 0.0
      %1029 = vmatpush1.msra.mxu0 0.0
      %1030 = vmatprep.subr.mxu0 0.0
      %1031 = vmatpush1.msra.mxu0 0.0
      %1032 = vmatprep.subr.mxu0 0.0
      %1033 = vmatpush1.msra.mxu0 0.0
      %1034 = vmatprep.subr.mxu0 0.0
      %1035 = vmatpush1.msra.mxu0 0.0
      %1036 = vmatprep.subr.mxu0 0.0
      %1037 = vmatpush1.msra.mxu0 0.0
      %1038 = vmatprep.subr.mxu0 0.0
      %1039 = vmatpush1.msra.mxu0 0.0
      %1040 = vmatprep.mubr.f32.mxu0 0.0
      %1041 = vmatmul.mubr.f32.gmra.mrb[0].mxu0 %v783
      %v1042 = vpop.f32.mrb[0].mxu0
      %v1043 = vadd.f32 0.0, %v1042
      %v1044 = vpop.f32.mrb[0].mxu0
      %1045 = vmatprep.mubr.f32.mxu0 0.0
      %1046 = vmatmul.mubr.f32.gmra.mrb[0].mxu0 %v786
      %v1047 = vpop.f32.mrb[0].mxu0
      %v1048 = vadd.f32 0.0, %v1047
      %v1049 = vpop.f32.mrb[0].mxu0
      %1050 = vmatprep.mubr.f32.mxu0 0.0
      %1051 = vmatmul.mubr.f32.gmra.mrb[0].mxu0 %v789
      %v1052 = vpop.f32.mrb[0].mxu0
      %v1053 = vadd.f32 0.0, %v1052
      %v1054 = vpop.f32.mrb[0].mxu0
      %1055 = vmatprep.mubr.f32.mxu0 0.0
      %1056 = vmatmul.mubr.f32.gmra.mrb[0].mxu0 %v792
      %v1057 = vpop.f32.mrb[0].mxu0
      %v1058 = vadd.f32 0.0, %v1057
      %v1059 = vpop.f32.mrb[0].mxu0
      %1060 = vmatprep.mubr.f32.mxu0 0.0
      %1061 = vmatmul.mubr.f32.gmra.mrb[0].mxu0 %v795
      %v1062 = vpop.f32.mrb[0].mxu0
      %v1063 = vadd.f32 0.0, %v1062
      %v1064 = vpop.f32.mrb[0].mxu0
      %1065 = vmatprep.mubr.f32.mxu0 0.0
      %1066 = vmatmul.mubr.f32.gmra.mrb[0].mxu0 %v798
      %v1067 = vpop.f32.mrb[0].mxu0
      %v1068 = vadd.f32 0.0, %v1067
      %v1069 = vpop.f32.mrb[0].mxu0
      %1070 = vmatprep.mubr.f32.mxu0 0.0
      %1071 = vmatmul.mubr.f32.gmra.mrb[0].mxu0 %v801
      %v1072 = vpop.f32.mrb[0].mxu0
      %v1073 = vadd.f32 0.0, %v1072
      %v1074 = vpop.f32.mrb[0].mxu0
      %1075 = vmatprep.mubr.f32.mxu0 0.0
      %1076 = vmatmul.mubr.f32.gmra.mrb[0].mxu0 %v804
      %v1077 = vpop.f32.mrb[0].mxu0
      %v1078 = vadd.f32 0.0, %v1077
      %v1079 = vpop.f32.mrb[0].mxu0
      %1080 = vdwg.mxu0
      %v1081 = vlaneseq
      %v1082 = vshrl.u32 %v1081, 7
      %v1083 = vadd.s32 %v1082, 8
      %v1084 = vadd.s32 %v1082, 16
      %v1085 = vadd.s32 %v1082, 24
      %v1086 = vadd.s32 %v1082, 32
      %v1087 = vadd.s32 %v1082, 40
      %v1088 = vadd.s32 %v1082, 48
      %v1089 = vadd.s32 %v1082, 56
      %v1090 = vlaneseq
      %v1091 = vshrl.u32 %v1090, 7
      %v1092 = vsub.s32 3, %v1091
      %v1093 = vrot.slane %v964, %v1092
      %v1094 = vmul.f32 %v1043, %v1093
      %v1095 = vmul.f32 %v1048, %v1093
      %v1096 = vmul.f32 %v1053, %v1093
      %v1097 = vmul.f32 %v1058, %v1093
      %v1098 = vmul.f32 %v1063, %v1093
      %v1099 = vmul.f32 %v1068, %v1093
      %v1100 = vmul.f32 %v1073, %v1093
      %v1101 = vmul.f32 %v1078, %v1093
      %v1102 = vrot.slane %v1043, 7
      %v1103 = vrot.slane %v1048, 7
      %v1104 = vrot.slane %v1053, 7
      %v1105 = vrot.slane %v1058, 7
      %v1106 = vrot.slane %v1063, 7
      %v1107 = vrot.slane %v1068, 7
      %v1108 = vrot.slane %v1073, 7
      %v1109 = vrot.slane %v1078, 7
      %vm1110 = vcmp.lt.s32.totalorder %v1082, 1
      %v1111 = vsel %vm1110, %v1108, %v1109
      %v1112 = vsel %vm1110, %v1107, %v1108
      %v1113 = vsel %vm1110, %v1106, %v1107
      %v1114 = vsel %vm1110, %v1105, %v1106
      %v1115 = vsel %vm1110, %v1104, %v1105
      %v1116 = vsel %vm1110, %v1103, %v1104
      %v1117 = vsel %vm1110, %v1102, %v1103
      %v1118 = vsel %vm1110, %v1109, %v1102
      %vm1119 = vcmp.ge.s32.totalorder %v1082, 1
      %vm1120 = vcmp.ge.s32.totalorder %v1083, 1
      %vm1121 = vcmp.ge.s32.totalorder %v1084, 1
      %vm1122 = vcmp.ge.s32.totalorder %v1085, 1
      %vm1123 = vcmp.ge.s32.totalorder %v1086, 1
      %vm1124 = vcmp.ge.s32.totalorder %v1087, 1
      %vm1125 = vcmp.ge.s32.totalorder %v1088, 1
      %vm1126 = vcmp.ge.s32.totalorder %v1089, 1
      %v1127 = vsel %vm1119, %v1118, 0.0
      %v1128 = vsel %vm1120, %v1117, 0.0
      %v1129 = vsel %vm1121, %v1116, 0.0
      %v1130 = vsel %vm1122, %v1115, 0.0
      %v1131 = vsel %vm1123, %v1114, 0.0
      %v1132 = vsel %vm1124, %v1113, 0.0
      %v1133 = vsel %vm1125, %v1112, 0.0
      %v1134 = vsel %vm1126, %v1111, 0.0
      %v1135 = vlaneseq
      %v1136 = vshrl.u32 %v1135, 7
      %v1137 = vsub.s32 2, %v1136
      %v1138 = vrot.slane %v964, %v1137
      %v1139 = vmul.f32 %v1127, %v1138
      %v1140 = vmul.f32 %v1128, %v1138
      %v1141 = vmul.f32 %v1129, %v1138
      %v1142 = vmul.f32 %v1130, %v1138
      %v1143 = vmul.f32 %v1131, %v1138
      %v1144 = vmul.f32 %v1132, %v1138
      %v1145 = vmul.f32 %v1133, %v1138
      %v1146 = vmul.f32 %v1134, %v1138
      %v1147 = vadd.f32 %v1094, %v1139
      %v1148 = vadd.f32 %v1095, %v1140
      %v1149 = vadd.f32 %v1096, %v1141
      %v1150 = vadd.f32 %v1097, %v1142
      %v1151 = vadd.f32 %v1098, %v1143
      %v1152 = vadd.f32 %v1099, %v1144
      %v1153 = vadd.f32 %v1100, %v1145
      %v1154 = vadd.f32 %v1101, %v1146
      %v1155 = vrot.slane %v1043, 6
      %v1156 = vrot.slane %v1048, 6
      %v1157 = vrot.slane %v1053, 6
      %v1158 = vrot.slane %v1058, 6
      %v1159 = vrot.slane %v1063, 6
      %v1160 = vrot.slane %v1068, 6
      %v1161 = vrot.slane %v1073, 6
      %v1162 = vrot.slane %v1078, 6
      %vm1163 = vcmp.lt.s32.totalorder %v1082, 2
      %v1164 = vsel %vm1163, %v1161, %v1162
      %v1165 = vsel %vm1163, %v1160, %v1161
      %v1166 = vsel %vm1163, %v1159, %v1160
      %v1167 = vsel %vm1163, %v1158, %v1159
      %v1168 = vsel %vm1163, %v1157, %v1158
      %v1169 = vsel %vm1163, %v1156, %v1157
      %v1170 = vsel %vm1163, %v1155, %v1156
      %v1171 = vsel %vm1163, %v1162, %v1155
      %vm1172 = vcmp.ge.s32.totalorder %v1082, 2
      %vm1173 = vcmp.ge.s32.totalorder %v1083, 2
      %vm1174 = vcmp.ge.s32.totalorder %v1084, 2
      %vm1175 = vcmp.ge.s32.totalorder %v1085, 2
      %vm1176 = vcmp.ge.s32.totalorder %v1086, 2
      %vm1177 = vcmp.ge.s32.totalorder %v1087, 2
      %vm1178 = vcmp.ge.s32.totalorder %v1088, 2
      %vm1179 = vcmp.ge.s32.totalorder %v1089, 2
      %v1180 = vsel %vm1172, %v1171, 0.0
      %v1181 = vsel %vm1173, %v1170, 0.0
      %v1182 = vsel %vm1174, %v1169, 0.0
      %v1183 = vsel %vm1175, %v1168, 0.0
      %v1184 = vsel %vm1176, %v1167, 0.0
      %v1185 = vsel %vm1177, %v1166, 0.0
      %v1186 = vsel %vm1178, %v1165, 0.0
      %v1187 = vsel %vm1179, %v1164, 0.0
      %v1188 = vlaneseq
      %v1189 = vshrl.u32 %v1188, 7
      %v1190 = vsub.s32 1, %v1189
      %v1191 = vrot.slane %v964, %v1190
      %v1192 = vmul.f32 %v1180, %v1191
      %v1193 = vmul.f32 %v1181, %v1191
      %v1194 = vmul.f32 %v1182, %v1191
      %v1195 = vmul.f32 %v1183, %v1191
      %v1196 = vmul.f32 %v1184, %v1191
      %v1197 = vmul.f32 %v1185, %v1191
      %v1198 = vmul.f32 %v1186, %v1191
      %v1199 = vmul.f32 %v1187, %v1191
      %v1200 = vadd.f32 %v1147, %v1192
      %v1201 = vadd.f32 %v1148, %v1193
      %v1202 = vadd.f32 %v1149, %v1194
      %v1203 = vadd.f32 %v1150, %v1195
      %v1204 = vadd.f32 %v1151, %v1196
      %v1205 = vadd.f32 %v1152, %v1197
      %v1206 = vadd.f32 %v1153, %v1198
      %v1207 = vadd.f32 %v1154, %v1199
      %v1208 = vrot.slane %v1043, 5
      %v1209 = vrot.slane %v1048, 5
      %v1210 = vrot.slane %v1053, 5
      %v1211 = vrot.slane %v1058, 5
      %v1212 = vrot.slane %v1063, 5
      %v1213 = vrot.slane %v1068, 5
      %v1214 = vrot.slane %v1073, 5
      %v1215 = vrot.slane %v1078, 5
      %vm1216 = vcmp.lt.s32.totalorder %v1082, 3
      %v1217 = vsel %vm1216, %v1214, %v1215
      %v1218 = vsel %vm1216, %v1213, %v1214
      %v1219 = vsel %vm1216, %v1212, %v1213
      %v1220 = vsel %vm1216, %v1211, %v1212
      %v1221 = vsel %vm1216, %v1210, %v1211
      %v1222 = vsel %vm1216, %v1209, %v1210
      %v1223 = vsel %vm1216, %v1208, %v1209
      %v1224 = vsel %vm1216, %v1215, %v1208
      %vm1225 = vcmp.ge.s32.totalorder %v1082, 3
      %vm1226 = vcmp.ge.s32.totalorder %v1083, 3
      %vm1227 = vcmp.ge.s32.totalorder %v1084, 3
      %vm1228 = vcmp.ge.s32.totalorder %v1085, 3
      %vm1229 = vcmp.ge.s32.totalorder %v1086, 3
      %vm1230 = vcmp.ge.s32.totalorder %v1087, 3
      %vm1231 = vcmp.ge.s32.totalorder %v1088, 3
      %vm1232 = vcmp.ge.s32.totalorder %v1089, 3
      %v1233 = vsel %vm1225, %v1224, 0.0
      %v1234 = vsel %vm1226, %v1223, 0.0
      %v1235 = vsel %vm1227, %v1222, 0.0
      %v1236 = vsel %vm1228, %v1221, 0.0
      %v1237 = vsel %vm1229, %v1220, 0.0
      %v1238 = vsel %vm1230, %v1219, 0.0
      %v1239 = vsel %vm1231, %v1218, 0.0
      %v1240 = vsel %vm1232, %v1217, 0.0
      %v1241 = vlaneseq
      %v1242 = vshrl.u32 %v1241, 7
      %v1243 = vsub.s32 0, %v1242
      %v1244 = vrot.slane %v964, %v1243
      %v1245 = vmul.f32 %v1233, %v1244
      %v1246 = vmul.f32 %v1234, %v1244
      %v1247 = vmul.f32 %v1235, %v1244
      %v1248 = vmul.f32 %v1236, %v1244
      %v1249 = vmul.f32 %v1237, %v1244
      %v1250 = vmul.f32 %v1238, %v1244
      %v1251 = vmul.f32 %v1239, %v1244
      %v1252 = vmul.f32 %v1240, %v1244
      %v1253 = vadd.f32 %v1200, %v1245
      %v1254 = vadd.f32 %v1201, %v1246
      %v1255 = vadd.f32 %v1202, %v1247
      %v1256 = vadd.f32 %v1203, %v1248
      %v1257 = vadd.f32 %v1204, %v1249
      %v1258 = vadd.f32 %v1205, %v1250
      %v1259 = vadd.f32 %v1206, %v1251
      %v1260 = vadd.f32 %v1207, %v1252
      %v1262 = vlaneseq
      %v1263 = vshrl.u32 %v1262, 7
      %v1264 = vsub.s32 0, %v1263
      %v1265 = vrot.slane %v965, %v1264
      %v1267 = vadd.f32 %v1253, %v1265
      %v1268 = vadd.f32 %v1254, %v1265
      %v1269 = vadd.f32 %v1255, %v1265
      %v1270 = vadd.f32 %v1256, %v1265
      %v1271 = vadd.f32 %v1257, %v1265
      %v1272 = vadd.f32 %v1258, %v1265
      %v1273 = vadd.f32 %v1259, %v1265
      %v1274 = vadd.f32 %v1260, %v1265
      %v1275 = vsub.f32 0.0, %v1267
      %v1276 = vsub.f32 0.0, %v1268
      %v1277 = vsub.f32 0.0, %v1269
      %v1278 = vsub.f32 0.0, %v1270
      %v1279 = vsub.f32 0.0, %v1271
      %v1280 = vsub.f32 0.0, %v1272
      %v1281 = vsub.f32 0.0, %v1273
      %v1282 = vsub.f32 0.0, %v1274
      %v1283 = vmul.f32 %v1275, 1.442695
      %v1284 = vpow.pop %v1283
      %v1285 = vmul.f32 %v1276, 1.442695
      %v1286 = vpow.pop %v1285
      %v1287 = vmul.f32 %v1277, 1.442695
      %v1288 = vpow.pop %v1287
      %v1289 = vmul.f32 %v1278, 1.442695
      %v1290 = vpow.pop %v1289
      %v1291 = vmul.f32 %v1279, 1.442695
      %v1292 = vpow.pop %v1291
      %v1293 = vmul.f32 %v1280, 1.442695
      %v1294 = vpow.pop %v1293
      %v1295 = vmul.f32 %v1281, 1.442695
      %v1296 = vpow.pop %v1295
      %v1297 = vmul.f32 %v1282, 1.442695
      %v1298 = vpow.pop %v1297
      %v1299 = vadd.f32 %v1284, 1.0
      %v1300 = vadd.f32 %v1286, 1.0
      %v1301 = vadd.f32 %v1288, 1.0
      %v1302 = vadd.f32 %v1290, 1.0
      %v1303 = vadd.f32 %v1292, 1.0
      %v1304 = vadd.f32 %v1294, 1.0
      %v1305 = vadd.f32 %v1296, 1.0
      %v1306 = vadd.f32 %v1298, 1.0
      %v1307 = vrcp.pop %v1299
      %v1308 = vmul.f32 %v1267, %v1307
      %v1309 = vrcp.pop %v1300
      %v1310 = vmul.f32 %v1268, %v1309
      %v1311 = vrcp.pop %v1301
      %v1312 = vmul.f32 %v1269, %v1311
      %v1313 = vrcp.pop %v1302
      %v1314 = vmul.f32 %v1270, %v1313
      %v1315 = vrcp.pop %v1303
      %v1316 = vmul.f32 %v1271, %v1315
      %v1317 = vrcp.pop %v1304
      %v1318 = vmul.f32 %v1272, %v1317
      %v1319 = vrcp.pop %v1305
      %v1320 = vmul.f32 %v1273, %v1319
      %v1321 = vrcp.pop %v1306
      %v1322 = vmul.f32 %v1274, %v1321
      %v1324 = vsel %vm781, %v1308, 0
      %v1327 = vsel %vm781, %v1310, 0
      %v1330 = vsel %vm781, %v1312, 0
      %v1333 = vsel %vm781, %v1314, 0
      %v1336 = vsel %vm781, %v1316, 0
      %v1339 = vsel %vm781, %v1318, 0
      %v1342 = vsel %vm781, %v1320, 0
      %v1345 = vsel %vm781, %v1322, 0
      %v1348 = vsel %vm806, %v966, 0
      %1350 = vmatprep.subr.mxu0 0.0
      %1351 = vmatpush1.msra.mxu0 %v1348
      %1352 = vmatprep.subr.mxu0 0.0
      %1353 = vmatpush1.msra.mxu0 0.0
      %1354 = vmatprep.subr.mxu0 0.0
      %1355 = vmatpush1.msra.mxu0 0.0
      %1356 = vmatprep.subr.mxu0 0.0
      %1357 = vmatpush1.msra.mxu0 0.0
      %1358 = vmatprep.subr.mxu0 0.0
      %1359 = vmatpush1.msra.mxu0 0.0
      %1360 = vmatprep.subr.mxu0 0.0
      %1361 = vmatpush1.msra.mxu0 0.0
      %1362 = vmatprep.subr.mxu0 0.0
      %1363 = vmatpush1.msra.mxu0 0.0
      %1364 = vmatprep.subr.mxu0 0.0
      %1365 = vmatpush1.msra.mxu0 0.0
      %1366 = vmatprep.subr.mxu0 0.0
      %1367 = vmatpush1.msra.mxu0 0.0
      %1368 = vmatprep.subr.mxu0 0.0
      %1369 = vmatpush1.msra.mxu0 0.0
      %1370 = vmatprep.subr.mxu0 0.0
      %1371 = vmatpush1.msra.mxu0 0.0
      %1372 = vmatprep.subr.mxu0 0.0
      %1373 = vmatpush1.msra.mxu0 0.0
      %1374 = vmatprep.subr.mxu0 0.0
      %1375 = vmatpush1.msra.mxu0 0.0
      %1376 = vmatprep.subr.mxu0 0.0
      %1377 = vmatpush1.msra.mxu0 0.0
      %1378 = vmatprep.subr.mxu0 0.0
      %1379 = vmatpush1.msra.mxu0 0.0
      %1380 = vmatprep.subr.mxu0 0.0
      %1381 = vmatpush1.msra.mxu0 0.0
      %1382 = vmatprep.subr.mxu0 0.0
      %1383 = vmatpush1.msra.mxu0 0.0
      %1384 = vmatprep.subr.mxu0 0.0
      %1385 = vmatpush1.msra.mxu0 0.0
      %1386 = vmatprep.subr.mxu0 0.0
      %1387 = vmatpush1.msra.mxu0 0.0
      %1388 = vmatprep.subr.mxu0 0.0
      %1389 = vmatpush1.msra.mxu0 0.0
      %1390 = vmatprep.subr.mxu0 0.0
      %1391 = vmatpush1.msra.mxu0 0.0
      %1392 = vmatprep.subr.mxu0 0.0
      %1393 = vmatpush1.msra.mxu0 0.0
      %1394 = vmatprep.subr.mxu0 0.0
      %1395 = vmatpush1.msra.mxu0 0.0
      %1396 = vmatprep.subr.mxu0 0.0
      %1397 = vmatpush1.msra.mxu0 0.0
      %1398 = vmatprep.subr.mxu0 0.0
      %1399 = vmatpush1.msra.mxu0 0.0
      %1400 = vmatprep.subr.mxu0 0.0
      %1401 = vmatpush1.msra.mxu0 0.0
      %1402 = vmatprep.subr.mxu0 0.0
      %1403 = vmatpush1.msra.mxu0 0.0
      %1404 = vmatprep.subr.mxu0 0.0
      %1405 = vmatpush1.msra.mxu0 0.0
      %1406 = vmatprep.subr.mxu0 0.0
      %1407 = vmatpush1.msra.mxu0 0.0
      %1408 = vmatprep.subr.mxu0 0.0
      %1409 = vmatpush1.msra.mxu0 0.0
      %1410 = vmatprep.subr.mxu0 0.0
      %1411 = vmatpush1.msra.mxu0 0.0
      %1412 = vmatprep.subr.mxu0 0.0
      %1413 = vmatpush1.msra.mxu0 0.0
      %1414 = vmatprep.mubr.f32.mxu0 0.0
      %1415 = vmatmul.mubr.f32.gmra.mrb[0].mxu0 %v1324
      %v1416 = vpop.f32.mrb[0].mxu0
      %v1417 = vadd.f32 0.0, %v1416
      %v1418 = vpop.f32.mrb[0].mxu0
      %1419 = vmatprep.mubr.f32.mxu0 0.0
      %1420 = vmatmul.mubr.f32.gmra.mrb[0].mxu0 %v1327
      %v1421 = vpop.f32.mrb[0].mxu0
      %v1422 = vadd.f32 0.0, %v1421
      %v1423 = vpop.f32.mrb[0].mxu0
      %1424 = vmatprep.mubr.f32.mxu0 0.0
      %1425 = vmatmul.mubr.f32.gmra.mrb[0].mxu0 %v1330
      %v1426 = vpop.f32.mrb[0].mxu0
      %v1427 = vadd.f32 0.0, %v1426
      %v1428 = vpop.f32.mrb[0].mxu0
      %1429 = vmatprep.mubr.f32.mxu0 0.0
      %1430 = vmatmul.mubr.f32.gmra.mrb[0].mxu0 %v1333
      %v1431 = vpop.f32.mrb[0].mxu0
      %v1432 = vadd.f32 0.0, %v1431
      %v1433 = vpop.f32.mrb[0].mxu0
      %1434 = vmatprep.mubr.f32.mxu0 0.0
      %1435 = vmatmul.mubr.f32.gmra.mrb[0].mxu0 %v1336
      %v1436 = vpop.f32.mrb[0].mxu0
      %v1437 = vadd.f32 0.0, %v1436
      %v1438 = vpop.f32.mrb[0].mxu0
      %1439 = vmatprep.mubr.f32.mxu0 0.0
      %1440 = vmatmul.mubr.f32.gmra.mrb[0].mxu0 %v1339
      %v1441 = vpop.f32.mrb[0].mxu0
      %v1442 = vadd.f32 0.0, %v1441
      %v1443 = vpop.f32.mrb[0].mxu0
      %1444 = vmatprep.mubr.f32.mxu0 0.0
      %1445 = vmatmul.mubr.f32.gmra.mrb[0].mxu0 %v1342
      %v1446 = vpop.f32.mrb[0].mxu0
      %v1447 = vadd.f32 0.0, %v1446
      %v1448 = vpop.f32.mrb[0].mxu0
      %1449 = vmatprep.mubr.f32.mxu0 0.0
      %1450 = vmatmul.mubr.f32.gmra.mrb[0].mxu0 %v1345
      %v1451 = vpop.f32.mrb[0].mxu0
      %v1452 = vadd.f32 0.0, %v1451
      %v1453 = vpop.f32.mrb[0].mxu0
      %1454 = vdwg.mxu0
      %v1456 = vlaneseq
      %v1457 = vshrl.u32 %v1456, 7
      %v1458 = vsub.s32 0, %v1457
      %v1459 = vrot.slane %v967, %v1458
      %v1461 = vadd.f32 %v1417, %v1459
      %v1462 = vadd.f32 %v1422, %v1459
      %v1463 = vadd.f32 %v1427, %v1459
      %v1464 = vadd.f32 %v1432, %v1459
      %v1465 = vadd.f32 %v1437, %v1459
      %v1466 = vadd.f32 %v1442, %v1459
      %v1467 = vadd.f32 %v1447, %v1459
      %v1468 = vadd.f32 %v1452, %v1459
      %v1469 = vmax.f32 %v1461, 0.0
      %v1470 = vmax.f32 %v1462, 0.0
      %v1471 = vmax.f32 %v1463, 0.0
      %v1472 = vmax.f32 %v1464, 0.0
      %v1473 = vmax.f32 %v1465, 0.0
      %v1474 = vmax.f32 %v1466, 0.0
      %v1475 = vmax.f32 %v1467, 0.0
      %v1476 = vmax.f32 %v1468, 0.0
      %v1477 = vand.u32 2147483647, %v1461
      %v1478 = vand.u32 2147483647, %v1462
      %v1479 = vand.u32 2147483647, %v1463
      %v1480 = vand.u32 2147483647, %v1464
      %v1481 = vand.u32 2147483647, %v1465
      %v1482 = vand.u32 2147483647, %v1466
      %v1483 = vand.u32 2147483647, %v1467
      %v1484 = vand.u32 2147483647, %v1468
      %v1485 = vsub.f32 0.0, %v1477
      %v1486 = vsub.f32 0.0, %v1478
      %v1487 = vsub.f32 0.0, %v1479
      %v1488 = vsub.f32 0.0, %v1480
      %v1489 = vsub.f32 0.0, %v1481
      %v1490 = vsub.f32 0.0, %v1482
      %v1491 = vsub.f32 0.0, %v1483
      %v1492 = vsub.f32 0.0, %v1484
      %v1493 = vmul.f32 %v1485, 1.442695
      %v1494 = vpow.pop %v1493
      %v1495 = vmul.f32 %v1486, 1.442695
      %v1496 = vpow.pop %v1495
      %v1497 = vmul.f32 %v1487, 1.442695
      %v1498 = vpow.pop %v1497
      %v1499 = vmul.f32 %v1488, 1.442695
      %v1500 = vpow.pop %v1499
      %v1501 = vmul.f32 %v1489, 1.442695
      %v1502 = vpow.pop %v1501
      %v1503 = vmul.f32 %v1490, 1.442695
      %v1504 = vpow.pop %v1503
      %v1505 = vmul.f32 %v1491, 1.442695
      %v1506 = vpow.pop %v1505
      %v1507 = vmul.f32 %v1492, 1.442695
      %v1508 = vpow.pop %v1507
      %v1509 = vadd.f32 %v1494, 1.0
      %v1510 = vadd.f32 %v1496, 1.0
      %v1511 = vadd.f32 %v1498, 1.0
      %v1512 = vadd.f32 %v1500, 1.0
      %v1513 = vadd.f32 %v1502, 1.0
      %v1514 = vadd.f32 %v1504, 1.0
      %v1515 = vadd.f32 %v1506, 1.0
      %v1516 = vadd.f32 %v1508, 1.0
      %v1517 = vlog2.pop %v1509
      %v1518 = vmul.f32 %v1517, 0.6931472
      %v1519 = vlog2.pop %v1510
      %v1520 = vmul.f32 %v1519, 0.6931472
      %v1521 = vlog2.pop %v1511
      %v1522 = vmul.f32 %v1521, 0.6931472
      %v1523 = vlog2.pop %v1512
      %v1524 = vmul.f32 %v1523, 0.6931472
      %v1525 = vlog2.pop %v1513
      %v1526 = vmul.f32 %v1525, 0.6931472
      %v1527 = vlog2.pop %v1514
      %v1528 = vmul.f32 %v1527, 0.6931472
      %v1529 = vlog2.pop %v1515
      %v1530 = vmul.f32 %v1529, 0.6931472
      %v1531 = vlog2.pop %v1516
      %v1532 = vmul.f32 %v1531, 0.6931472
      %v1533 = vadd.f32 %v1469, %v1518
      %v1534 = vadd.f32 %v1470, %v1520
      %v1535 = vadd.f32 %v1471, %v1522
      %v1536 = vadd.f32 %v1472, %v1524
      %v1537 = vadd.f32 %v1473, %v1526
      %v1538 = vadd.f32 %v1474, %v1528
      %v1539 = vadd.f32 %v1475, %v1530
      %v1540 = vadd.f32 %v1476, %v1532
      %1549 = vrot.lane.b32.xlu0 %v1533, 4
      %v1550 = vpop.permute.xlu0 %1549
      %1551 = vrot.lane.b32.xlu0 %v1534, 4
      %v1552 = vpop.permute.xlu0 %1551
      %1553 = vrot.lane.b32.xlu0 %v1535, 4
      %v1554 = vpop.permute.xlu0 %1553
      %1555 = vrot.lane.b32.xlu0 %v1536, 4
      %v1556 = vpop.permute.xlu0 %1555
      %1557 = vrot.lane.b32.xlu0 %v1537, 4
      %v1558 = vpop.permute.xlu0 %1557
      %1559 = vrot.lane.b32.xlu0 %v1538, 4
      %v1560 = vpop.permute.xlu0 %1559
      %1561 = vrot.lane.b32.xlu0 %v1539, 4
      %v1562 = vpop.permute.xlu0 %1561
      %1563 = vrot.lane.b32.xlu0 %v1540, 4
      %v1564 = vpop.permute.xlu0 %1563
      %v1573 = vsel %vm781, %v1533, %v1550
      %v1574 = vsel %vm781, %v1534, %v1552
      %v1575 = vsel %vm781, %v1535, %v1554
      %v1576 = vsel %vm781, %v1536, %v1556
      %v1577 = vsel %vm781, %v1537, %v1558
      %v1578 = vsel %vm781, %v1538, %v1560
      %v1579 = vsel %vm781, %v1539, %v1562
      %v1580 = vsel %vm781, %v1540, %v1564
      %v1582 = vlaneseq
      %v1583 = vshrl.u32 %v1582, 7
      %v1584 = vsub.s32 0, %v1583
      %v1585 = vrot.slane %v968, %v1584
      %v1587 = vmul.f32 %v1573, %v1585
      %v1588 = vmul.f32 %v1574, %v1585
      %v1589 = vmul.f32 %v1575, %v1585
      %v1590 = vmul.f32 %v1576, %v1585
      %v1591 = vmul.f32 %v1577, %v1585
      %v1592 = vmul.f32 %v1578, %v1585
      %v1593 = vmul.f32 %v1579, %v1585
      %v1594 = vmul.f32 %v1580, %v1585
      %v1595 = vmul.f32 %v1587, 1.442695
      %v1596 = vpow.pop %v1595
      %v1597 = vmul.f32 %v1588, 1.442695
      %v1598 = vpow.pop %v1597
      %v1599 = vmul.f32 %v1589, 1.442695
      %v1600 = vpow.pop %v1599
      %v1601 = vmul.f32 %v1590, 1.442695
      %v1602 = vpow.pop %v1601
      %v1603 = vmul.f32 %v1591, 1.442695
      %v1604 = vpow.pop %v1603
      %v1605 = vmul.f32 %v1592, 1.442695
      %v1606 = vpow.pop %v1605
      %v1607 = vmul.f32 %v1593, 1.442695
      %v1608 = vpow.pop %v1607
      %v1609 = vmul.f32 %v1594, 1.442695
      %v1610 = vpow.pop %v1609
      %v1611 = vmul.f32 %v1533, %v1308
      %v1612 = vmul.f32 %v1534, %v1310
      %v1613 = vmul.f32 %v1535, %v1312
      %v1614 = vmul.f32 %v1536, %v1314
      %v1615 = vmul.f32 %v1537, %v1316
      %v1616 = vmul.f32 %v1538, %v1318
      %v1617 = vmul.f32 %v1539, %v1320
      %v1618 = vmul.f32 %v1540, %v1322
      %1620 = vset.pattern.permute.xlu0 4
      %1621 = vperm.xlu0 %1620, %v1417
      %v1622 = vpop.permute.xlu0 %1621
      %1625 = vset.pattern.permute.xlu0 4
      %1626 = vperm.xlu0 %1625, %v1422
      %v1627 = vpop.permute.xlu0 %1626
      %1630 = vset.pattern.permute.xlu0 4
      %1631 = vperm.xlu0 %1630, %v1427
      %v1632 = vpop.permute.xlu0 %1631
      %1635 = vset.pattern.permute.xlu0 4
      %1636 = vperm.xlu0 %1635, %v1432
      %v1637 = vpop.permute.xlu0 %1636
      %1640 = vset.pattern.permute.xlu0 4
      %1641 = vperm.xlu0 %1640, %v1437
      %v1642 = vpop.permute.xlu0 %1641
      %1645 = vset.pattern.permute.xlu0 4
      %1646 = vperm.xlu0 %1645, %v1442
      %v1647 = vpop.permute.xlu0 %1646
      %1650 = vset.pattern.permute.xlu0 4
      %1651 = vperm.xlu0 %1650, %v1447
      %v1652 = vpop.permute.xlu0 %1651
      %1655 = vset.pattern.permute.xlu0 4
      %1656 = vperm.xlu0 %1655, %v1452
      %v1657 = vpop.permute.xlu0 %1656
      %v1659 = vmul.f32 %v1611, %v1622
      %v1660 = vmul.f32 %v1612, %v1627
      %v1661 = vmul.f32 %v1613, %v1632
      %v1662 = vmul.f32 %v1614, %v1637
      %v1663 = vmul.f32 %v1615, %v1642
      %v1664 = vmul.f32 %v1616, %v1647
      %v1665 = vmul.f32 %v1617, %v1652
      %v1666 = vmul.f32 %v1618, %v1657
      %1667 = vset.pattern.permute.xlu0 5
      %1668 = vperm.xlu0 %1667, %v1417
      %v1669 = vpop.permute.xlu0 %1668
      %1671 = vset.pattern.permute.xlu0 5
      %1672 = vperm.xlu0 %1671, %v1422
      %v1673 = vpop.permute.xlu0 %1672
      %1675 = vset.pattern.permute.xlu0 5
      %1676 = vperm.xlu0 %1675, %v1427
      %v1677 = vpop.permute.xlu0 %1676
      %1679 = vset.pattern.permute.xlu0 5
      %1680 = vperm.xlu0 %1679, %v1432
      %v1681 = vpop.permute.xlu0 %1680
      %1683 = vset.pattern.permute.xlu0 5
      %1684 = vperm.xlu0 %1683, %v1437
      %v1685 = vpop.permute.xlu0 %1684
      %1687 = vset.pattern.permute.xlu0 5
      %1688 = vperm.xlu0 %1687, %v1442
      %v1689 = vpop.permute.xlu0 %1688
      %1691 = vset.pattern.permute.xlu0 5
      %1692 = vperm.xlu0 %1691, %v1447
      %v1693 = vpop.permute.xlu0 %1692
      %1695 = vset.pattern.permute.xlu0 5
      %1696 = vperm.xlu0 %1695, %v1452
      %v1697 = vpop.permute.xlu0 %1696
      %v1699 = vmul.f32 %v1611, %v1669
      %v1700 = vmul.f32 %v1612, %v1673
      %v1701 = vmul.f32 %v1613, %v1677
      %v1702 = vmul.f32 %v1614, %v1681
      %v1703 = vmul.f32 %v1615, %v1685
      %v1704 = vmul.f32 %v1616, %v1689
      %v1705 = vmul.f32 %v1617, %v1693
      %v1706 = vmul.f32 %v1618, %v1697
      %1715 = vrot.lane.b32.xlu0 %v1699, 4
      %v1716 = vpop.permute.xlu0 %1715
      %1717 = vrot.lane.b32.xlu0 %v1700, 4
      %v1718 = vpop.permute.xlu0 %1717
      %1719 = vrot.lane.b32.xlu0 %v1701, 4
      %v1720 = vpop.permute.xlu0 %1719
      %1721 = vrot.lane.b32.xlu0 %v1702, 4
      %v1722 = vpop.permute.xlu0 %1721
      %1723 = vrot.lane.b32.xlu0 %v1703, 4
      %v1724 = vpop.permute.xlu0 %1723
      %1725 = vrot.lane.b32.xlu0 %v1704, 4
      %v1726 = vpop.permute.xlu0 %1725
      %1727 = vrot.lane.b32.xlu0 %v1705, 4
      %v1728 = vpop.permute.xlu0 %1727
      %1729 = vrot.lane.b32.xlu0 %v1706, 4
      %v1730 = vpop.permute.xlu0 %1729
      %v1739 = vsel %vm781, %v1659, %v1716
      %v1740 = vsel %vm781, %v1660, %v1718
      %v1741 = vsel %vm781, %v1661, %v1720
      %v1742 = vsel %vm781, %v1662, %v1722
      %v1743 = vsel %vm781, %v1663, %v1724
      %v1744 = vsel %vm781, %v1664, %v1726
      %v1745 = vsel %vm781, %v1665, %v1728
      %v1746 = vsel %vm781, %v1666, %v1730
      %v1747 = vrot.slane %v1596, 7
      %v1748 = vrot.slane %v1598, 7
      %v1749 = vrot.slane %v1600, 7
      %v1750 = vrot.slane %v1602, 7
      %v1751 = vrot.slane %v1604, 7
      %v1752 = vrot.slane %v1606, 7
      %v1753 = vrot.slane %v1608, 7
      %v1754 = vrot.slane %v1610, 7
      %v1755 = vsel %vm1110, %v1753, %v1754
      %v1756 = vsel %vm1110, %v1752, %v1753
      %v1757 = vsel %vm1110, %v1751, %v1752
      %v1758 = vsel %vm1110, %v1750, %v1751
      %v1759 = vsel %vm1110, %v1749, %v1750
      %v1760 = vsel %vm1110, %v1748, %v1749
      %v1761 = vsel %vm1110, %v1747, %v1748
      %v1762 = vsel %vm1110, %v1754, %v1747
      %v1763 = vsel %vm1119, %v1762, 1.0
      %v1764 = vsel %vm1120, %v1761, 1.0
      %v1765 = vsel %vm1121, %v1760, 1.0
      %v1766 = vsel %vm1122, %v1759, 1.0
      %v1767 = vsel %vm1123, %v1758, 1.0
      %v1768 = vsel %vm1124, %v1757, 1.0
      %v1769 = vsel %vm1125, %v1756, 1.0
      %v1770 = vsel %vm1126, %v1755, 1.0
      %v1771 = vrot.slane %v1739, 7
      %v1772 = vrot.slane %v1740, 7
      %v1773 = vrot.slane %v1741, 7
      %v1774 = vrot.slane %v1742, 7
      %v1775 = vrot.slane %v1743, 7
      %v1776 = vrot.slane %v1744, 7
      %v1777 = vrot.slane %v1745, 7
      %v1778 = vrot.slane %v1746, 7
      %v1779 = vsel %vm1110, %v1777, %v1778
      %v1780 = vsel %vm1110, %v1776, %v1777
      %v1781 = vsel %vm1110, %v1775, %v1776
      %v1782 = vsel %vm1110, %v1774, %v1775
      %v1783 = vsel %vm1110, %v1773, %v1774
      %v1784 = vsel %vm1110, %v1772, %v1773
      %v1785 = vsel %vm1110, %v1771, %v1772
      %v1786 = vsel %vm1110, %v1778, %v1771
      %v1787 = vsel %vm1119, %v1786, 0.0
      %v1788 = vsel %vm1120, %v1785, 0.0
      %v1789 = vsel %vm1121, %v1784, 0.0
      %v1790 = vsel %vm1122, %v1783, 0.0
      %v1791 = vsel %vm1123, %v1782, 0.0
      %v1792 = vsel %vm1124, %v1781, 0.0
      %v1793 = vsel %vm1125, %v1780, 0.0
      %v1794 = vsel %vm1126, %v1779, 0.0
      %v1795 = vmul.f32 %v1596, %v1787
      %v1796 = vmul.f32 %v1598, %v1788
      %v1797 = vmul.f32 %v1600, %v1789
      %v1798 = vmul.f32 %v1602, %v1790
      %v1799 = vmul.f32 %v1604, %v1791
      %v1800 = vmul.f32 %v1606, %v1792
      %v1801 = vmul.f32 %v1608, %v1793
      %v1802 = vmul.f32 %v1610, %v1794
      %v1803 = vadd.f32 %v1795, %v1739
      %v1804 = vadd.f32 %v1796, %v1740
      %v1805 = vadd.f32 %v1797, %v1741
      %v1806 = vadd.f32 %v1798, %v1742
      %v1807 = vadd.f32 %v1799, %v1743
      %v1808 = vadd.f32 %v1800, %v1744
      %v1809 = vadd.f32 %v1801, %v1745
      %v1810 = vadd.f32 %v1802, %v1746
      %v1811 = vmul.f32 %v1596, %v1763
      %v1812 = vmul.f32 %v1598, %v1764
      %v1813 = vmul.f32 %v1600, %v1765
      %v1814 = vmul.f32 %v1602, %v1766
      %v1815 = vmul.f32 %v1604, %v1767
      %v1816 = vmul.f32 %v1606, %v1768
      %v1817 = vmul.f32 %v1608, %v1769
      %v1818 = vmul.f32 %v1610, %v1770
      %v1819 = vrot.slane %v1811, 6
      %v1820 = vrot.slane %v1812, 6
      %v1821 = vrot.slane %v1813, 6
      %v1822 = vrot.slane %v1814, 6
      %v1823 = vrot.slane %v1815, 6
      %v1824 = vrot.slane %v1816, 6
      %v1825 = vrot.slane %v1817, 6
      %v1826 = vrot.slane %v1818, 6
      %v1827 = vsel %vm1163, %v1825, %v1826
      %v1828 = vsel %vm1163, %v1824, %v1825
      %v1829 = vsel %vm1163, %v1823, %v1824
      %v1830 = vsel %vm1163, %v1822, %v1823
      %v1831 = vsel %vm1163, %v1821, %v1822
      %v1832 = vsel %vm1163, %v1820, %v1821
      %v1833 = vsel %vm1163, %v1819, %v1820
      %v1834 = vsel %vm1163, %v1826, %v1819
      %v1835 = vsel %vm1172, %v1834, 1.0
      %v1836 = vsel %vm1173, %v1833, 1.0
      %v1837 = vsel %vm1174, %v1832, 1.0
      %v1838 = vsel %vm1175, %v1831, 1.0
      %v1839 = vsel %vm1176, %v1830, 1.0
      %v1840 = vsel %vm1177, %v1829, 1.0
      %v1841 = vsel %vm1178, %v1828, 1.0
      %v1842 = vsel %vm1179, %v1827, 1.0
      %v1843 = vrot.slane %v1803, 6
      %v1844 = vrot.slane %v1804, 6
      %v1845 = vrot.slane %v1805, 6
      %v1846 = vrot.slane %v1806, 6
      %v1847 = vrot.slane %v1807, 6
      %v1848 = vrot.slane %v1808, 6
      %v1849 = vrot.slane %v1809, 6
      %v1850 = vrot.slane %v1810, 6
      %v1851 = vsel %vm1163, %v1849, %v1850
      %v1852 = vsel %vm1163, %v1848, %v1849
      %v1853 = vsel %vm1163, %v1847, %v1848
      %v1854 = vsel %vm1163, %v1846, %v1847
      %v1855 = vsel %vm1163, %v1845, %v1846
      %v1856 = vsel %vm1163, %v1844, %v1845
      %v1857 = vsel %vm1163, %v1843, %v1844
      %v1858 = vsel %vm1163, %v1850, %v1843
      %v1859 = vsel %vm1172, %v1858, 0.0
      %v1860 = vsel %vm1173, %v1857, 0.0
      %v1861 = vsel %vm1174, %v1856, 0.0
      %v1862 = vsel %vm1175, %v1855, 0.0
      %v1863 = vsel %vm1176, %v1854, 0.0
      %v1864 = vsel %vm1177, %v1853, 0.0
      %v1865 = vsel %vm1178, %v1852, 0.0
      %v1866 = vsel %vm1179, %v1851, 0.0
      %v1867 = vmul.f32 %v1811, %v1859
      %v1868 = vmul.f32 %v1812, %v1860
      %v1869 = vmul.f32 %v1813, %v1861
      %v1870 = vmul.f32 %v1814, %v1862
      %v1871 = vmul.f32 %v1815, %v1863
      %v1872 = vmul.f32 %v1816, %v1864
      %v1873 = vmul.f32 %v1817, %v1865
      %v1874 = vmul.f32 %v1818, %v1866
      %v1875 = vadd.f32 %v1867, %v1803
      %v1876 = vadd.f32 %v1868, %v1804
      %v1877 = vadd.f32 %v1869, %v1805
      %v1878 = vadd.f32 %v1870, %v1806
      %v1879 = vadd.f32 %v1871, %v1807
      %v1880 = vadd.f32 %v1872, %v1808
      %v1881 = vadd.f32 %v1873, %v1809
      %v1882 = vadd.f32 %v1874, %v1810
      %v1883 = vmul.f32 %v1811, %v1835
      %v1884 = vmul.f32 %v1812, %v1836
      %v1885 = vmul.f32 %v1813, %v1837
      %v1886 = vmul.f32 %v1814, %v1838
      %v1887 = vmul.f32 %v1815, %v1839
      %v1888 = vmul.f32 %v1816, %v1840
      %v1889 = vmul.f32 %v1817, %v1841
      %v1890 = vmul.f32 %v1818, %v1842
      %vm1891 = vcmp.ge.s32.totalorder %v1082, 4
      %vm1892 = vcmp.ge.s32.totalorder %v1083, 4
      %vm1893 = vcmp.ge.s32.totalorder %v1084, 4
      %vm1894 = vcmp.ge.s32.totalorder %v1085, 4
      %vm1895 = vcmp.ge.s32.totalorder %v1086, 4
      %vm1896 = vcmp.ge.s32.totalorder %v1087, 4
      %vm1897 = vcmp.ge.s32.totalorder %v1088, 4
      %vm1898 = vcmp.ge.s32.totalorder %v1089, 4
      %v1899 = vrot.slane %v1883, 4
      %v1900 = vrot.slane %v1884, 4
      %v1901 = vrot.slane %v1885, 4
      %v1902 = vrot.slane %v1886, 4
      %v1903 = vrot.slane %v1887, 4
      %v1904 = vrot.slane %v1888, 4
      %v1905 = vrot.slane %v1889, 4
      %v1906 = vrot.slane %v1890, 4
      %vm1907 = vcmp.lt.s32.totalorder %v1082, 4
      %v1908 = vsel %vm1907, %v1905, %v1906
      %v1909 = vsel %vm1907, %v1904, %v1905
      %v1910 = vsel %vm1907, %v1903, %v1904
      %v1911 = vsel %vm1907, %v1902, %v1903
      %v1912 = vsel %vm1907, %v1901, %v1902
      %v1913 = vsel %vm1907, %v1900, %v1901
      %v1914 = vsel %vm1907, %v1899, %v1900
      %v1915 = vsel %vm1907, %v1906, %v1899
      %v1916 = vsel %vm1891, %v1915, 1.0
      %v1917 = vsel %vm1892, %v1914, 1.0
      %v1918 = vsel %vm1893, %v1913, 1.0
      %v1919 = vsel %vm1894, %v1912, 1.0
      %v1920 = vsel %vm1895, %v1911, 1.0
      %v1921 = vsel %vm1896, %v1910, 1.0
      %v1922 = vsel %vm1897, %v1909, 1.0
      %v1923 = vsel %vm1898, %v1908, 1.0
      %v1924 = vrot.slane %v1875, 4
      %v1925 = vrot.slane %v1876, 4
      %v1926 = vrot.slane %v1877, 4
      %v1927 = vrot.slane %v1878, 4
      %v1928 = vrot.slane %v1879, 4
      %v1929 = vrot.slane %v1880, 4
      %v1930 = vrot.slane %v1881, 4
      %v1931 = vrot.slane %v1882, 4
      %v1932 = vsel %vm1907, %v1930, %v1931
      %v1933 = vsel %vm1907, %v1929, %v1930
      %v1934 = vsel %vm1907, %v1928, %v1929
      %v1935 = vsel %vm1907, %v1927, %v1928
      %v1936 = vsel %vm1907, %v1926, %v1927
      %v1937 = vsel %vm1907, %v1925, %v1926
      %v1938 = vsel %vm1907, %v1924, %v1925
      %v1939 = vsel %vm1907, %v1931, %v1924
      %v1940 = vsel %vm1891, %v1939, 0.0
      %v1941 = vsel %vm1892, %v1938, 0.0
      %v1942 = vsel %vm1893, %v1937, 0.0
      %v1943 = vsel %vm1894, %v1936, 0.0
      %v1944 = vsel %vm1895, %v1935, 0.0
      %v1945 = vsel %vm1896, %v1934, 0.0
      %v1946 = vsel %vm1897, %v1933, 0.0
      %v1947 = vsel %vm1898, %v1932, 0.0
      %v1948 = vmul.f32 %v1883, %v1940
      %v1949 = vmul.f32 %v1884, %v1941
      %v1950 = vmul.f32 %v1885, %v1942
      %v1951 = vmul.f32 %v1886, %v1943
      %v1952 = vmul.f32 %v1887, %v1944
      %v1953 = vmul.f32 %v1888, %v1945
      %v1954 = vmul.f32 %v1889, %v1946
      %v1955 = vmul.f32 %v1890, %v1947
      %v1956 = vadd.f32 %v1948, %v1875
      %v1957 = vadd.f32 %v1949, %v1876
      %v1958 = vadd.f32 %v1950, %v1877
      %v1959 = vadd.f32 %v1951, %v1878
      %v1960 = vadd.f32 %v1952, %v1879
      %v1961 = vadd.f32 %v1953, %v1880
      %v1962 = vadd.f32 %v1954, %v1881
      %v1963 = vadd.f32 %v1955, %v1882
      %v1964 = vmul.f32 %v1883, %v1916
      %v1965 = vmul.f32 %v1884, %v1917
      %v1966 = vmul.f32 %v1885, %v1918
      %v1967 = vmul.f32 %v1886, %v1919
      %v1968 = vmul.f32 %v1887, %v1920
      %v1969 = vmul.f32 %v1888, %v1921
      %v1970 = vmul.f32 %v1889, %v1922
      %v1971 = vmul.f32 %v1890, %v1923
      %vm1972 = vcmp.ge.s32.totalorder %v1082, 8
      %vm1973 = vcmp.ge.s32.totalorder %v1083, 8
      %vm1974 = vcmp.ge.s32.totalorder %v1084, 8
      %vm1975 = vcmp.ge.s32.totalorder %v1085, 8
      %vm1976 = vcmp.ge.s32.totalorder %v1086, 8
      %vm1977 = vcmp.ge.s32.totalorder %v1087, 8
      %vm1978 = vcmp.ge.s32.totalorder %v1088, 8
      %vm1979 = vcmp.ge.s32.totalorder %v1089, 8
      %v1980 = vsel %vm1972, %v1971, 1.0
      %v1981 = vsel %vm1973, %v1964, 1.0
      %v1982 = vsel %vm1974, %v1965, 1.0
      %v1983 = vsel %vm1975, %v1966, 1.0
      %v1984 = vsel %vm1976, %v1967, 1.0
      %v1985 = vsel %vm1977, %v1968, 1.0
      %v1986 = vsel %vm1978, %v1969, 1.0
      %v1987 = vsel %vm1979, %v1970, 1.0
      %v1988 = vsel %vm1972, %v1963, 0.0
      %v1989 = vsel %vm1973, %v1956, 0.0
      %v1990 = vsel %vm1974, %v1957, 0.0
      %v1991 = vsel %vm1975, %v1958, 0.0
      %v1992 = vsel %vm1976, %v1959, 0.0
      %v1993 = vsel %vm1977, %v1960, 0.0
      %v1994 = vsel %vm1978, %v1961, 0.0
      %v1995 = vsel %vm1979, %v1962, 0.0
      %v1996 = vmul.f32 %v1964, %v1988
      %v1997 = vmul.f32 %v1965, %v1989
      %v1998 = vmul.f32 %v1966, %v1990
      %v1999 = vmul.f32 %v1967, %v1991
      %v2000 = vmul.f32 %v1968, %v1992
      %v2001 = vmul.f32 %v1969, %v1993
      %v2002 = vmul.f32 %v1970, %v1994
      %v2003 = vmul.f32 %v1971, %v1995
      %v2004 = vadd.f32 %v1996, %v1956
      %v2005 = vadd.f32 %v1997, %v1957
      %v2006 = vadd.f32 %v1998, %v1958
      %v2007 = vadd.f32 %v1999, %v1959
      %v2008 = vadd.f32 %v2000, %v1960
      %v2009 = vadd.f32 %v2001, %v1961
      %v2010 = vadd.f32 %v2002, %v1962
      %v2011 = vadd.f32 %v2003, %v1963
      %v2012 = vmul.f32 %v1964, %v1980
      %v2013 = vmul.f32 %v1965, %v1981
      %v2014 = vmul.f32 %v1966, %v1982
      %v2015 = vmul.f32 %v1967, %v1983
      %v2016 = vmul.f32 %v1968, %v1984
      %v2017 = vmul.f32 %v1969, %v1985
      %v2018 = vmul.f32 %v1970, %v1986
      %v2019 = vmul.f32 %v1971, %v1987
      %vm2020 = vcmp.ge.s32.totalorder %v1082, 16
      %vm2021 = vcmp.ge.s32.totalorder %v1083, 16
      %vm2022 = vcmp.ge.s32.totalorder %v1084, 16
      %vm2023 = vcmp.ge.s32.totalorder %v1085, 16
      %vm2024 = vcmp.ge.s32.totalorder %v1086, 16
      %vm2025 = vcmp.ge.s32.totalorder %v1087, 16
      %vm2026 = vcmp.ge.s32.totalorder %v1088, 16
      %vm2027 = vcmp.ge.s32.totalorder %v1089, 16
      %v2028 = vsel %vm2020, %v2018, 1.0
      %v2029 = vsel %vm2021, %v2019, 1.0
      %v2030 = vsel %vm2022, %v2012, 1.0
      %v2031 = vsel %vm2023, %v2013, 1.0
      %v2032 = vsel %vm2024, %v2014, 1.0
      %v2033 = vsel %vm2025, %v2015, 1.0
      %v2034 = vsel %vm2026, %v2016, 1.0
      %v2035 = vsel %vm2027, %v2017, 1.0
      %v2036 = vsel %vm2020, %v2010, 0.0
      %v2037 = vsel %vm2021, %v2011, 0.0
      %v2038 = vsel %vm2022, %v2004, 0.0
      %v2039 = vsel %vm2023, %v2005, 0.0
      %v2040 = vsel %vm2024, %v2006, 0.0
      %v2041 = vsel %vm2025, %v2007, 0.0
      %v2042 = vsel %vm2026, %v2008, 0.0
      %v2043 = vsel %vm2027, %v2009, 0.0
      %v2044 = vmul.f32 %v2012, %v2036
      %v2045 = vmul.f32 %v2013, %v2037
      %v2046 = vmul.f32 %v2014, %v2038
      %v2047 = vmul.f32 %v2015, %v2039
      %v2048 = vmul.f32 %v2016, %v2040
      %v2049 = vmul.f32 %v2017, %v2041
      %v2050 = vmul.f32 %v2018, %v2042
      %v2051 = vmul.f32 %v2019, %v2043
      %v2052 = vadd.f32 %v2044, %v2004
      %v2053 = vadd.f32 %v2045, %v2005
      %v2054 = vadd.f32 %v2046, %v2006
      %v2055 = vadd.f32 %v2047, %v2007
      %v2056 = vadd.f32 %v2048, %v2008
      %v2057 = vadd.f32 %v2049, %v2009
      %v2058 = vadd.f32 %v2050, %v2010
      %v2059 = vadd.f32 %v2051, %v2011
      %v2060 = vmul.f32 %v2012, %v2028
      %v2061 = vmul.f32 %v2013, %v2029
      %v2062 = vmul.f32 %v2014, %v2030
      %v2063 = vmul.f32 %v2015, %v2031
      %v2064 = vmul.f32 %v2016, %v2032
      %v2065 = vmul.f32 %v2017, %v2033
      %v2066 = vmul.f32 %v2018, %v2034
      %v2067 = vmul.f32 %v2019, %v2035
      %vm2068 = vcmp.ge.s32.totalorder %v1082, 32
      %vm2069 = vcmp.ge.s32.totalorder %v1083, 32
      %vm2070 = vcmp.ge.s32.totalorder %v1084, 32
      %vm2071 = vcmp.ge.s32.totalorder %v1085, 32
      %vm2072 = vcmp.ge.s32.totalorder %v1086, 32
      %vm2073 = vcmp.ge.s32.totalorder %v1087, 32
      %vm2074 = vcmp.ge.s32.totalorder %v1088, 32
      %vm2075 = vcmp.ge.s32.totalorder %v1089, 32
      %v2076 = vsel %vm2068, %v2056, 0.0
      %v2077 = vsel %vm2069, %v2057, 0.0
      %v2078 = vsel %vm2070, %v2058, 0.0
      %v2079 = vsel %vm2071, %v2059, 0.0
      %v2080 = vsel %vm2072, %v2052, 0.0
      %v2081 = vsel %vm2073, %v2053, 0.0
      %v2082 = vsel %vm2074, %v2054, 0.0
      %v2083 = vsel %vm2075, %v2055, 0.0
      %v2084 = vmul.f32 %v2060, %v2076
      %v2085 = vmul.f32 %v2061, %v2077
      %v2086 = vmul.f32 %v2062, %v2078
      %v2087 = vmul.f32 %v2063, %v2079
      %v2088 = vmul.f32 %v2064, %v2080
      %v2089 = vmul.f32 %v2065, %v2081
      %v2090 = vmul.f32 %v2066, %v2082
      %v2091 = vmul.f32 %v2067, %v2083
      %v2092 = vadd.f32 %v2084, %v2052
      %v2093 = vadd.f32 %v2085, %v2053
      %v2094 = vadd.f32 %v2086, %v2054
      %v2095 = vadd.f32 %v2087, %v2055
      %v2096 = vadd.f32 %v2088, %v2056
      %v2097 = vadd.f32 %v2089, %v2057
      %v2098 = vadd.f32 %v2090, %v2058
      %v2099 = vadd.f32 %v2091, %v2059
      %v2101 = vlaneseq
      %v2102 = vshrl.u32 %v2101, 7
      %v2103 = vsub.s32 0, %v2102
      %v2104 = vrot.slane %v969, %v2103
      %v2106 = vmul.f32 %v1308, %v2104
      %v2107 = vmul.f32 %v1310, %v2104
      %v2108 = vmul.f32 %v1312, %v2104
      %v2109 = vmul.f32 %v1314, %v2104
      %v2110 = vmul.f32 %v1316, %v2104
      %v2111 = vmul.f32 %v1318, %v2104
      %v2112 = vmul.f32 %v1320, %v2104
      %v2113 = vmul.f32 %v1322, %v2104
      %2114 = vset.pattern.permute.xlu0 6
      %2115 = vperm.xlu0 %2114, %v1417
      %v2116 = vpop.permute.xlu0 %2115
      %2118 = vset.pattern.permute.xlu0 6
      %2119 = vperm.xlu0 %2118, %v1422
      %v2120 = vpop.permute.xlu0 %2119
      %2122 = vset.pattern.permute.xlu0 6
      %2123 = vperm.xlu0 %2122, %v1427
      %v2124 = vpop.permute.xlu0 %2123
      %2126 = vset.pattern.permute.xlu0 6
      %2127 = vperm.xlu0 %2126, %v1432
      %v2128 = vpop.permute.xlu0 %2127
      %2130 = vset.pattern.permute.xlu0 6
      %2131 = vperm.xlu0 %2130, %v1437
      %v2132 = vpop.permute.xlu0 %2131
      %2134 = vset.pattern.permute.xlu0 6
      %2135 = vperm.xlu0 %2134, %v1442
      %v2136 = vpop.permute.xlu0 %2135
      %2138 = vset.pattern.permute.xlu0 6
      %2139 = vperm.xlu0 %2138, %v1447
      %v2140 = vpop.permute.xlu0 %2139
      %2142 = vset.pattern.permute.xlu0 6
      %2143 = vperm.xlu0 %2142, %v1452
      %v2144 = vpop.permute.xlu0 %2143
      %v2146 = vmul.f32 %v2116, %v2092
      %v2147 = vmul.f32 %v2120, %v2093
      %v2148 = vmul.f32 %v2124, %v2094
      %v2149 = vmul.f32 %v2128, %v2095
      %v2150 = vmul.f32 %v2132, %v2096
      %v2151 = vmul.f32 %v2136, %v2097
      %v2152 = vmul.f32 %v2140, %v2098
      %v2153 = vmul.f32 %v2144, %v2099
      %v2154 = vadd.f32 %v2106, %v2146
      %v2155 = vadd.f32 %v2107, %v2147
      %v2156 = vadd.f32 %v2108, %v2148
      %v2157 = vadd.f32 %v2109, %v2149
      %v2158 = vadd.f32 %v2110, %v2150
      %v2159 = vadd.f32 %v2111, %v2151
      %v2160 = vadd.f32 %v2112, %v2152
      %v2161 = vadd.f32 %v2113, %v2153
      %2162 = vset.pattern.permute.xlu0 7
      %2163 = vperm.xlu0 %2162, %v1417
      %v2164 = vpop.permute.xlu0 %2163
      %2166 = vset.pattern.permute.xlu0 7
      %2167 = vperm.xlu0 %2166, %v1422
      %v2168 = vpop.permute.xlu0 %2167
      %2170 = vset.pattern.permute.xlu0 7
      %2171 = vperm.xlu0 %2170, %v1427
      %v2172 = vpop.permute.xlu0 %2171
      %2174 = vset.pattern.permute.xlu0 7
      %2175 = vperm.xlu0 %2174, %v1432
      %v2176 = vpop.permute.xlu0 %2175
      %2178 = vset.pattern.permute.xlu0 7
      %2179 = vperm.xlu0 %2178, %v1437
      %v2180 = vpop.permute.xlu0 %2179
      %2182 = vset.pattern.permute.xlu0 7
      %2183 = vperm.xlu0 %2182, %v1442
      %v2184 = vpop.permute.xlu0 %2183
      %2186 = vset.pattern.permute.xlu0 7
      %2187 = vperm.xlu0 %2186, %v1447
      %v2188 = vpop.permute.xlu0 %2187
      %2190 = vset.pattern.permute.xlu0 7
      %2191 = vperm.xlu0 %2190, %v1452
      %v2192 = vpop.permute.xlu0 %2191
      %v2194 = vmul.f32 %v2164, %v2092
      %v2195 = vmul.f32 %v2168, %v2093
      %v2196 = vmul.f32 %v2172, %v2094
      %v2197 = vmul.f32 %v2176, %v2095
      %v2198 = vmul.f32 %v2180, %v2096
      %v2199 = vmul.f32 %v2184, %v2097
      %v2200 = vmul.f32 %v2188, %v2098
      %v2201 = vmul.f32 %v2192, %v2099
      %2210 = vrot.lane.b32.xlu0 %v2194, 124
      %v2211 = vpop.permute.xlu0 %2210
      %2212 = vrot.lane.b32.xlu0 %v2195, 124
      %v2213 = vpop.permute.xlu0 %2212
      %2214 = vrot.lane.b32.xlu0 %v2196, 124
      %v2215 = vpop.permute.xlu0 %2214
      %2216 = vrot.lane.b32.xlu0 %v2197, 124
      %v2217 = vpop.permute.xlu0 %2216
      %2218 = vrot.lane.b32.xlu0 %v2198, 124
      %v2219 = vpop.permute.xlu0 %2218
      %2220 = vrot.lane.b32.xlu0 %v2199, 124
      %v2221 = vpop.permute.xlu0 %2220
      %2222 = vrot.lane.b32.xlu0 %v2200, 124
      %v2223 = vpop.permute.xlu0 %2222
      %2224 = vrot.lane.b32.xlu0 %v2201, 124
      %v2225 = vpop.permute.xlu0 %2224
      %v2234 = vadd.f32 %v2154, %v2211
      %v2235 = vadd.f32 %v2155, %v2213
      %v2236 = vadd.f32 %v2156, %v2215
      %v2237 = vadd.f32 %v2157, %v2217
      %v2238 = vadd.f32 %v2158, %v2219
      %v2239 = vadd.f32 %v2159, %v2221
      %v2240 = vadd.f32 %v2160, %v2223
      %v2241 = vadd.f32 %v2161, %v2225
      %v2242 = vsub.f32 0.0, %v1043
      %v2243 = vsub.f32 0.0, %v1048
      %v2244 = vsub.f32 0.0, %v1053
      %v2245 = vsub.f32 0.0, %v1058
      %v2246 = vsub.f32 0.0, %v1063
      %v2247 = vsub.f32 0.0, %v1068
      %v2248 = vsub.f32 0.0, %v1073
      %v2249 = vsub.f32 0.0, %v1078
      %v2250 = vmul.f32 %v2242, 1.442695
      %v2251 = vpow.pop %v2250
      %v2252 = vmul.f32 %v2243, 1.442695
      %v2253 = vpow.pop %v2252
      %v2254 = vmul.f32 %v2244, 1.442695
      %v2255 = vpow.pop %v2254
      %v2256 = vmul.f32 %v2245, 1.442695
      %v2257 = vpow.pop %v2256
      %v2258 = vmul.f32 %v2246, 1.442695
      %v2259 = vpow.pop %v2258
      %v2260 = vmul.f32 %v2247, 1.442695
      %v2261 = vpow.pop %v2260
      %v2262 = vmul.f32 %v2248, 1.442695
      %v2263 = vpow.pop %v2262
      %v2264 = vmul.f32 %v2249, 1.442695
      %v2265 = vpow.pop %v2264
      %v2266 = vadd.f32 %v2251, 1.0
      %v2267 = vadd.f32 %v2253, 1.0
      %v2268 = vadd.f32 %v2255, 1.0
      %v2269 = vadd.f32 %v2257, 1.0
      %v2270 = vadd.f32 %v2259, 1.0
      %v2271 = vadd.f32 %v2261, 1.0
      %v2272 = vadd.f32 %v2263, 1.0
      %v2273 = vadd.f32 %v2265, 1.0
      %v2274 = vrcp.pop %v2266
      %v2275 = vmul.f32 %v1043, %v2274
      %v2276 = vrcp.pop %v2267
      %v2277 = vmul.f32 %v1048, %v2276
      %v2278 = vrcp.pop %v2268
      %v2279 = vmul.f32 %v1053, %v2278
      %v2280 = vrcp.pop %v2269
      %v2281 = vmul.f32 %v1058, %v2280
      %v2282 = vrcp.pop %v2270
      %v2283 = vmul.f32 %v1063, %v2282
      %v2284 = vrcp.pop %v2271
      %v2285 = vmul.f32 %v1068, %v2284
      %v2286 = vrcp.pop %v2272
      %v2287 = vmul.f32 %v1073, %v2286
      %v2288 = vrcp.pop %v2273
      %v2289 = vmul.f32 %v1078, %v2288
      %2298 = vrot.lane.b32.xlu0 %v2275, 124
      %v2299 = vpop.permute.xlu0 %2298
      %2300 = vrot.lane.b32.xlu0 %v2277, 124
      %v2301 = vpop.permute.xlu0 %2300
      %2302 = vrot.lane.b32.xlu0 %v2279, 124
      %v2303 = vpop.permute.xlu0 %2302
      %2304 = vrot.lane.b32.xlu0 %v2281, 124
      %v2305 = vpop.permute.xlu0 %2304
      %2306 = vrot.lane.b32.xlu0 %v2283, 124
      %v2307 = vpop.permute.xlu0 %2306
      %2308 = vrot.lane.b32.xlu0 %v2285, 124
      %v2309 = vpop.permute.xlu0 %2308
      %2310 = vrot.lane.b32.xlu0 %v2287, 124
      %v2311 = vpop.permute.xlu0 %2310
      %2312 = vrot.lane.b32.xlu0 %v2289, 124
      %v2313 = vpop.permute.xlu0 %2312
      %v2322 = vmul.f32 %v2234, %v2299
      %v2323 = vmul.f32 %v2235, %v2301
      %v2324 = vmul.f32 %v2236, %v2303
      %v2325 = vmul.f32 %v2237, %v2305
      %v2326 = vmul.f32 %v2238, %v2307
      %v2327 = vmul.f32 %v2239, %v2309
      %v2328 = vmul.f32 %v2240, %v2311
      %v2329 = vmul.f32 %v2241, %v2313
      %v2331 = vsel %vm781, %v2322, 0
      %v2334 = vsel %vm781, %v2323, 0
      %v2337 = vsel %vm781, %v2324, 0
      %v2340 = vsel %vm781, %v2325, 0
      %v2343 = vsel %vm781, %v2326, 0
      %v2346 = vsel %vm781, %v2327, 0
      %v2349 = vsel %vm781, %v2328, 0
      %v2352 = vsel %vm781, %v2329, 0
      %v2355 = vsel %vm806, %v970, 0
      %2357 = vmatprep.subr.mxu0 0.0
      %2358 = vmatpush1.msra.mxu0 %v2355
      %2359 = vmatprep.subr.mxu0 0.0
      %2360 = vmatpush1.msra.mxu0 0.0
      %2361 = vmatprep.subr.mxu0 0.0
      %2362 = vmatpush1.msra.mxu0 0.0
      %2363 = vmatprep.subr.mxu0 0.0
      %2364 = vmatpush1.msra.mxu0 0.0
      %2365 = vmatprep.subr.mxu0 0.0
      %2366 = vmatpush1.msra.mxu0 0.0
      %2367 = vmatprep.subr.mxu0 0.0
      %2368 = vmatpush1.msra.mxu0 0.0
      %2369 = vmatprep.subr.mxu0 0.0
      %2370 = vmatpush1.msra.mxu0 0.0
      %2371 = vmatprep.subr.mxu0 0.0
      %2372 = vmatpush1.msra.mxu0 0.0
      %2373 = vmatprep.subr.mxu0 0.0
      %2374 = vmatpush1.msra.mxu0 0.0
      %2375 = vmatprep.subr.mxu0 0.0
      %2376 = vmatpush1.msra.mxu0 0.0
      %2377 = vmatprep.subr.mxu0 0.0
      %2378 = vmatpush1.msra.mxu0 0.0
      %2379 = vmatprep.subr.mxu0 0.0
      %2380 = vmatpush1.msra.mxu0 0.0
      %2381 = vmatprep.subr.mxu0 0.0
      %2382 = vmatpush1.msra.mxu0 0.0
      %2383 = vmatprep.subr.mxu0 0.0
      %2384 = vmatpush1.msra.mxu0 0.0
      %2385 = vmatprep.subr.mxu0 0.0
      %2386 = vmatpush1.msra.mxu0 0.0
      %2387 = vmatprep.subr.mxu0 0.0
      %2388 = vmatpush1.msra.mxu0 0.0
      %2389 = vmatprep.subr.mxu0 0.0
      %2390 = vmatpush1.msra.mxu0 0.0
      %2391 = vmatprep.subr.mxu0 0.0
      %2392 = vmatpush1.msra.mxu0 0.0
      %2393 = vmatprep.subr.mxu0 0.0
      %2394 = vmatpush1.msra.mxu0 0.0
      %2395 = vmatprep.subr.mxu0 0.0
      %2396 = vmatpush1.msra.mxu0 0.0
      %2397 = vmatprep.subr.mxu0 0.0
      %2398 = vmatpush1.msra.mxu0 0.0
      %2399 = vmatprep.subr.mxu0 0.0
      %2400 = vmatpush1.msra.mxu0 0.0
      %2401 = vmatprep.subr.mxu0 0.0
      %2402 = vmatpush1.msra.mxu0 0.0
      %2403 = vmatprep.subr.mxu0 0.0
      %2404 = vmatpush1.msra.mxu0 0.0
      %2405 = vmatprep.subr.mxu0 0.0
      %2406 = vmatpush1.msra.mxu0 0.0
      %2407 = vmatprep.subr.mxu0 0.0
      %2408 = vmatpush1.msra.mxu0 0.0
      %2409 = vmatprep.subr.mxu0 0.0
      %2410 = vmatpush1.msra.mxu0 0.0
      %2411 = vmatprep.subr.mxu0 0.0
      %2412 = vmatpush1.msra.mxu0 0.0
      %2413 = vmatprep.subr.mxu0 0.0
      %2414 = vmatpush1.msra.mxu0 0.0
      %2415 = vmatprep.subr.mxu0 0.0
      %2416 = vmatpush1.msra.mxu0 0.0
      %2417 = vmatprep.subr.mxu0 0.0
      %2418 = vmatpush1.msra.mxu0 0.0
      %2419 = vmatprep.subr.mxu0 0.0
      %2420 = vmatpush1.msra.mxu0 0.0
      %2421 = vmatprep.mubr.f32.mxu0 0.0
      %2422 = vmatmul.mubr.f32.gmra.mrb[0].mxu0 %v2331
      %v2423 = vpop.f32.mrb[0].mxu0
      %v2424 = vadd.f32 0.0, %v2423
      %v2425 = vpop.f32.mrb[0].mxu0
      %2426 = vmatprep.mubr.f32.mxu0 0.0
      %2427 = vmatmul.mubr.f32.gmra.mrb[0].mxu0 %v2334
      %v2428 = vpop.f32.mrb[0].mxu0
      %v2429 = vadd.f32 0.0, %v2428
      %v2430 = vpop.f32.mrb[0].mxu0
      %2431 = vmatprep.mubr.f32.mxu0 0.0
      %2432 = vmatmul.mubr.f32.gmra.mrb[0].mxu0 %v2337
      %v2433 = vpop.f32.mrb[0].mxu0
      %v2434 = vadd.f32 0.0, %v2433
      %v2435 = vpop.f32.mrb[0].mxu0
      %2436 = vmatprep.mubr.f32.mxu0 0.0
      %2437 = vmatmul.mubr.f32.gmra.mrb[0].mxu0 %v2340
      %v2438 = vpop.f32.mrb[0].mxu0
      %v2439 = vadd.f32 0.0, %v2438
      %v2440 = vpop.f32.mrb[0].mxu0
      %2441 = vmatprep.mubr.f32.mxu0 0.0
      %2442 = vmatmul.mubr.f32.gmra.mrb[0].mxu0 %v2343
      %v2443 = vpop.f32.mrb[0].mxu0
      %v2444 = vadd.f32 0.0, %v2443
      %v2445 = vpop.f32.mrb[0].mxu0
      %2446 = vmatprep.mubr.f32.mxu0 0.0
      %2447 = vmatmul.mubr.f32.gmra.mrb[0].mxu0 %v2346
      %v2448 = vpop.f32.mrb[0].mxu0
      %v2449 = vadd.f32 0.0, %v2448
      %v2450 = vpop.f32.mrb[0].mxu0
      %2451 = vmatprep.mubr.f32.mxu0 0.0
      %2452 = vmatmul.mubr.f32.gmra.mrb[0].mxu0 %v2349
      %v2453 = vpop.f32.mrb[0].mxu0
      %v2454 = vadd.f32 0.0, %v2453
      %v2455 = vpop.f32.mrb[0].mxu0
      %2456 = vmatprep.mubr.f32.mxu0 0.0
      %2457 = vmatmul.mubr.f32.gmra.mrb[0].mxu0 %v2352
      %v2458 = vpop.f32.mrb[0].mxu0
      %v2459 = vadd.f32 0.0, %v2458
      %v2460 = vpop.f32.mrb[0].mxu0
      %2461 = vdwg.mxu0
      %vm2462 = vcmask 64512
      %v2463 = vsel %vm2462, %v2424, 0.0
      %2464 = vadd.xlane.f32.xlu0 %v2463
      %v2465 = vpop.xlane.xlu0 %2464
      %v2466 = vsel %vm2462, %v2429, 0.0
      %2467 = vadd.xlane.f32.xlu0 %v2466
      %v2468 = vpop.xlane.xlu0 %2467
      %v2469 = vsel %vm2462, %v2434, 0.0
      %2470 = vadd.xlane.f32.xlu0 %v2469
      %v2471 = vpop.xlane.xlu0 %2470
      %v2472 = vsel %vm2462, %v2439, 0.0
      %2473 = vadd.xlane.f32.xlu0 %v2472
      %v2474 = vpop.xlane.xlu0 %2473
      %v2475 = vsel %vm2462, %v2444, 0.0
      %2476 = vadd.xlane.f32.xlu0 %v2475
      %v2477 = vpop.xlane.xlu0 %2476
      %v2478 = vsel %vm2462, %v2449, 0.0
      %2479 = vadd.xlane.f32.xlu0 %v2478
      %v2480 = vpop.xlane.xlu0 %2479
      %v2481 = vsel %vm2462, %v2454, 0.0
      %2482 = vadd.xlane.f32.xlu0 %v2481
      %v2483 = vpop.xlane.xlu0 %2482
      %v2484 = vsel %vm2462, %v2459, 0.0
      %2485 = vadd.xlane.f32.xlu0 %v2484
      %v2486 = vpop.xlane.xlu0 %2485
      %v2487 = vrcp.pop 8.0
      %v2488 = vmul.f32 %v2465, %v2487
      %v2489 = vmul.f32 %v2468, %v2487
      %v2490 = vmul.f32 %v2471, %v2487
      %v2491 = vmul.f32 %v2474, %v2487
      %v2492 = vmul.f32 %v2477, %v2487
      %v2493 = vmul.f32 %v2480, %v2487
      %v2494 = vmul.f32 %v2483, %v2487
      %v2495 = vmul.f32 %v2486, %v2487
      %v2496 = vsub.f32 %v2424, %v2488
      %v2497 = vsub.f32 %v2429, %v2489
      %v2498 = vsub.f32 %v2434, %v2490
      %v2499 = vsub.f32 %v2439, %v2491
      %v2500 = vsub.f32 %v2444, %v2492
      %v2501 = vsub.f32 %v2449, %v2493
      %v2502 = vsub.f32 %v2454, %v2494
      %v2503 = vsub.f32 %v2459, %v2495
      %v2504 = vmul.f32 %v2496, %v2496
      %v2505 = vmul.f32 %v2497, %v2497
      %v2506 = vmul.f32 %v2498, %v2498
      %v2507 = vmul.f32 %v2499, %v2499
      %v2508 = vmul.f32 %v2500, %v2500
      %v2509 = vmul.f32 %v2501, %v2501
      %v2510 = vmul.f32 %v2502, %v2502
      %v2511 = vmul.f32 %v2503, %v2503
      %v2512 = vsel %vm2462, %v2504, 0.0
      %2513 = vadd.xlane.f32.xlu0 %v2512
      %v2514 = vpop.xlane.xlu0 %2513
      %v2515 = vsel %vm2462, %v2505, 0.0
      %2516 = vadd.xlane.f32.xlu0 %v2515
      %v2517 = vpop.xlane.xlu0 %2516
      %v2518 = vsel %vm2462, %v2506, 0.0
      %2519 = vadd.xlane.f32.xlu0 %v2518
      %v2520 = vpop.xlane.xlu0 %2519
      %v2521 = vsel %vm2462, %v2507, 0.0
      %2522 = vadd.xlane.f32.xlu0 %v2521
      %v2523 = vpop.xlane.xlu0 %2522
      %v2524 = vsel %vm2462, %v2508, 0.0
      %2525 = vadd.xlane.f32.xlu0 %v2524
      %v2526 = vpop.xlane.xlu0 %2525
      %v2527 = vsel %vm2462, %v2509, 0.0
      %2528 = vadd.xlane.f32.xlu0 %v2527
      %v2529 = vpop.xlane.xlu0 %2528
      %v2530 = vsel %vm2462, %v2510, 0.0
      %2531 = vadd.xlane.f32.xlu0 %v2530
      %v2532 = vpop.xlane.xlu0 %2531
      %v2533 = vsel %vm2462, %v2511, 0.0
      %2534 = vadd.xlane.f32.xlu0 %v2533
      %v2535 = vpop.xlane.xlu0 %2534
      %v2536 = vmul.f32 %v2514, %v2487
      %v2537 = vmul.f32 %v2517, %v2487
      %v2538 = vmul.f32 %v2520, %v2487
      %v2539 = vmul.f32 %v2523, %v2487
      %v2540 = vmul.f32 %v2526, %v2487
      %v2541 = vmul.f32 %v2529, %v2487
      %v2542 = vmul.f32 %v2532, %v2487
      %v2543 = vmul.f32 %v2535, %v2487
      %v2544 = vadd.f32 %v2536, 1e-05
      %v2545 = vadd.f32 %v2537, 1e-05
      %v2546 = vadd.f32 %v2538, 1e-05
      %v2547 = vadd.f32 %v2539, 1e-05
      %v2548 = vadd.f32 %v2540, 1e-05
      %v2549 = vadd.f32 %v2541, 1e-05
      %v2550 = vadd.f32 %v2542, 1e-05
      %v2551 = vadd.f32 %v2543, 1e-05
      %v2552 = vrsqrt.pop %v2544
      %v2553 = vrsqrt.pop %v2545
      %v2554 = vrsqrt.pop %v2546
      %v2555 = vrsqrt.pop %v2547
      %v2556 = vrsqrt.pop %v2548
      %v2557 = vrsqrt.pop %v2549
      %v2558 = vrsqrt.pop %v2550
      %v2559 = vrsqrt.pop %v2551
      %v2560 = vmul.f32 %v2496, %v2552
      %v2561 = vmul.f32 %v2497, %v2553
      %v2562 = vmul.f32 %v2498, %v2554
      %v2563 = vmul.f32 %v2499, %v2555
      %v2564 = vmul.f32 %v2500, %v2556
      %v2565 = vmul.f32 %v2501, %v2557
      %v2566 = vmul.f32 %v2502, %v2558
      %v2567 = vmul.f32 %v2503, %v2559
      %v2569 = vlaneseq
      %v2570 = vshrl.u32 %v2569, 7
      %v2571 = vsub.s32 0, %v2570
      %v2572 = vrot.slane %v971, %v2571
      %v2574 = vmul.f32 %v2560, %v2572
      %v2575 = vmul.f32 %v2561, %v2572
      %v2576 = vmul.f32 %v2562, %v2572
      %v2577 = vmul.f32 %v2563, %v2572
      %v2578 = vmul.f32 %v2564, %v2572
      %v2579 = vmul.f32 %v2565, %v2572
      %v2580 = vmul.f32 %v2566, %v2572
      %v2581 = vmul.f32 %v2567, %v2572
      %v2583 = vlaneseq
      %v2584 = vshrl.u32 %v2583, 7
      %v2585 = vsub.s32 0, %v2584
      %v2586 = vrot.slane %v972, %v2585
      %v2588 = vadd.f32 %v2574, %v2586
      %v2589 = vadd.f32 %v2575, %v2586
      %v2590 = vadd.f32 %v2576, %v2586
      %v2591 = vadd.f32 %v2577, %v2586
      %v2592 = vadd.f32 %v2578, %v2586
      %v2593 = vadd.f32 %v2579, %v2586
      %v2594 = vadd.f32 %v2580, %v2586
      %v2595 = vadd.f32 %v2581, %v2586
      %v2596 = vld [vmem:[%s13] sm:$0xff]
      %v2597 = vld [vmem:[%s14] sm:$0x1]
      %v2599 = vlaneseq
      %v2600 = vshrl.u32 %v2599, 7
      %v2601 = vsub.s32 0, %v2600
      %v2602 = vrot.slane %v2597, %v2601
      %v2605 = vsel %vm2462, %v2588, 0
      %v2608 = vsel %vm2462, %v2589, 0
      %v2611 = vsel %vm2462, %v2590, 0
      %v2614 = vsel %vm2462, %v2591, 0
      %v2617 = vsel %vm2462, %v2592, 0
      %v2620 = vsel %vm2462, %v2593, 0
      %v2623 = vsel %vm2462, %v2594, 0
      %v2626 = vsel %vm2462, %v2595, 0
      %2628 = vmatprep.subr.mxu0 0.0
      %2629 = vmatpush1.msra.mxu0 %v2596
      %2630 = vmatprep.subr.mxu0 0.0
      %2631 = vmatpush1.msra.mxu0 0.0
      %2632 = vmatprep.subr.mxu0 0.0
      %2633 = vmatpush1.msra.mxu0 0.0
      %2634 = vmatprep.subr.mxu0 0.0
      %2635 = vmatpush1.msra.mxu0 0.0
      %2636 = vmatprep.subr.mxu0 0.0
      %2637 = vmatpush1.msra.mxu0 0.0
      %2638 = vmatprep.subr.mxu0 0.0
      %2639 = vmatpush1.msra.mxu0 0.0
      %2640 = vmatprep.subr.mxu0 0.0
      %2641 = vmatpush1.msra.mxu0 0.0
      %2642 = vmatprep.subr.mxu0 0.0
      %2643 = vmatpush1.msra.mxu0 0.0
      %2644 = vmatprep.subr.mxu0 0.0
      %2645 = vmatpush1.msra.mxu0 0.0
      %2646 = vmatprep.subr.mxu0 0.0
      %2647 = vmatpush1.msra.mxu0 0.0
      %2648 = vmatprep.subr.mxu0 0.0
      %2649 = vmatpush1.msra.mxu0 0.0
      %2650 = vmatprep.subr.mxu0 0.0
      %2651 = vmatpush1.msra.mxu0 0.0
      %2652 = vmatprep.subr.mxu0 0.0
      %2653 = vmatpush1.msra.mxu0 0.0
      %2654 = vmatprep.subr.mxu0 0.0
      %2655 = vmatpush1.msra.mxu0 0.0
      %2656 = vmatprep.subr.mxu0 0.0
      %2657 = vmatpush1.msra.mxu0 0.0
      %2658 = vmatprep.subr.mxu0 0.0
      %2659 = vmatpush1.msra.mxu0 0.0
      %2660 = vmatprep.subr.mxu0 0.0
      %2661 = vmatpush1.msra.mxu0 0.0
      %2662 = vmatprep.subr.mxu0 0.0
      %2663 = vmatpush1.msra.mxu0 0.0
      %2664 = vmatprep.subr.mxu0 0.0
      %2665 = vmatpush1.msra.mxu0 0.0
      %2666 = vmatprep.subr.mxu0 0.0
      %2667 = vmatpush1.msra.mxu0 0.0
      %2668 = vmatprep.subr.mxu0 0.0
      %2669 = vmatpush1.msra.mxu0 0.0
      %2670 = vmatprep.subr.mxu0 0.0
      %2671 = vmatpush1.msra.mxu0 0.0
      %2672 = vmatprep.subr.mxu0 0.0
      %2673 = vmatpush1.msra.mxu0 0.0
      %2674 = vmatprep.subr.mxu0 0.0
      %2675 = vmatpush1.msra.mxu0 0.0
      %2676 = vmatprep.subr.mxu0 0.0
      %2677 = vmatpush1.msra.mxu0 0.0
      %2678 = vmatprep.subr.mxu0 0.0
      %2679 = vmatpush1.msra.mxu0 0.0
      %2680 = vmatprep.subr.mxu0 0.0
      %2681 = vmatpush1.msra.mxu0 0.0
      %2682 = vmatprep.subr.mxu0 0.0
      %2683 = vmatpush1.msra.mxu0 0.0
      %2684 = vmatprep.subr.mxu0 0.0
      %2685 = vmatpush1.msra.mxu0 0.0
      %2686 = vmatprep.subr.mxu0 0.0
      %2687 = vmatpush1.msra.mxu0 0.0
      %2688 = vmatprep.subr.mxu0 0.0
      %2689 = vmatpush1.msra.mxu0 0.0
      %2690 = vmatprep.subr.mxu0 0.0
      %2691 = vmatpush1.msra.mxu0 0.0
      %2692 = vmatprep.mubr.f32.mxu0 0.0
      %2693 = vmatmul.mubr.f32.gmra.mrb[0].mxu0 %v2605
      %v2694 = vpop.f32.mrb[0].mxu0
      %v2695 = vadd.f32 %v2602, %v2694
      %v2696 = vpop.f32.mrb[0].mxu0
      %2697 = vmatprep.mubr.f32.mxu0 0.0
      %2698 = vmatmul.mubr.f32.gmra.mrb[0].mxu0 %v2608
      %v2699 = vpop.f32.mrb[0].mxu0
      %v2700 = vadd.f32 %v2602, %v2699
      %v2701 = vpop.f32.mrb[0].mxu0
      %2702 = vmatprep.mubr.f32.mxu0 0.0
      %2703 = vmatmul.mubr.f32.gmra.mrb[0].mxu0 %v2611
      %v2704 = vpop.f32.mrb[0].mxu0
      %v2705 = vadd.f32 %v2602, %v2704
      %v2706 = vpop.f32.mrb[0].mxu0
      %2707 = vmatprep.mubr.f32.mxu0 0.0
      %2708 = vmatmul.mubr.f32.gmra.mrb[0].mxu0 %v2614
      %v2709 = vpop.f32.mrb[0].mxu0
      %v2710 = vadd.f32 %v2602, %v2709
      %v2711 = vpop.f32.mrb[0].mxu0
      %2712 = vmatprep.mubr.f32.mxu0 0.0
      %2713 = vmatmul.mubr.f32.gmra.mrb[0].mxu0 %v2617
      %v2714 = vpop.f32.mrb[0].mxu0
      %v2715 = vadd.f32 %v2602, %v2714
      %v2716 = vpop.f32.mrb[0].mxu0
      %2717 = vmatprep.mubr.f32.mxu0 0.0
      %2718 = vmatmul.mubr.f32.gmra.mrb[0].mxu0 %v2620
      %v2719 = vpop.f32.mrb[0].mxu0
      %v2720 = vadd.f32 %v2602, %v2719
      %v2721 = vpop.f32.mrb[0].mxu0
      %2722 = vmatprep.mubr.f32.mxu0 0.0
      %2723 = vmatmul.mubr.f32.gmra.mrb[0].mxu0 %v2623
      %v2724 = vpop.f32.mrb[0].mxu0
      %v2725 = vadd.f32 %v2602, %v2724
      %v2726 = vpop.f32.mrb[0].mxu0
      %2727 = vmatprep.mubr.f32.mxu0 0.0
      %2728 = vmatmul.mubr.f32.gmra.mrb[0].mxu0 %v2626
      %v2729 = vpop.f32.mrb[0].mxu0
      %v2730 = vadd.f32 %v2602, %v2729
      %v2731 = vpop.f32.mrb[0].mxu0
      %2732 = vdwg.mxu0
      %v2733 = vsub.f32 0.0, %v2695
      %v2734 = vsub.f32 0.0, %v2700
      %v2735 = vsub.f32 0.0, %v2705
      %v2736 = vsub.f32 0.0, %v2710
      %v2737 = vsub.f32 0.0, %v2715
      %v2738 = vsub.f32 0.0, %v2720
      %v2739 = vsub.f32 0.0, %v2725
      %v2740 = vsub.f32 0.0, %v2730
      %v2741 = vmul.f32 %v2733, 1.442695
      %v2742 = vpow.pop %v2741
      %v2743 = vmul.f32 %v2734, 1.442695
      %v2744 = vpow.pop %v2743
      %v2745 = vmul.f32 %v2735, 1.442695
      %v2746 = vpow.pop %v2745
      %v2747 = vmul.f32 %v2736, 1.442695
      %v2748 = vpow.pop %v2747
      %v2749 = vmul.f32 %v2737, 1.442695
      %v2750 = vpow.pop %v2749
      %v2751 = vmul.f32 %v2738, 1.442695
      %v2752 = vpow.pop %v2751
      %v2753 = vmul.f32 %v2739, 1.442695
      %v2754 = vpow.pop %v2753
      %v2755 = vmul.f32 %v2740, 1.442695
      %v2756 = vpow.pop %v2755
      %v2757 = vadd.f32 %v2742, 1.0
      %v2758 = vadd.f32 %v2744, 1.0
      %v2759 = vadd.f32 %v2746, 1.0
      %v2760 = vadd.f32 %v2748, 1.0
      %v2761 = vadd.f32 %v2750, 1.0
      %v2762 = vadd.f32 %v2752, 1.0
      %v2763 = vadd.f32 %v2754, 1.0
      %v2764 = vadd.f32 %v2756, 1.0
      %v2765 = vrcp.pop %v2757
      %v2766 = vmul.f32 %v2695, %v2765
      %v2767 = vrcp.pop %v2758
      %v2768 = vmul.f32 %v2700, %v2767
      %v2769 = vrcp.pop %v2759
      %v2770 = vmul.f32 %v2705, %v2769
      %v2771 = vrcp.pop %v2760
      %v2772 = vmul.f32 %v2710, %v2771
      %v2773 = vrcp.pop %v2761
      %v2774 = vmul.f32 %v2715, %v2773
      %v2775 = vrcp.pop %v2762
      %v2776 = vmul.f32 %v2720, %v2775
      %v2777 = vrcp.pop %v2763
      %v2778 = vmul.f32 %v2725, %v2777
      %v2779 = vrcp.pop %v2764
      %v2780 = vmul.f32 %v2730, %v2779
      %v2781 = vld [vmem:[%s15] sm:$0xff]
      %v2782 = vld [vmem:[%s16] sm:$0xf]
      %v2783 = vld [vmem:[%s17] sm:$0x1]
      %v2784 = vld [vmem:[%s18] sm:$0xff]
      %v2785 = vld [vmem:[%s19] sm:$0x1]
      %v2786 = vld [vmem:[%s20] sm:$0x1]
      %v2787 = vld [vmem:[%s21] sm:$0x1]
      %v2788 = vld [vmem:[%s22] sm:$0xff]
      %v2789 = vld [vmem:[%s23] sm:$0x1]
      %v2790 = vld [vmem:[%s24] sm:$0x1]
      %v2792 = vsel %vm2462, %v2766, 0
      %v2795 = vsel %vm2462, %v2768, 0
      %v2798 = vsel %vm2462, %v2770, 0
      %v2801 = vsel %vm2462, %v2772, 0
      %v2804 = vsel %vm2462, %v2774, 0
      %v2807 = vsel %vm2462, %v2776, 0
      %v2810 = vsel %vm2462, %v2778, 0
      %v2813 = vsel %vm2462, %v2780, 0
      %2815 = vmatprep.subr.mxu0 0.0
      %2816 = vmatpush1.msra.mxu0 %v2781
      %2817 = vmatprep.subr.mxu0 0.0
      %2818 = vmatpush1.msra.mxu0 0.0
      %2819 = vmatprep.subr.mxu0 0.0
      %2820 = vmatpush1.msra.mxu0 0.0
      %2821 = vmatprep.subr.mxu0 0.0
      %2822 = vmatpush1.msra.mxu0 0.0
      %2823 = vmatprep.subr.mxu0 0.0
      %2824 = vmatpush1.msra.mxu0 0.0
      %2825 = vmatprep.subr.mxu0 0.0
      %2826 = vmatpush1.msra.mxu0 0.0
      %2827 = vmatprep.subr.mxu0 0.0
      %2828 = vmatpush1.msra.mxu0 0.0
      %2829 = vmatprep.subr.mxu0 0.0
      %2830 = vmatpush1.msra.mxu0 0.0
      %2831 = vmatprep.subr.mxu0 0.0
      %2832 = vmatpush1.msra.mxu0 0.0
      %2833 = vmatprep.subr.mxu0 0.0
      %2834 = vmatpush1.msra.mxu0 0.0
      %2835 = vmatprep.subr.mxu0 0.0
      %2836 = vmatpush1.msra.mxu0 0.0
      %2837 = vmatprep.subr.mxu0 0.0
      %2838 = vmatpush1.msra.mxu0 0.0
      %2839 = vmatprep.subr.mxu0 0.0
      %2840 = vmatpush1.msra.mxu0 0.0
      %2841 = vmatprep.subr.mxu0 0.0
      %2842 = vmatpush1.msra.mxu0 0.0
      %2843 = vmatprep.subr.mxu0 0.0
      %2844 = vmatpush1.msra.mxu0 0.0
      %2845 = vmatprep.subr.mxu0 0.0
      %2846 = vmatpush1.msra.mxu0 0.0
      %2847 = vmatprep.subr.mxu0 0.0
      %2848 = vmatpush1.msra.mxu0 0.0
      %2849 = vmatprep.subr.mxu0 0.0
      %2850 = vmatpush1.msra.mxu0 0.0
      %2851 = vmatprep.subr.mxu0 0.0
      %2852 = vmatpush1.msra.mxu0 0.0
      %2853 = vmatprep.subr.mxu0 0.0
      %2854 = vmatpush1.msra.mxu0 0.0
      %2855 = vmatprep.subr.mxu0 0.0
      %2856 = vmatpush1.msra.mxu0 0.0
      %2857 = vmatprep.subr.mxu0 0.0
      %2858 = vmatpush1.msra.mxu0 0.0
      %2859 = vmatprep.subr.mxu0 0.0
      %2860 = vmatpush1.msra.mxu0 0.0
      %2861 = vmatprep.subr.mxu0 0.0
      %2862 = vmatpush1.msra.mxu0 0.0
      %2863 = vmatprep.subr.mxu0 0.0
      %2864 = vmatpush1.msra.mxu0 0.0
      %2865 = vmatprep.subr.mxu0 0.0
      %2866 = vmatpush1.msra.mxu0 0.0
      %2867 = vmatprep.subr.mxu0 0.0
      %2868 = vmatpush1.msra.mxu0 0.0
      %2869 = vmatprep.subr.mxu0 0.0
      %2870 = vmatpush1.msra.mxu0 0.0
      %2871 = vmatprep.subr.mxu0 0.0
      %2872 = vmatpush1.msra.mxu0 0.0
      %2873 = vmatprep.subr.mxu0 0.0
      %2874 = vmatpush1.msra.mxu0 0.0
      %2875 = vmatprep.subr.mxu0 0.0
      %2876 = vmatpush1.msra.mxu0 0.0
      %2877 = vmatprep.subr.mxu0 0.0
      %2878 = vmatpush1.msra.mxu0 0.0
      %2879 = vmatprep.mubr.f32.mxu0 0.0
      %2880 = vmatmul.mubr.f32.gmra.mrb[0].mxu0 %v2792
      %v2881 = vpop.f32.mrb[0].mxu0
      %v2882 = vadd.f32 0.0, %v2881
      %v2883 = vpop.f32.mrb[0].mxu0
      %2884 = vmatprep.mubr.f32.mxu0 0.0
      %2885 = vmatmul.mubr.f32.gmra.mrb[0].mxu0 %v2795
      %v2886 = vpop.f32.mrb[0].mxu0
      %v2887 = vadd.f32 0.0, %v2886
      %v2888 = vpop.f32.mrb[0].mxu0
      %2889 = vmatprep.mubr.f32.mxu0 0.0
      %2890 = vmatmul.mubr.f32.gmra.mrb[0].mxu0 %v2798
      %v2891 = vpop.f32.mrb[0].mxu0
      %v2892 = vadd.f32 0.0, %v2891
      %v2893 = vpop.f32.mrb[0].mxu0
      %2894 = vmatprep.mubr.f32.mxu0 0.0
      %2895 = vmatmul.mubr.f32.gmra.mrb[0].mxu0 %v2801
      %v2896 = vpop.f32.mrb[0].mxu0
      %v2897 = vadd.f32 0.0, %v2896
      %v2898 = vpop.f32.mrb[0].mxu0
      %2899 = vmatprep.mubr.f32.mxu0 0.0
      %2900 = vmatmul.mubr.f32.gmra.mrb[0].mxu0 %v2804
      %v2901 = vpop.f32.mrb[0].mxu0
      %v2902 = vadd.f32 0.0, %v2901
      %v2903 = vpop.f32.mrb[0].mxu0
      %2904 = vmatprep.mubr.f32.mxu0 0.0
      %2905 = vmatmul.mubr.f32.gmra.mrb[0].mxu0 %v2807
      %v2906 = vpop.f32.mrb[0].mxu0
      %v2907 = vadd.f32 0.0, %v2906
      %v2908 = vpop.f32.mrb[0].mxu0
      %2909 = vmatprep.mubr.f32.mxu0 0.0
      %2910 = vmatmul.mubr.f32.gmra.mrb[0].mxu0 %v2810
      %v2911 = vpop.f32.mrb[0].mxu0
      %v2912 = vadd.f32 0.0, %v2911
      %v2913 = vpop.f32.mrb[0].mxu0
      %2914 = vmatprep.mubr.f32.mxu0 0.0
      %2915 = vmatmul.mubr.f32.gmra.mrb[0].mxu0 %v2813
      %v2916 = vpop.f32.mrb[0].mxu0
      %v2917 = vadd.f32 0.0, %v2916
      %v2918 = vpop.f32.mrb[0].mxu0
      %2919 = vdwg.mxu0
      %v2920 = vlaneseq
      %v2921 = vshrl.u32 %v2920, 7
      %v2922 = vsub.s32 3, %v2921
      %v2923 = vrot.slane %v2782, %v2922
      %v2924 = vmul.f32 %v2882, %v2923
      %v2925 = vmul.f32 %v2887, %v2923
      %v2926 = vmul.f32 %v2892, %v2923
      %v2927 = vmul.f32 %v2897, %v2923
      %v2928 = vmul.f32 %v2902, %v2923
      %v2929 = vmul.f32 %v2907, %v2923
      %v2930 = vmul.f32 %v2912, %v2923
      %v2931 = vmul.f32 %v2917, %v2923
      %v2932 = vrot.slane %v2882, 7
      %v2933 = vrot.slane %v2887, 7
      %v2934 = vrot.slane %v2892, 7
      %v2935 = vrot.slane %v2897, 7
      %v2936 = vrot.slane %v2902, 7
      %v2937 = vrot.slane %v2907, 7
      %v2938 = vrot.slane %v2912, 7
      %v2939 = vrot.slane %v2917, 7
      %v2940 = vsel %vm1110, %v2938, %v2939
      %v2941 = vsel %vm1110, %v2937, %v2938
      %v2942 = vsel %vm1110, %v2936, %v2937
      %v2943 = vsel %vm1110, %v2935, %v2936
      %v2944 = vsel %vm1110, %v2934, %v2935
      %v2945 = vsel %vm1110, %v2933, %v2934
      %v2946 = vsel %vm1110, %v2932, %v2933
      %v2947 = vsel %vm1110, %v2939, %v2932
      %v2948 = vsel %vm1119, %v2947, 0.0
      %v2949 = vsel %vm1120, %v2946, 0.0
      %v2950 = vsel %vm1121, %v2945, 0.0
      %v2951 = vsel %vm1122, %v2944, 0.0
      %v2952 = vsel %vm1123, %v2943, 0.0
      %v2953 = vsel %vm1124, %v2942, 0.0
      %v2954 = vsel %vm1125, %v2941, 0.0
      %v2955 = vsel %vm1126, %v2940, 0.0
      %v2956 = vlaneseq
      %v2957 = vshrl.u32 %v2956, 7
      %v2958 = vsub.s32 2, %v2957
      %v2959 = vrot.slane %v2782, %v2958
      %v2960 = vmul.f32 %v2948, %v2959
      %v2961 = vmul.f32 %v2949, %v2959
      %v2962 = vmul.f32 %v2950, %v2959
      %v2963 = vmul.f32 %v2951, %v2959
      %v2964 = vmul.f32 %v2952, %v2959
      %v2965 = vmul.f32 %v2953, %v2959
      %v2966 = vmul.f32 %v2954, %v2959
      %v2967 = vmul.f32 %v2955, %v2959
      %v2968 = vadd.f32 %v2924, %v2960
      %v2969 = vadd.f32 %v2925, %v2961
      %v2970 = vadd.f32 %v2926, %v2962
      %v2971 = vadd.f32 %v2927, %v2963
      %v2972 = vadd.f32 %v2928, %v2964
      %v2973 = vadd.f32 %v2929, %v2965
      %v2974 = vadd.f32 %v2930, %v2966
      %v2975 = vadd.f32 %v2931, %v2967
      %v2976 = vrot.slane %v2882, 6
      %v2977 = vrot.slane %v2887, 6
      %v2978 = vrot.slane %v2892, 6
      %v2979 = vrot.slane %v2897, 6
      %v2980 = vrot.slane %v2902, 6
      %v2981 = vrot.slane %v2907, 6
      %v2982 = vrot.slane %v2912, 6
      %v2983 = vrot.slane %v2917, 6
      %v2984 = vsel %vm1163, %v2982, %v2983
      %v2985 = vsel %vm1163, %v2981, %v2982
      %v2986 = vsel %vm1163, %v2980, %v2981
      %v2987 = vsel %vm1163, %v2979, %v2980
      %v2988 = vsel %vm1163, %v2978, %v2979
      %v2989 = vsel %vm1163, %v2977, %v2978
      %v2990 = vsel %vm1163, %v2976, %v2977
      %v2991 = vsel %vm1163, %v2983, %v2976
      %v2992 = vsel %vm1172, %v2991, 0.0
      %v2993 = vsel %vm1173, %v2990, 0.0
      %v2994 = vsel %vm1174, %v2989, 0.0
      %v2995 = vsel %vm1175, %v2988, 0.0
      %v2996 = vsel %vm1176, %v2987, 0.0
      %v2997 = vsel %vm1177, %v2986, 0.0
      %v2998 = vsel %vm1178, %v2985, 0.0
      %v2999 = vsel %vm1179, %v2984, 0.0
      %v3000 = vlaneseq
      %v3001 = vshrl.u32 %v3000, 7
      %v3002 = vsub.s32 1, %v3001
      %v3003 = vrot.slane %v2782, %v3002
      %v3004 = vmul.f32 %v2992, %v3003
      %v3005 = vmul.f32 %v2993, %v3003
      %v3006 = vmul.f32 %v2994, %v3003
      %v3007 = vmul.f32 %v2995, %v3003
      %v3008 = vmul.f32 %v2996, %v3003
      %v3009 = vmul.f32 %v2997, %v3003
      %v3010 = vmul.f32 %v2998, %v3003
      %v3011 = vmul.f32 %v2999, %v3003
      %v3012 = vadd.f32 %v2968, %v3004
      %v3013 = vadd.f32 %v2969, %v3005
      %v3014 = vadd.f32 %v2970, %v3006
      %v3015 = vadd.f32 %v2971, %v3007
      %v3016 = vadd.f32 %v2972, %v3008
      %v3017 = vadd.f32 %v2973, %v3009
      %v3018 = vadd.f32 %v2974, %v3010
      %v3019 = vadd.f32 %v2975, %v3011
      %v3020 = vrot.slane %v2882, 5
      %v3021 = vrot.slane %v2887, 5
      %v3022 = vrot.slane %v2892, 5
      %v3023 = vrot.slane %v2897, 5
      %v3024 = vrot.slane %v2902, 5
      %v3025 = vrot.slane %v2907, 5
      %v3026 = vrot.slane %v2912, 5
      %v3027 = vrot.slane %v2917, 5
      %v3028 = vsel %vm1216, %v3026, %v3027
      %v3029 = vsel %vm1216, %v3025, %v3026
      %v3030 = vsel %vm1216, %v3024, %v3025
      %v3031 = vsel %vm1216, %v3023, %v3024
      %v3032 = vsel %vm1216, %v3022, %v3023
      %v3033 = vsel %vm1216, %v3021, %v3022
      %v3034 = vsel %vm1216, %v3020, %v3021
      %v3035 = vsel %vm1216, %v3027, %v3020
      %v3036 = vsel %vm1225, %v3035, 0.0
      %v3037 = vsel %vm1226, %v3034, 0.0
      %v3038 = vsel %vm1227, %v3033, 0.0
      %v3039 = vsel %vm1228, %v3032, 0.0
      %v3040 = vsel %vm1229, %v3031, 0.0
      %v3041 = vsel %vm1230, %v3030, 0.0
      %v3042 = vsel %vm1231, %v3029, 0.0
      %v3043 = vsel %vm1232, %v3028, 0.0
      %v3044 = vlaneseq
      %v3045 = vshrl.u32 %v3044, 7
      %v3046 = vsub.s32 0, %v3045
      %v3047 = vrot.slane %v2782, %v3046
      %v3048 = vmul.f32 %v3036, %v3047
      %v3049 = vmul.f32 %v3037, %v3047
      %v3050 = vmul.f32 %v3038, %v3047
      %v3051 = vmul.f32 %v3039, %v3047
      %v3052 = vmul.f32 %v3040, %v3047
      %v3053 = vmul.f32 %v3041, %v3047
      %v3054 = vmul.f32 %v3042, %v3047
      %v3055 = vmul.f32 %v3043, %v3047
      %v3056 = vadd.f32 %v3012, %v3048
      %v3057 = vadd.f32 %v3013, %v3049
      %v3058 = vadd.f32 %v3014, %v3050
      %v3059 = vadd.f32 %v3015, %v3051
      %v3060 = vadd.f32 %v3016, %v3052
      %v3061 = vadd.f32 %v3017, %v3053
      %v3062 = vadd.f32 %v3018, %v3054
      %v3063 = vadd.f32 %v3019, %v3055
      %v3065 = vlaneseq
      %v3066 = vshrl.u32 %v3065, 7
      %v3067 = vsub.s32 0, %v3066
      %v3068 = vrot.slane %v2783, %v3067
      %v3070 = vadd.f32 %v3056, %v3068
      %v3071 = vadd.f32 %v3057, %v3068
      %v3072 = vadd.f32 %v3058, %v3068
      %v3073 = vadd.f32 %v3059, %v3068
      %v3074 = vadd.f32 %v3060, %v3068
      %v3075 = vadd.f32 %v3061, %v3068
      %v3076 = vadd.f32 %v3062, %v3068
      %v3077 = vadd.f32 %v3063, %v3068
      %v3078 = vsub.f32 0.0, %v3070
      %v3079 = vsub.f32 0.0, %v3071
      %v3080 = vsub.f32 0.0, %v3072
      %v3081 = vsub.f32 0.0, %v3073
      %v3082 = vsub.f32 0.0, %v3074
      %v3083 = vsub.f32 0.0, %v3075
      %v3084 = vsub.f32 0.0, %v3076
      %v3085 = vsub.f32 0.0, %v3077
      %v3086 = vmul.f32 %v3078, 1.442695
      %v3087 = vpow.pop %v3086
      %v3088 = vmul.f32 %v3079, 1.442695
      %v3089 = vpow.pop %v3088
      %v3090 = vmul.f32 %v3080, 1.442695
      %v3091 = vpow.pop %v3090
      %v3092 = vmul.f32 %v3081, 1.442695
      %v3093 = vpow.pop %v3092
      %v3094 = vmul.f32 %v3082, 1.442695
      %v3095 = vpow.pop %v3094
      %v3096 = vmul.f32 %v3083, 1.442695
      %v3097 = vpow.pop %v3096
      %v3098 = vmul.f32 %v3084, 1.442695
      %v3099 = vpow.pop %v3098
      %v3100 = vmul.f32 %v3085, 1.442695
      %v3101 = vpow.pop %v3100
      %v3102 = vadd.f32 %v3087, 1.0
      %v3103 = vadd.f32 %v3089, 1.0
      %v3104 = vadd.f32 %v3091, 1.0
      %v3105 = vadd.f32 %v3093, 1.0
      %v3106 = vadd.f32 %v3095, 1.0
      %v3107 = vadd.f32 %v3097, 1.0
      %v3108 = vadd.f32 %v3099, 1.0
      %v3109 = vadd.f32 %v3101, 1.0
      %v3110 = vrcp.pop %v3102
      %v3111 = vmul.f32 %v3070, %v3110
      %v3112 = vrcp.pop %v3103
      %v3113 = vmul.f32 %v3071, %v3112
      %v3114 = vrcp.pop %v3104
      %v3115 = vmul.f32 %v3072, %v3114
      %v3116 = vrcp.pop %v3105
      %v3117 = vmul.f32 %v3073, %v3116
      %v3118 = vrcp.pop %v3106
      %v3119 = vmul.f32 %v3074, %v3118
      %v3120 = vrcp.pop %v3107
      %v3121 = vmul.f32 %v3075, %v3120
      %v3122 = vrcp.pop %v3108
      %v3123 = vmul.f32 %v3076, %v3122
      %v3124 = vrcp.pop %v3109
      %v3125 = vmul.f32 %v3077, %v3124
      %v3127 = vsel %vm2462, %v3111, 0
      %v3130 = vsel %vm2462, %v3113, 0
      %v3133 = vsel %vm2462, %v3115, 0
      %v3136 = vsel %vm2462, %v3117, 0
      %v3139 = vsel %vm2462, %v3119, 0
      %v3142 = vsel %vm2462, %v3121, 0
      %v3145 = vsel %vm2462, %v3123, 0
      %v3148 = vsel %vm2462, %v3125, 0
      %3150 = vmatprep.subr.mxu0 0.0
      %3151 = vmatpush1.msra.mxu0 %v2784
      %3152 = vmatprep.subr.mxu0 0.0
      %3153 = vmatpush1.msra.mxu0 0.0
      %3154 = vmatprep.subr.mxu0 0.0
      %3155 = vmatpush1.msra.mxu0 0.0
      %3156 = vmatprep.subr.mxu0 0.0
      %3157 = vmatpush1.msra.mxu0 0.0
      %3158 = vmatprep.subr.mxu0 0.0
      %3159 = vmatpush1.msra.mxu0 0.0
      %3160 = vmatprep.subr.mxu0 0.0
      %3161 = vmatpush1.msra.mxu0 0.0
      %3162 = vmatprep.subr.mxu0 0.0
      %3163 = vmatpush1.msra.mxu0 0.0
      %3164 = vmatprep.subr.mxu0 0.0
      %3165 = vmatpush1.msra.mxu0 0.0
      %3166 = vmatprep.subr.mxu0 0.0
      %3167 = vmatpush1.msra.mxu0 0.0
      %3168 = vmatprep.subr.mxu0 0.0
      %3169 = vmatpush1.msra.mxu0 0.0
      %3170 = vmatprep.subr.mxu0 0.0
      %3171 = vmatpush1.msra.mxu0 0.0
      %3172 = vmatprep.subr.mxu0 0.0
      %3173 = vmatpush1.msra.mxu0 0.0
      %3174 = vmatprep.subr.mxu0 0.0
      %3175 = vmatpush1.msra.mxu0 0.0
      %3176 = vmatprep.subr.mxu0 0.0
      %3177 = vmatpush1.msra.mxu0 0.0
      %3178 = vmatprep.subr.mxu0 0.0
      %3179 = vmatpush1.msra.mxu0 0.0
      %3180 = vmatprep.subr.mxu0 0.0
      %3181 = vmatpush1.msra.mxu0 0.0
      %3182 = vmatprep.subr.mxu0 0.0
      %3183 = vmatpush1.msra.mxu0 0.0
      %3184 = vmatprep.subr.mxu0 0.0
      %3185 = vmatpush1.msra.mxu0 0.0
      %3186 = vmatprep.subr.mxu0 0.0
      %3187 = vmatpush1.msra.mxu0 0.0
      %3188 = vmatprep.subr.mxu0 0.0
      %3189 = vmatpush1.msra.mxu0 0.0
      %3190 = vmatprep.subr.mxu0 0.0
      %3191 = vmatpush1.msra.mxu0 0.0
      %3192 = vmatprep.subr.mxu0 0.0
      %3193 = vmatpush1.msra.mxu0 0.0
      %3194 = vmatprep.subr.mxu0 0.0
      %3195 = vmatpush1.msra.mxu0 0.0
      %3196 = vmatprep.subr.mxu0 0.0
      %3197 = vmatpush1.msra.mxu0 0.0
      %3198 = vmatprep.subr.mxu0 0.0
      %3199 = vmatpush1.msra.mxu0 0.0
      %3200 = vmatprep.subr.mxu0 0.0
      %3201 = vmatpush1.msra.mxu0 0.0
      %3202 = vmatprep.subr.mxu0 0.0
      %3203 = vmatpush1.msra.mxu0 0.0
      %3204 = vmatprep.subr.mxu0 0.0
      %3205 = vmatpush1.msra.mxu0 0.0
      %3206 = vmatprep.subr.mxu0 0.0
      %3207 = vmatpush1.msra.mxu0 0.0
      %3208 = vmatprep.subr.mxu0 0.0
      %3209 = vmatpush1.msra.mxu0 0.0
      %3210 = vmatprep.subr.mxu0 0.0
      %3211 = vmatpush1.msra.mxu0 0.0
      %3212 = vmatprep.subr.mxu0 0.0
      %3213 = vmatpush1.msra.mxu0 0.0
      %3214 = vmatprep.mubr.f32.mxu0 0.0
      %3215 = vmatmul.mubr.f32.gmra.mrb[0].mxu0 %v3127
      %v3216 = vpop.f32.mrb[0].mxu0
      %v3217 = vadd.f32 0.0, %v3216
      %v3218 = vpop.f32.mrb[0].mxu0
      %3219 = vmatprep.mubr.f32.mxu0 0.0
      %3220 = vmatmul.mubr.f32.gmra.mrb[0].mxu0 %v3130
      %v3221 = vpop.f32.mrb[0].mxu0
      %v3222 = vadd.f32 0.0, %v3221
      %v3223 = vpop.f32.mrb[0].mxu0
      %3224 = vmatprep.mubr.f32.mxu0 0.0
      %3225 = vmatmul.mubr.f32.gmra.mrb[0].mxu0 %v3133
      %v3226 = vpop.f32.mrb[0].mxu0
      %v3227 = vadd.f32 0.0, %v3226
      %v3228 = vpop.f32.mrb[0].mxu0
      %3229 = vmatprep.mubr.f32.mxu0 0.0
      %3230 = vmatmul.mubr.f32.gmra.mrb[0].mxu0 %v3136
      %v3231 = vpop.f32.mrb[0].mxu0
      %v3232 = vadd.f32 0.0, %v3231
      %v3233 = vpop.f32.mrb[0].mxu0
      %3234 = vmatprep.mubr.f32.mxu0 0.0
      %3235 = vmatmul.mubr.f32.gmra.mrb[0].mxu0 %v3139
      %v3236 = vpop.f32.mrb[0].mxu0
      %v3237 = vadd.f32 0.0, %v3236
      %v3238 = vpop.f32.mrb[0].mxu0
      %3239 = vmatprep.mubr.f32.mxu0 0.0
      %3240 = vmatmul.mubr.f32.gmra.mrb[0].mxu0 %v3142
      %v3241 = vpop.f32.mrb[0].mxu0
      %v3242 = vadd.f32 0.0, %v3241
      %v3243 = vpop.f32.mrb[0].mxu0
      %3244 = vmatprep.mubr.f32.mxu0 0.0
      %3245 = vmatmul.mubr.f32.gmra.mrb[0].mxu0 %v3145
      %v3246 = vpop.f32.mrb[0].mxu0
      %v3247 = vadd.f32 0.0, %v3246
      %v3248 = vpop.f32.mrb[0].mxu0
      %3249 = vmatprep.mubr.f32.mxu0 0.0
      %3250 = vmatmul.mubr.f32.gmra.mrb[0].mxu0 %v3148
      %v3251 = vpop.f32.mrb[0].mxu0
      %v3252 = vadd.f32 0.0, %v3251
      %v3253 = vpop.f32.mrb[0].mxu0
      %3254 = vdwg.mxu0
      %v3256 = vlaneseq
      %v3257 = vshrl.u32 %v3256, 7
      %v3258 = vsub.s32 0, %v3257
      %v3259 = vrot.slane %v2785, %v3258
      %v3261 = vadd.f32 %v3217, %v3259
      %v3262 = vadd.f32 %v3222, %v3259
      %v3263 = vadd.f32 %v3227, %v3259
      %v3264 = vadd.f32 %v3232, %v3259
      %v3265 = vadd.f32 %v3237, %v3259
      %v3266 = vadd.f32 %v3242, %v3259
      %v3267 = vadd.f32 %v3247, %v3259
      %v3268 = vadd.f32 %v3252, %v3259
      %v3269 = vmax.f32 %v3261, 0.0
      %v3270 = vmax.f32 %v3262, 0.0
      %v3271 = vmax.f32 %v3263, 0.0
      %v3272 = vmax.f32 %v3264, 0.0
      %v3273 = vmax.f32 %v3265, 0.0
      %v3274 = vmax.f32 %v3266, 0.0
      %v3275 = vmax.f32 %v3267, 0.0
      %v3276 = vmax.f32 %v3268, 0.0
      %v3277 = vand.u32 2147483647, %v3261
      %v3278 = vand.u32 2147483647, %v3262
      %v3279 = vand.u32 2147483647, %v3263
      %v3280 = vand.u32 2147483647, %v3264
      %v3281 = vand.u32 2147483647, %v3265
      %v3282 = vand.u32 2147483647, %v3266
      %v3283 = vand.u32 2147483647, %v3267
      %v3284 = vand.u32 2147483647, %v3268
      %v3285 = vsub.f32 0.0, %v3277
      %v3286 = vsub.f32 0.0, %v3278
      %v3287 = vsub.f32 0.0, %v3279
      %v3288 = vsub.f32 0.0, %v3280
      %v3289 = vsub.f32 0.0, %v3281
      %v3290 = vsub.f32 0.0, %v3282
      %v3291 = vsub.f32 0.0, %v3283
      %v3292 = vsub.f32 0.0, %v3284
      %v3293 = vmul.f32 %v3285, 1.442695
      %v3294 = vpow.pop %v3293
      %v3295 = vmul.f32 %v3286, 1.442695
      %v3296 = vpow.pop %v3295
      %v3297 = vmul.f32 %v3287, 1.442695
      %v3298 = vpow.pop %v3297
      %v3299 = vmul.f32 %v3288, 1.442695
      %v3300 = vpow.pop %v3299
      %v3301 = vmul.f32 %v3289, 1.442695
      %v3302 = vpow.pop %v3301
      %v3303 = vmul.f32 %v3290, 1.442695
      %v3304 = vpow.pop %v3303
      %v3305 = vmul.f32 %v3291, 1.442695
      %v3306 = vpow.pop %v3305
      %v3307 = vmul.f32 %v3292, 1.442695
      %v3308 = vpow.pop %v3307
      %v3309 = vadd.f32 %v3294, 1.0
      %v3310 = vadd.f32 %v3296, 1.0
      %v3311 = vadd.f32 %v3298, 1.0
      %v3312 = vadd.f32 %v3300, 1.0
      %v3313 = vadd.f32 %v3302, 1.0
      %v3314 = vadd.f32 %v3304, 1.0
      %v3315 = vadd.f32 %v3306, 1.0
      %v3316 = vadd.f32 %v3308, 1.0
      %v3317 = vlog2.pop %v3309
      %v3318 = vmul.f32 %v3317, 0.6931472
      %v3319 = vlog2.pop %v3310
      %v3320 = vmul.f32 %v3319, 0.6931472
      %v3321 = vlog2.pop %v3311
      %v3322 = vmul.f32 %v3321, 0.6931472
      %v3323 = vlog2.pop %v3312
      %v3324 = vmul.f32 %v3323, 0.6931472
      %v3325 = vlog2.pop %v3313
      %v3326 = vmul.f32 %v3325, 0.6931472
      %v3327 = vlog2.pop %v3314
      %v3328 = vmul.f32 %v3327, 0.6931472
      %v3329 = vlog2.pop %v3315
      %v3330 = vmul.f32 %v3329, 0.6931472
      %v3331 = vlog2.pop %v3316
      %v3332 = vmul.f32 %v3331, 0.6931472
      %v3333 = vadd.f32 %v3269, %v3318
      %v3334 = vadd.f32 %v3270, %v3320
      %v3335 = vadd.f32 %v3271, %v3322
      %v3336 = vadd.f32 %v3272, %v3324
      %v3337 = vadd.f32 %v3273, %v3326
      %v3338 = vadd.f32 %v3274, %v3328
      %v3339 = vadd.f32 %v3275, %v3330
      %v3340 = vadd.f32 %v3276, %v3332
      %3349 = vrot.lane.b32.xlu0 %v3333, 8
      %v3350 = vpop.permute.xlu0 %3349
      %3351 = vrot.lane.b32.xlu0 %v3334, 8
      %v3352 = vpop.permute.xlu0 %3351
      %3353 = vrot.lane.b32.xlu0 %v3335, 8
      %v3354 = vpop.permute.xlu0 %3353
      %3355 = vrot.lane.b32.xlu0 %v3336, 8
      %v3356 = vpop.permute.xlu0 %3355
      %3357 = vrot.lane.b32.xlu0 %v3337, 8
      %v3358 = vpop.permute.xlu0 %3357
      %3359 = vrot.lane.b32.xlu0 %v3338, 8
      %v3360 = vpop.permute.xlu0 %3359
      %3361 = vrot.lane.b32.xlu0 %v3339, 8
      %v3362 = vpop.permute.xlu0 %3361
      %3363 = vrot.lane.b32.xlu0 %v3340, 8
      %v3364 = vpop.permute.xlu0 %3363
      %v3373 = vsel %vm2462, %v3333, %v3350
      %v3374 = vsel %vm2462, %v3334, %v3352
      %v3375 = vsel %vm2462, %v3335, %v3354
      %v3376 = vsel %vm2462, %v3336, %v3356
      %v3377 = vsel %vm2462, %v3337, %v3358
      %v3378 = vsel %vm2462, %v3338, %v3360
      %v3379 = vsel %vm2462, %v3339, %v3362
      %v3380 = vsel %vm2462, %v3340, %v3364
      %v3382 = vlaneseq
      %v3383 = vshrl.u32 %v3382, 7
      %v3384 = vsub.s32 0, %v3383
      %v3385 = vrot.slane %v2786, %v3384
      %v3387 = vmul.f32 %v3373, %v3385
      %v3388 = vmul.f32 %v3374, %v3385
      %v3389 = vmul.f32 %v3375, %v3385
      %v3390 = vmul.f32 %v3376, %v3385
      %v3391 = vmul.f32 %v3377, %v3385
      %v3392 = vmul.f32 %v3378, %v3385
      %v3393 = vmul.f32 %v3379, %v3385
      %v3394 = vmul.f32 %v3380, %v3385
      %v3395 = vmul.f32 %v3387, 1.442695
      %v3396 = vpow.pop %v3395
      %v3397 = vmul.f32 %v3388, 1.442695
      %v3398 = vpow.pop %v3397
      %v3399 = vmul.f32 %v3389, 1.442695
      %v3400 = vpow.pop %v3399
      %v3401 = vmul.f32 %v3390, 1.442695
      %v3402 = vpow.pop %v3401
      %v3403 = vmul.f32 %v3391, 1.442695
      %v3404 = vpow.pop %v3403
      %v3405 = vmul.f32 %v3392, 1.442695
      %v3406 = vpow.pop %v3405
      %v3407 = vmul.f32 %v3393, 1.442695
      %v3408 = vpow.pop %v3407
      %v3409 = vmul.f32 %v3394, 1.442695
      %v3410 = vpow.pop %v3409
      %v3411 = vmul.f32 %v3333, %v3111
      %v3412 = vmul.f32 %v3334, %v3113
      %v3413 = vmul.f32 %v3335, %v3115
      %v3414 = vmul.f32 %v3336, %v3117
      %v3415 = vmul.f32 %v3337, %v3119
      %v3416 = vmul.f32 %v3338, %v3121
      %v3417 = vmul.f32 %v3339, %v3123
      %v3418 = vmul.f32 %v3340, %v3125
      %3420 = vset.pattern.permute.xlu0 8
      %3421 = vperm.xlu0 %3420, %v3217
      %v3422 = vpop.permute.xlu0 %3421
      %3425 = vset.pattern.permute.xlu0 8
      %3426 = vperm.xlu0 %3425, %v3222
      %v3427 = vpop.permute.xlu0 %3426
      %3430 = vset.pattern.permute.xlu0 8
      %3431 = vperm.xlu0 %3430, %v3227
      %v3432 = vpop.permute.xlu0 %3431
      %3435 = vset.pattern.permute.xlu0 8
      %3436 = vperm.xlu0 %3435, %v3232
      %v3437 = vpop.permute.xlu0 %3436
      %3440 = vset.pattern.permute.xlu0 8
      %3441 = vperm.xlu0 %3440, %v3237
      %v3442 = vpop.permute.xlu0 %3441
      %3445 = vset.pattern.permute.xlu0 8
      %3446 = vperm.xlu0 %3445, %v3242
      %v3447 = vpop.permute.xlu0 %3446
      %3450 = vset.pattern.permute.xlu0 8
      %3451 = vperm.xlu0 %3450, %v3247
      %v3452 = vpop.permute.xlu0 %3451
      %3455 = vset.pattern.permute.xlu0 8
      %3456 = vperm.xlu0 %3455, %v3252
      %v3457 = vpop.permute.xlu0 %3456
      %v3459 = vmul.f32 %v3411, %v3422
      %v3460 = vmul.f32 %v3412, %v3427
      %v3461 = vmul.f32 %v3413, %v3432
      %v3462 = vmul.f32 %v3414, %v3437
      %v3463 = vmul.f32 %v3415, %v3442
      %v3464 = vmul.f32 %v3416, %v3447
      %v3465 = vmul.f32 %v3417, %v3452
      %v3466 = vmul.f32 %v3418, %v3457
      %3467 = vset.pattern.permute.xlu0 9
      %3468 = vperm.xlu0 %3467, %v3217
      %v3469 = vpop.permute.xlu0 %3468
      %3471 = vset.pattern.permute.xlu0 9
      %3472 = vperm.xlu0 %3471, %v3222
      %v3473 = vpop.permute.xlu0 %3472
      %3475 = vset.pattern.permute.xlu0 9
      %3476 = vperm.xlu0 %3475, %v3227
      %v3477 = vpop.permute.xlu0 %3476
      %3479 = vset.pattern.permute.xlu0 9
      %3480 = vperm.xlu0 %3479, %v3232
      %v3481 = vpop.permute.xlu0 %3480
      %3483 = vset.pattern.permute.xlu0 9
      %3484 = vperm.xlu0 %3483, %v3237
      %v3485 = vpop.permute.xlu0 %3484
      %3487 = vset.pattern.permute.xlu0 9
      %3488 = vperm.xlu0 %3487, %v3242
      %v3489 = vpop.permute.xlu0 %3488
      %3491 = vset.pattern.permute.xlu0 9
      %3492 = vperm.xlu0 %3491, %v3247
      %v3493 = vpop.permute.xlu0 %3492
      %3495 = vset.pattern.permute.xlu0 9
      %3496 = vperm.xlu0 %3495, %v3252
      %v3497 = vpop.permute.xlu0 %3496
      %v3499 = vmul.f32 %v3411, %v3469
      %v3500 = vmul.f32 %v3412, %v3473
      %v3501 = vmul.f32 %v3413, %v3477
      %v3502 = vmul.f32 %v3414, %v3481
      %v3503 = vmul.f32 %v3415, %v3485
      %v3504 = vmul.f32 %v3416, %v3489
      %v3505 = vmul.f32 %v3417, %v3493
      %v3506 = vmul.f32 %v3418, %v3497
      %3515 = vrot.lane.b32.xlu0 %v3499, 8
      %v3516 = vpop.permute.xlu0 %3515
      %3517 = vrot.lane.b32.xlu0 %v3500, 8
      %v3518 = vpop.permute.xlu0 %3517
      %3519 = vrot.lane.b32.xlu0 %v3501, 8
      %v3520 = vpop.permute.xlu0 %3519
      %3521 = vrot.lane.b32.xlu0 %v3502, 8
      %v3522 = vpop.permute.xlu0 %3521
      %3523 = vrot.lane.b32.xlu0 %v3503, 8
      %v3524 = vpop.permute.xlu0 %3523
      %3525 = vrot.lane.b32.xlu0 %v3504, 8
      %v3526 = vpop.permute.xlu0 %3525
      %3527 = vrot.lane.b32.xlu0 %v3505, 8
      %v3528 = vpop.permute.xlu0 %3527
      %3529 = vrot.lane.b32.xlu0 %v3506, 8
      %v3530 = vpop.permute.xlu0 %3529
      %v3539 = vsel %vm2462, %v3459, %v3516
      %v3540 = vsel %vm2462, %v3460, %v3518
      %v3541 = vsel %vm2462, %v3461, %v3520
      %v3542 = vsel %vm2462, %v3462, %v3522
      %v3543 = vsel %vm2462, %v3463, %v3524
      %v3544 = vsel %vm2462, %v3464, %v3526
      %v3545 = vsel %vm2462, %v3465, %v3528
      %v3546 = vsel %vm2462, %v3466, %v3530
      %v3547 = vrot.slane %v3396, 7
      %v3548 = vrot.slane %v3398, 7
      %v3549 = vrot.slane %v3400, 7
      %v3550 = vrot.slane %v3402, 7
      %v3551 = vrot.slane %v3404, 7
      %v3552 = vrot.slane %v3406, 7
      %v3553 = vrot.slane %v3408, 7
      %v3554 = vrot.slane %v3410, 7
      %v3555 = vsel %vm1110, %v3553, %v3554
      %v3556 = vsel %vm1110, %v3552, %v3553
      %v3557 = vsel %vm1110, %v3551, %v3552
      %v3558 = vsel %vm1110, %v3550, %v3551
      %v3559 = vsel %vm1110, %v3549, %v3550
      %v3560 = vsel %vm1110, %v3548, %v3549
      %v3561 = vsel %vm1110, %v3547, %v3548
      %v3562 = vsel %vm1110, %v3554, %v3547
      %v3563 = vsel %vm1119, %v3562, 1.0
      %v3564 = vsel %vm1120, %v3561, 1.0
      %v3565 = vsel %vm1121, %v3560, 1.0
      %v3566 = vsel %vm1122, %v3559, 1.0
      %v3567 = vsel %vm1123, %v3558, 1.0
      %v3568 = vsel %vm1124, %v3557, 1.0
      %v3569 = vsel %vm1125, %v3556, 1.0
      %v3570 = vsel %vm1126, %v3555, 1.0
      %v3571 = vrot.slane %v3539, 7
      %v3572 = vrot.slane %v3540, 7
      %v3573 = vrot.slane %v3541, 7
      %v3574 = vrot.slane %v3542, 7
      %v3575 = vrot.slane %v3543, 7
      %v3576 = vrot.slane %v3544, 7
      %v3577 = vrot.slane %v3545, 7
      %v3578 = vrot.slane %v3546, 7
      %v3579 = vsel %vm1110, %v3577, %v3578
      %v3580 = vsel %vm1110, %v3576, %v3577
      %v3581 = vsel %vm1110, %v3575, %v3576
      %v3582 = vsel %vm1110, %v3574, %v3575
      %v3583 = vsel %vm1110, %v3573, %v3574
      %v3584 = vsel %vm1110, %v3572, %v3573
      %v3585 = vsel %vm1110, %v3571, %v3572
      %v3586 = vsel %vm1110, %v3578, %v3571
      %v3587 = vsel %vm1119, %v3586, 0.0
      %v3588 = vsel %vm1120, %v3585, 0.0
      %v3589 = vsel %vm1121, %v3584, 0.0
      %v3590 = vsel %vm1122, %v3583, 0.0
      %v3591 = vsel %vm1123, %v3582, 0.0
      %v3592 = vsel %vm1124, %v3581, 0.0
      %v3593 = vsel %vm1125, %v3580, 0.0
      %v3594 = vsel %vm1126, %v3579, 0.0
      %v3595 = vmul.f32 %v3396, %v3587
      %v3596 = vmul.f32 %v3398, %v3588
      %v3597 = vmul.f32 %v3400, %v3589
      %v3598 = vmul.f32 %v3402, %v3590
      %v3599 = vmul.f32 %v3404, %v3591
      %v3600 = vmul.f32 %v3406, %v3592
      %v3601 = vmul.f32 %v3408, %v3593
      %v3602 = vmul.f32 %v3410, %v3594
      %v3603 = vadd.f32 %v3595, %v3539
      %v3604 = vadd.f32 %v3596, %v3540
      %v3605 = vadd.f32 %v3597, %v3541
      %v3606 = vadd.f32 %v3598, %v3542
      %v3607 = vadd.f32 %v3599, %v3543
      %v3608 = vadd.f32 %v3600, %v3544
      %v3609 = vadd.f32 %v3601, %v3545
      %v3610 = vadd.f32 %v3602, %v3546
      %v3611 = vmul.f32 %v3396, %v3563
      %v3612 = vmul.f32 %v3398, %v3564
      %v3613 = vmul.f32 %v3400, %v3565
      %v3614 = vmul.f32 %v3402, %v3566
      %v3615 = vmul.f32 %v3404, %v3567
      %v3616 = vmul.f32 %v3406, %v3568
      %v3617 = vmul.f32 %v3408, %v3569
      %v3618 = vmul.f32 %v3410, %v3570
      %v3619 = vrot.slane %v3611, 6
      %v3620 = vrot.slane %v3612, 6
      %v3621 = vrot.slane %v3613, 6
      %v3622 = vrot.slane %v3614, 6
      %v3623 = vrot.slane %v3615, 6
      %v3624 = vrot.slane %v3616, 6
      %v3625 = vrot.slane %v3617, 6
      %v3626 = vrot.slane %v3618, 6
      %v3627 = vsel %vm1163, %v3625, %v3626
      %v3628 = vsel %vm1163, %v3624, %v3625
      %v3629 = vsel %vm1163, %v3623, %v3624
      %v3630 = vsel %vm1163, %v3622, %v3623
      %v3631 = vsel %vm1163, %v3621, %v3622
      %v3632 = vsel %vm1163, %v3620, %v3621
      %v3633 = vsel %vm1163, %v3619, %v3620
      %v3634 = vsel %vm1163, %v3626, %v3619
      %v3635 = vsel %vm1172, %v3634, 1.0
      %v3636 = vsel %vm1173, %v3633, 1.0
      %v3637 = vsel %vm1174, %v3632, 1.0
      %v3638 = vsel %vm1175, %v3631, 1.0
      %v3639 = vsel %vm1176, %v3630, 1.0
      %v3640 = vsel %vm1177, %v3629, 1.0
      %v3641 = vsel %vm1178, %v3628, 1.0
      %v3642 = vsel %vm1179, %v3627, 1.0
      %v3643 = vrot.slane %v3603, 6
      %v3644 = vrot.slane %v3604, 6
      %v3645 = vrot.slane %v3605, 6
      %v3646 = vrot.slane %v3606, 6
      %v3647 = vrot.slane %v3607, 6
      %v3648 = vrot.slane %v3608, 6
      %v3649 = vrot.slane %v3609, 6
      %v3650 = vrot.slane %v3610, 6
      %v3651 = vsel %vm1163, %v3649, %v3650
      %v3652 = vsel %vm1163, %v3648, %v3649
      %v3653 = vsel %vm1163, %v3647, %v3648
      %v3654 = vsel %vm1163, %v3646, %v3647
      %v3655 = vsel %vm1163, %v3645, %v3646
      %v3656 = vsel %vm1163, %v3644, %v3645
      %v3657 = vsel %vm1163, %v3643, %v3644
      %v3658 = vsel %vm1163, %v3650, %v3643
      %v3659 = vsel %vm1172, %v3658, 0.0
      %v3660 = vsel %vm1173, %v3657, 0.0
      %v3661 = vsel %vm1174, %v3656, 0.0
      %v3662 = vsel %vm1175, %v3655, 0.0
      %v3663 = vsel %vm1176, %v3654, 0.0
      %v3664 = vsel %vm1177, %v3653, 0.0
      %v3665 = vsel %vm1178, %v3652, 0.0
      %v3666 = vsel %vm1179, %v3651, 0.0
      %v3667 = vmul.f32 %v3611, %v3659
      %v3668 = vmul.f32 %v3612, %v3660
      %v3669 = vmul.f32 %v3613, %v3661
      %v3670 = vmul.f32 %v3614, %v3662
      %v3671 = vmul.f32 %v3615, %v3663
      %v3672 = vmul.f32 %v3616, %v3664
      %v3673 = vmul.f32 %v3617, %v3665
      %v3674 = vmul.f32 %v3618, %v3666
      %v3675 = vadd.f32 %v3667, %v3603
      %v3676 = vadd.f32 %v3668, %v3604
      %v3677 = vadd.f32 %v3669, %v3605
      %v3678 = vadd.f32 %v3670, %v3606
      %v3679 = vadd.f32 %v3671, %v3607
      %v3680 = vadd.f32 %v3672, %v3608
      %v3681 = vadd.f32 %v3673, %v3609
      %v3682 = vadd.f32 %v3674, %v3610
      %v3683 = vmul.f32 %v3611, %v3635
      %v3684 = vmul.f32 %v3612, %v3636
      %v3685 = vmul.f32 %v3613, %v3637
      %v3686 = vmul.f32 %v3614, %v3638
      %v3687 = vmul.f32 %v3615, %v3639
      %v3688 = vmul.f32 %v3616, %v3640
      %v3689 = vmul.f32 %v3617, %v3641
      %v3690 = vmul.f32 %v3618, %v3642
      %v3691 = vrot.slane %v3683, 4
      %v3692 = vrot.slane %v3684, 4
      %v3693 = vrot.slane %v3685, 4
      %v3694 = vrot.slane %v3686, 4
      %v3695 = vrot.slane %v3687, 4
      %v3696 = vrot.slane %v3688, 4
      %v3697 = vrot.slane %v3689, 4
      %v3698 = vrot.slane %v3690, 4
      %v3699 = vsel %vm1907, %v3697, %v3698
      %v3700 = vsel %vm1907, %v3696, %v3697
      %v3701 = vsel %vm1907, %v3695, %v3696
      %v3702 = vsel %vm1907, %v3694, %v3695
      %v3703 = vsel %vm1907, %v3693, %v3694
      %v3704 = vsel %vm1907, %v3692, %v3693
      %v3705 = vsel %vm1907, %v3691, %v3692
      %v3706 = vsel %vm1907, %v3698, %v3691
      %v3707 = vsel %vm1891, %v3706, 1.0
      %v3708 = vsel %vm1892, %v3705, 1.0
      %v3709 = vsel %vm1893, %v3704, 1.0
      %v3710 = vsel %vm1894, %v3703, 1.0
      %v3711 = vsel %vm1895, %v3702, 1.0
      %v3712 = vsel %vm1896, %v3701, 1.0
      %v3713 = vsel %vm1897, %v3700, 1.0
      %v3714 = vsel %vm1898, %v3699, 1.0
      %v3715 = vrot.slane %v3675, 4
      %v3716 = vrot.slane %v3676, 4
      %v3717 = vrot.slane %v3677, 4
      %v3718 = vrot.slane %v3678, 4
      %v3719 = vrot.slane %v3679, 4
      %v3720 = vrot.slane %v3680, 4
      %v3721 = vrot.slane %v3681, 4
      %v3722 = vrot.slane %v3682, 4
      %v3723 = vsel %vm1907, %v3721, %v3722
      %v3724 = vsel %vm1907, %v3720, %v3721
      %v3725 = vsel %vm1907, %v3719, %v3720
      %v3726 = vsel %vm1907, %v3718, %v3719
      %v3727 = vsel %vm1907, %v3717, %v3718
      %v3728 = vsel %vm1907, %v3716, %v3717
      %v3729 = vsel %vm1907, %v3715, %v3716
      %v3730 = vsel %vm1907, %v3722, %v3715
      %v3731 = vsel %vm1891, %v3730, 0.0
      %v3732 = vsel %vm1892, %v3729, 0.0
      %v3733 = vsel %vm1893, %v3728, 0.0
      %v3734 = vsel %vm1894, %v3727, 0.0
      %v3735 = vsel %vm1895, %v3726, 0.0
      %v3736 = vsel %vm1896, %v3725, 0.0
      %v3737 = vsel %vm1897, %v3724, 0.0
      %v3738 = vsel %vm1898, %v3723, 0.0
      %v3739 = vmul.f32 %v3683, %v3731
      %v3740 = vmul.f32 %v3684, %v3732
      %v3741 = vmul.f32 %v3685, %v3733
      %v3742 = vmul.f32 %v3686, %v3734
      %v3743 = vmul.f32 %v3687, %v3735
      %v3744 = vmul.f32 %v3688, %v3736
      %v3745 = vmul.f32 %v3689, %v3737
      %v3746 = vmul.f32 %v3690, %v3738
      %v3747 = vadd.f32 %v3739, %v3675
      %v3748 = vadd.f32 %v3740, %v3676
      %v3749 = vadd.f32 %v3741, %v3677
      %v3750 = vadd.f32 %v3742, %v3678
      %v3751 = vadd.f32 %v3743, %v3679
      %v3752 = vadd.f32 %v3744, %v3680
      %v3753 = vadd.f32 %v3745, %v3681
      %v3754 = vadd.f32 %v3746, %v3682
      %v3755 = vmul.f32 %v3683, %v3707
      %v3756 = vmul.f32 %v3684, %v3708
      %v3757 = vmul.f32 %v3685, %v3709
      %v3758 = vmul.f32 %v3686, %v3710
      %v3759 = vmul.f32 %v3687, %v3711
      %v3760 = vmul.f32 %v3688, %v3712
      %v3761 = vmul.f32 %v3689, %v3713
      %v3762 = vmul.f32 %v3690, %v3714
      %v3763 = vsel %vm1972, %v3762, 1.0
      %v3764 = vsel %vm1973, %v3755, 1.0
      %v3765 = vsel %vm1974, %v3756, 1.0
      %v3766 = vsel %vm1975, %v3757, 1.0
      %v3767 = vsel %vm1976, %v3758, 1.0
      %v3768 = vsel %vm1977, %v3759, 1.0
      %v3769 = vsel %vm1978, %v3760, 1.0
      %v3770 = vsel %vm1979, %v3761, 1.0
      %v3771 = vsel %vm1972, %v3754, 0.0
      %v3772 = vsel %vm1973, %v3747, 0.0
      %v3773 = vsel %vm1974, %v3748, 0.0
      %v3774 = vsel %vm1975, %v3749, 0.0
      %v3775 = vsel %vm1976, %v3750, 0.0
      %v3776 = vsel %vm1977, %v3751, 0.0
      %v3777 = vsel %vm1978, %v3752, 0.0
      %v3778 = vsel %vm1979, %v3753, 0.0
      %v3779 = vmul.f32 %v3755, %v3771
      %v3780 = vmul.f32 %v3756, %v3772
      %v3781 = vmul.f32 %v3757, %v3773
      %v3782 = vmul.f32 %v3758, %v3774
      %v3783 = vmul.f32 %v3759, %v3775
      %v3784 = vmul.f32 %v3760, %v3776
      %v3785 = vmul.f32 %v3761, %v3777
      %v3786 = vmul.f32 %v3762, %v3778
      %v3787 = vadd.f32 %v3779, %v3747
      %v3788 = vadd.f32 %v3780, %v3748
      %v3789 = vadd.f32 %v3781, %v3749
      %v3790 = vadd.f32 %v3782, %v3750
      %v3791 = vadd.f32 %v3783, %v3751
      %v3792 = vadd.f32 %v3784, %v3752
      %v3793 = vadd.f32 %v3785, %v3753
      %v3794 = vadd.f32 %v3786, %v3754
      %v3795 = vmul.f32 %v3755, %v3763
      %v3796 = vmul.f32 %v3756, %v3764
      %v3797 = vmul.f32 %v3757, %v3765
      %v3798 = vmul.f32 %v3758, %v3766
      %v3799 = vmul.f32 %v3759, %v3767
      %v3800 = vmul.f32 %v3760, %v3768
      %v3801 = vmul.f32 %v3761, %v3769
      %v3802 = vmul.f32 %v3762, %v3770
      %v3803 = vsel %vm2020, %v3801, 1.0
      %v3804 = vsel %vm2021, %v3802, 1.0
      %v3805 = vsel %vm2022, %v3795, 1.0
      %v3806 = vsel %vm2023, %v3796, 1.0
      %v3807 = vsel %vm2024, %v3797, 1.0
      %v3808 = vsel %vm2025, %v3798, 1.0
      %v3809 = vsel %vm2026, %v3799, 1.0
      %v3810 = vsel %vm2027, %v3800, 1.0
      %v3811 = vsel %vm2020, %v3793, 0.0
      %v3812 = vsel %vm2021, %v3794, 0.0
      %v3813 = vsel %vm2022, %v3787, 0.0
      %v3814 = vsel %vm2023, %v3788, 0.0
      %v3815 = vsel %vm2024, %v3789, 0.0
      %v3816 = vsel %vm2025, %v3790, 0.0
      %v3817 = vsel %vm2026, %v3791, 0.0
      %v3818 = vsel %vm2027, %v3792, 0.0
      %v3819 = vmul.f32 %v3795, %v3811
      %v3820 = vmul.f32 %v3796, %v3812
      %v3821 = vmul.f32 %v3797, %v3813
      %v3822 = vmul.f32 %v3798, %v3814
      %v3823 = vmul.f32 %v3799, %v3815
      %v3824 = vmul.f32 %v3800, %v3816
      %v3825 = vmul.f32 %v3801, %v3817
      %v3826 = vmul.f32 %v3802, %v3818
      %v3827 = vadd.f32 %v3819, %v3787
      %v3828 = vadd.f32 %v3820, %v3788
      %v3829 = vadd.f32 %v3821, %v3789
      %v3830 = vadd.f32 %v3822, %v3790
      %v3831 = vadd.f32 %v3823, %v3791
      %v3832 = vadd.f32 %v3824, %v3792
      %v3833 = vadd.f32 %v3825, %v3793
      %v3834 = vadd.f32 %v3826, %v3794
      %v3835 = vmul.f32 %v3795, %v3803
      %v3836 = vmul.f32 %v3796, %v3804
      %v3837 = vmul.f32 %v3797, %v3805
      %v3838 = vmul.f32 %v3798, %v3806
      %v3839 = vmul.f32 %v3799, %v3807
      %v3840 = vmul.f32 %v3800, %v3808
      %v3841 = vmul.f32 %v3801, %v3809
      %v3842 = vmul.f32 %v3802, %v3810
      %v3843 = vsel %vm2068, %v3831, 0.0
      %v3844 = vsel %vm2069, %v3832, 0.0
      %v3845 = vsel %vm2070, %v3833, 0.0
      %v3846 = vsel %vm2071, %v3834, 0.0
      %v3847 = vsel %vm2072, %v3827, 0.0
      %v3848 = vsel %vm2073, %v3828, 0.0
      %v3849 = vsel %vm2074, %v3829, 0.0
      %v3850 = vsel %vm2075, %v3830, 0.0
      %v3851 = vmul.f32 %v3835, %v3843
      %v3852 = vmul.f32 %v3836, %v3844
      %v3853 = vmul.f32 %v3837, %v3845
      %v3854 = vmul.f32 %v3838, %v3846
      %v3855 = vmul.f32 %v3839, %v3847
      %v3856 = vmul.f32 %v3840, %v3848
      %v3857 = vmul.f32 %v3841, %v3849
      %v3858 = vmul.f32 %v3842, %v3850
      %v3859 = vadd.f32 %v3851, %v3827
      %v3860 = vadd.f32 %v3852, %v3828
      %v3861 = vadd.f32 %v3853, %v3829
      %v3862 = vadd.f32 %v3854, %v3830
      %v3863 = vadd.f32 %v3855, %v3831
      %v3864 = vadd.f32 %v3856, %v3832
      %v3865 = vadd.f32 %v3857, %v3833
      %v3866 = vadd.f32 %v3858, %v3834
      %v3868 = vlaneseq
      %v3869 = vshrl.u32 %v3868, 7
      %v3870 = vsub.s32 0, %v3869
      %v3871 = vrot.slane %v2787, %v3870
      %v3873 = vmul.f32 %v3111, %v3871
      %v3874 = vmul.f32 %v3113, %v3871
      %v3875 = vmul.f32 %v3115, %v3871
      %v3876 = vmul.f32 %v3117, %v3871
      %v3877 = vmul.f32 %v3119, %v3871
      %v3878 = vmul.f32 %v3121, %v3871
      %v3879 = vmul.f32 %v3123, %v3871
      %v3880 = vmul.f32 %v3125, %v3871
      %3881 = vset.pattern.permute.xlu0 10
      %3882 = vperm.xlu0 %3881, %v3217
      %v3883 = vpop.permute.xlu0 %3882
      %3885 = vset.pattern.permute.xlu0 10
      %3886 = vperm.xlu0 %3885, %v3222
      %v3887 = vpop.permute.xlu0 %3886
      %3889 = vset.pattern.permute.xlu0 10
      %3890 = vperm.xlu0 %3889, %v3227
      %v3891 = vpop.permute.xlu0 %3890
      %3893 = vset.pattern.permute.xlu0 10
      %3894 = vperm.xlu0 %3893, %v3232
      %v3895 = vpop.permute.xlu0 %3894
      %3897 = vset.pattern.permute.xlu0 10
      %3898 = vperm.xlu0 %3897, %v3237
      %v3899 = vpop.permute.xlu0 %3898
      %3901 = vset.pattern.permute.xlu0 10
      %3902 = vperm.xlu0 %3901, %v3242
      %v3903 = vpop.permute.xlu0 %3902
      %3905 = vset.pattern.permute.xlu0 10
      %3906 = vperm.xlu0 %3905, %v3247
      %v3907 = vpop.permute.xlu0 %3906
      %3909 = vset.pattern.permute.xlu0 10
      %3910 = vperm.xlu0 %3909, %v3252
      %v3911 = vpop.permute.xlu0 %3910
      %v3913 = vmul.f32 %v3883, %v3859
      %v3914 = vmul.f32 %v3887, %v3860
      %v3915 = vmul.f32 %v3891, %v3861
      %v3916 = vmul.f32 %v3895, %v3862
      %v3917 = vmul.f32 %v3899, %v3863
      %v3918 = vmul.f32 %v3903, %v3864
      %v3919 = vmul.f32 %v3907, %v3865
      %v3920 = vmul.f32 %v3911, %v3866
      %v3921 = vadd.f32 %v3873, %v3913
      %v3922 = vadd.f32 %v3874, %v3914
      %v3923 = vadd.f32 %v3875, %v3915
      %v3924 = vadd.f32 %v3876, %v3916
      %v3925 = vadd.f32 %v3877, %v3917
      %v3926 = vadd.f32 %v3878, %v3918
      %v3927 = vadd.f32 %v3879, %v3919
      %v3928 = vadd.f32 %v3880, %v3920
      %3929 = vset.pattern.permute.xlu0 11
      %3930 = vperm.xlu0 %3929, %v3217
      %v3931 = vpop.permute.xlu0 %3930
      %3933 = vset.pattern.permute.xlu0 11
      %3934 = vperm.xlu0 %3933, %v3222
      %v3935 = vpop.permute.xlu0 %3934
      %3937 = vset.pattern.permute.xlu0 11
      %3938 = vperm.xlu0 %3937, %v3227
      %v3939 = vpop.permute.xlu0 %3938
      %3941 = vset.pattern.permute.xlu0 11
      %3942 = vperm.xlu0 %3941, %v3232
      %v3943 = vpop.permute.xlu0 %3942
      %3945 = vset.pattern.permute.xlu0 11
      %3946 = vperm.xlu0 %3945, %v3237
      %v3947 = vpop.permute.xlu0 %3946
      %3949 = vset.pattern.permute.xlu0 11
      %3950 = vperm.xlu0 %3949, %v3242
      %v3951 = vpop.permute.xlu0 %3950
      %3953 = vset.pattern.permute.xlu0 11
      %3954 = vperm.xlu0 %3953, %v3247
      %v3955 = vpop.permute.xlu0 %3954
      %3957 = vset.pattern.permute.xlu0 11
      %3958 = vperm.xlu0 %3957, %v3252
      %v3959 = vpop.permute.xlu0 %3958
      %v3961 = vmul.f32 %v3931, %v3859
      %v3962 = vmul.f32 %v3935, %v3860
      %v3963 = vmul.f32 %v3939, %v3861
      %v3964 = vmul.f32 %v3943, %v3862
      %v3965 = vmul.f32 %v3947, %v3863
      %v3966 = vmul.f32 %v3951, %v3864
      %v3967 = vmul.f32 %v3955, %v3865
      %v3968 = vmul.f32 %v3959, %v3866
      %3977 = vrot.lane.b32.xlu0 %v3961, 120
      %v3978 = vpop.permute.xlu0 %3977
      %3979 = vrot.lane.b32.xlu0 %v3962, 120
      %v3980 = vpop.permute.xlu0 %3979
      %3981 = vrot.lane.b32.xlu0 %v3963, 120
      %v3982 = vpop.permute.xlu0 %3981
      %3983 = vrot.lane.b32.xlu0 %v3964, 120
      %v3984 = vpop.permute.xlu0 %3983
      %3985 = vrot.lane.b32.xlu0 %v3965, 120
      %v3986 = vpop.permute.xlu0 %3985
      %3987 = vrot.lane.b32.xlu0 %v3966, 120
      %v3988 = vpop.permute.xlu0 %3987
      %3989 = vrot.lane.b32.xlu0 %v3967, 120
      %v3990 = vpop.permute.xlu0 %3989
      %3991 = vrot.lane.b32.xlu0 %v3968, 120
      %v3992 = vpop.permute.xlu0 %3991
      %v4001 = vadd.f32 %v3921, %v3978
      %v4002 = vadd.f32 %v3922, %v3980
      %v4003 = vadd.f32 %v3923, %v3982
      %v4004 = vadd.f32 %v3924, %v3984
      %v4005 = vadd.f32 %v3925, %v3986
      %v4006 = vadd.f32 %v3926, %v3988
      %v4007 = vadd.f32 %v3927, %v3990
      %v4008 = vadd.f32 %v3928, %v3992
      %v4009 = vsub.f32 0.0, %v2882
      %v4010 = vsub.f32 0.0, %v2887
      %v4011 = vsub.f32 0.0, %v2892
      %v4012 = vsub.f32 0.0, %v2897
      %v4013 = vsub.f32 0.0, %v2902
      %v4014 = vsub.f32 0.0, %v2907
      %v4015 = vsub.f32 0.0, %v2912
      %v4016 = vsub.f32 0.0, %v2917
      %v4017 = vmul.f32 %v4009, 1.442695
      %v4018 = vpow.pop %v4017
      %v4019 = vmul.f32 %v4010, 1.442695
      %v4020 = vpow.pop %v4019
      %v4021 = vmul.f32 %v4011, 1.442695
      %v4022 = vpow.pop %v4021
      %v4023 = vmul.f32 %v4012, 1.442695
      %v4024 = vpow.pop %v4023
      %v4025 = vmul.f32 %v4013, 1.442695
      %v4026 = vpow.pop %v4025
      %v4027 = vmul.f32 %v4014, 1.442695
      %v4028 = vpow.pop %v4027
      %v4029 = vmul.f32 %v4015, 1.442695
      %v4030 = vpow.pop %v4029
      %v4031 = vmul.f32 %v4016, 1.442695
      %v4032 = vpow.pop %v4031
      %v4033 = vadd.f32 %v4018, 1.0
      %v4034 = vadd.f32 %v4020, 1.0
      %v4035 = vadd.f32 %v4022, 1.0
      %v4036 = vadd.f32 %v4024, 1.0
      %v4037 = vadd.f32 %v4026, 1.0
      %v4038 = vadd.f32 %v4028, 1.0
      %v4039 = vadd.f32 %v4030, 1.0
      %v4040 = vadd.f32 %v4032, 1.0
      %v4041 = vrcp.pop %v4033
      %v4042 = vmul.f32 %v2882, %v4041
      %v4043 = vrcp.pop %v4034
      %v4044 = vmul.f32 %v2887, %v4043
      %v4045 = vrcp.pop %v4035
      %v4046 = vmul.f32 %v2892, %v4045
      %v4047 = vrcp.pop %v4036
      %v4048 = vmul.f32 %v2897, %v4047
      %v4049 = vrcp.pop %v4037
      %v4050 = vmul.f32 %v2902, %v4049
      %v4051 = vrcp.pop %v4038
      %v4052 = vmul.f32 %v2907, %v4051
      %v4053 = vrcp.pop %v4039
      %v4054 = vmul.f32 %v2912, %v4053
      %v4055 = vrcp.pop %v4040
      %v4056 = vmul.f32 %v2917, %v4055
      %4065 = vrot.lane.b32.xlu0 %v4042, 120
      %v4066 = vpop.permute.xlu0 %4065
      %4067 = vrot.lane.b32.xlu0 %v4044, 120
      %v4068 = vpop.permute.xlu0 %4067
      %4069 = vrot.lane.b32.xlu0 %v4046, 120
      %v4070 = vpop.permute.xlu0 %4069
      %4071 = vrot.lane.b32.xlu0 %v4048, 120
      %v4072 = vpop.permute.xlu0 %4071
      %4073 = vrot.lane.b32.xlu0 %v4050, 120
      %v4074 = vpop.permute.xlu0 %4073
      %4075 = vrot.lane.b32.xlu0 %v4052, 120
      %v4076 = vpop.permute.xlu0 %4075
      %4077 = vrot.lane.b32.xlu0 %v4054, 120
      %v4078 = vpop.permute.xlu0 %4077
      %4079 = vrot.lane.b32.xlu0 %v4056, 120
      %v4080 = vpop.permute.xlu0 %4079
      %v4089 = vmul.f32 %v4001, %v4066
      %v4090 = vmul.f32 %v4002, %v4068
      %v4091 = vmul.f32 %v4003, %v4070
      %v4092 = vmul.f32 %v4004, %v4072
      %v4093 = vmul.f32 %v4005, %v4074
      %v4094 = vmul.f32 %v4006, %v4076
      %v4095 = vmul.f32 %v4007, %v4078
      %v4096 = vmul.f32 %v4008, %v4080
      %v4098 = vsel %vm2462, %v4089, 0
      %v4101 = vsel %vm2462, %v4090, 0
      %v4104 = vsel %vm2462, %v4091, 0
      %v4107 = vsel %vm2462, %v4092, 0
      %v4110 = vsel %vm2462, %v4093, 0
      %v4113 = vsel %vm2462, %v4094, 0
      %v4116 = vsel %vm2462, %v4095, 0
      %v4119 = vsel %vm2462, %v4096, 0
      %4121 = vmatprep.subr.mxu0 0.0
      %4122 = vmatpush1.msra.mxu0 %v2788
      %4123 = vmatprep.subr.mxu0 0.0
      %4124 = vmatpush1.msra.mxu0 0.0
      %4125 = vmatprep.subr.mxu0 0.0
      %4126 = vmatpush1.msra.mxu0 0.0
      %4127 = vmatprep.subr.mxu0 0.0
      %4128 = vmatpush1.msra.mxu0 0.0
      %4129 = vmatprep.subr.mxu0 0.0
      %4130 = vmatpush1.msra.mxu0 0.0
      %4131 = vmatprep.subr.mxu0 0.0
      %4132 = vmatpush1.msra.mxu0 0.0
      %4133 = vmatprep.subr.mxu0 0.0
      %4134 = vmatpush1.msra.mxu0 0.0
      %4135 = vmatprep.subr.mxu0 0.0
      %4136 = vmatpush1.msra.mxu0 0.0
      %4137 = vmatprep.subr.mxu0 0.0
      %4138 = vmatpush1.msra.mxu0 0.0
      %4139 = vmatprep.subr.mxu0 0.0
      %4140 = vmatpush1.msra.mxu0 0.0
      %4141 = vmatprep.subr.mxu0 0.0
      %4142 = vmatpush1.msra.mxu0 0.0
      %4143 = vmatprep.subr.mxu0 0.0
      %4144 = vmatpush1.msra.mxu0 0.0
      %4145 = vmatprep.subr.mxu0 0.0
      %4146 = vmatpush1.msra.mxu0 0.0
      %4147 = vmatprep.subr.mxu0 0.0
      %4148 = vmatpush1.msra.mxu0 0.0
      %4149 = vmatprep.subr.mxu0 0.0
      %4150 = vmatpush1.msra.mxu0 0.0
      %4151 = vmatprep.subr.mxu0 0.0
      %4152 = vmatpush1.msra.mxu0 0.0
      %4153 = vmatprep.subr.mxu0 0.0
      %4154 = vmatpush1.msra.mxu0 0.0
      %4155 = vmatprep.subr.mxu0 0.0
      %4156 = vmatpush1.msra.mxu0 0.0
      %4157 = vmatprep.subr.mxu0 0.0
      %4158 = vmatpush1.msra.mxu0 0.0
      %4159 = vmatprep.subr.mxu0 0.0
      %4160 = vmatpush1.msra.mxu0 0.0
      %4161 = vmatprep.subr.mxu0 0.0
      %4162 = vmatpush1.msra.mxu0 0.0
      %4163 = vmatprep.subr.mxu0 0.0
      %4164 = vmatpush1.msra.mxu0 0.0
      %4165 = vmatprep.subr.mxu0 0.0
      %4166 = vmatpush1.msra.mxu0 0.0
      %4167 = vmatprep.subr.mxu0 0.0
      %4168 = vmatpush1.msra.mxu0 0.0
      %4169 = vmatprep.subr.mxu0 0.0
      %4170 = vmatpush1.msra.mxu0 0.0
      %4171 = vmatprep.subr.mxu0 0.0
      %4172 = vmatpush1.msra.mxu0 0.0
      %4173 = vmatprep.subr.mxu0 0.0
      %4174 = vmatpush1.msra.mxu0 0.0
      %4175 = vmatprep.subr.mxu0 0.0
      %4176 = vmatpush1.msra.mxu0 0.0
      %4177 = vmatprep.subr.mxu0 0.0
      %4178 = vmatpush1.msra.mxu0 0.0
      %4179 = vmatprep.subr.mxu0 0.0
      %4180 = vmatpush1.msra.mxu0 0.0
      %4181 = vmatprep.subr.mxu0 0.0
      %4182 = vmatpush1.msra.mxu0 0.0
      %4183 = vmatprep.subr.mxu0 0.0
      %4184 = vmatpush1.msra.mxu0 0.0
      %4185 = vmatprep.mubr.f32.mxu0 0.0
      %4186 = vmatmul.mubr.f32.gmra.mrb[0].mxu0 %v4098
      %v4187 = vpop.f32.mrb[0].mxu0
      %v4188 = vadd.f32 0.0, %v4187
      %v4189 = vpop.f32.mrb[0].mxu0
      %4190 = vmatprep.mubr.f32.mxu0 0.0
      %4191 = vmatmul.mubr.f32.gmra.mrb[0].mxu0 %v4101
      %v4192 = vpop.f32.mrb[0].mxu0
      %v4193 = vadd.f32 0.0, %v4192
      %v4194 = vpop.f32.mrb[0].mxu0
      %4195 = vmatprep.mubr.f32.mxu0 0.0
      %4196 = vmatmul.mubr.f32.gmra.mrb[0].mxu0 %v4104
      %v4197 = vpop.f32.mrb[0].mxu0
      %v4198 = vadd.f32 0.0, %v4197
      %v4199 = vpop.f32.mrb[0].mxu0
      %4200 = vmatprep.mubr.f32.mxu0 0.0
      %4201 = vmatmul.mubr.f32.gmra.mrb[0].mxu0 %v4107
      %v4202 = vpop.f32.mrb[0].mxu0
      %v4203 = vadd.f32 0.0, %v4202
      %v4204 = vpop.f32.mrb[0].mxu0
      %4205 = vmatprep.mubr.f32.mxu0 0.0
      %4206 = vmatmul.mubr.f32.gmra.mrb[0].mxu0 %v4110
      %v4207 = vpop.f32.mrb[0].mxu0
      %v4208 = vadd.f32 0.0, %v4207
      %v4209 = vpop.f32.mrb[0].mxu0
      %4210 = vmatprep.mubr.f32.mxu0 0.0
      %4211 = vmatmul.mubr.f32.gmra.mrb[0].mxu0 %v4113
      %v4212 = vpop.f32.mrb[0].mxu0
      %v4213 = vadd.f32 0.0, %v4212
      %v4214 = vpop.f32.mrb[0].mxu0
      %4215 = vmatprep.mubr.f32.mxu0 0.0
      %4216 = vmatmul.mubr.f32.gmra.mrb[0].mxu0 %v4116
      %v4217 = vpop.f32.mrb[0].mxu0
      %v4218 = vadd.f32 0.0, %v4217
      %v4219 = vpop.f32.mrb[0].mxu0
      %4220 = vmatprep.mubr.f32.mxu0 0.0
      %4221 = vmatmul.mubr.f32.gmra.mrb[0].mxu0 %v4119
      %v4222 = vpop.f32.mrb[0].mxu0
      %v4223 = vadd.f32 0.0, %v4222
      %v4224 = vpop.f32.mrb[0].mxu0
      %4225 = vdwg.mxu0
      %v4226 = vsel %vm2462, %v4188, 0.0
      %4227 = vadd.xlane.f32.xlu0 %v4226
      %v4228 = vpop.xlane.xlu0 %4227
      %v4229 = vsel %vm2462, %v4193, 0.0
      %4230 = vadd.xlane.f32.xlu0 %v4229
      %v4231 = vpop.xlane.xlu0 %4230
      %v4232 = vsel %vm2462, %v4198, 0.0
      %4233 = vadd.xlane.f32.xlu0 %v4232
      %v4234 = vpop.xlane.xlu0 %4233
      %v4235 = vsel %vm2462, %v4203, 0.0
      %4236 = vadd.xlane.f32.xlu0 %v4235
      %v4237 = vpop.xlane.xlu0 %4236
      %v4238 = vsel %vm2462, %v4208, 0.0
      %4239 = vadd.xlane.f32.xlu0 %v4238
      %v4240 = vpop.xlane.xlu0 %4239
      %v4241 = vsel %vm2462, %v4213, 0.0
      %4242 = vadd.xlane.f32.xlu0 %v4241
      %v4243 = vpop.xlane.xlu0 %4242
      %v4244 = vsel %vm2462, %v4218, 0.0
      %4245 = vadd.xlane.f32.xlu0 %v4244
      %v4246 = vpop.xlane.xlu0 %4245
      %v4247 = vsel %vm2462, %v4223, 0.0
      %4248 = vadd.xlane.f32.xlu0 %v4247
      %v4249 = vpop.xlane.xlu0 %4248
      %v4250 = vmul.f32 %v4228, %v2487
      %v4251 = vmul.f32 %v4231, %v2487
      %v4252 = vmul.f32 %v4234, %v2487
      %v4253 = vmul.f32 %v4237, %v2487
      %v4254 = vmul.f32 %v4240, %v2487
      %v4255 = vmul.f32 %v4243, %v2487
      %v4256 = vmul.f32 %v4246, %v2487
      %v4257 = vmul.f32 %v4249, %v2487
      %v4258 = vsub.f32 %v4188, %v4250
      %v4259 = vsub.f32 %v4193, %v4251
      %v4260 = vsub.f32 %v4198, %v4252
      %v4261 = vsub.f32 %v4203, %v4253
      %v4262 = vsub.f32 %v4208, %v4254
      %v4263 = vsub.f32 %v4213, %v4255
      %v4264 = vsub.f32 %v4218, %v4256
      %v4265 = vsub.f32 %v4223, %v4257
      %v4266 = vmul.f32 %v4258, %v4258
      %v4267 = vmul.f32 %v4259, %v4259
      %v4268 = vmul.f32 %v4260, %v4260
      %v4269 = vmul.f32 %v4261, %v4261
      %v4270 = vmul.f32 %v4262, %v4262
      %v4271 = vmul.f32 %v4263, %v4263
      %v4272 = vmul.f32 %v4264, %v4264
      %v4273 = vmul.f32 %v4265, %v4265
      %v4274 = vsel %vm2462, %v4266, 0.0
      %4275 = vadd.xlane.f32.xlu0 %v4274
      %v4276 = vpop.xlane.xlu0 %4275
      %v4277 = vsel %vm2462, %v4267, 0.0
      %4278 = vadd.xlane.f32.xlu0 %v4277
      %v4279 = vpop.xlane.xlu0 %4278
      %v4280 = vsel %vm2462, %v4268, 0.0
      %4281 = vadd.xlane.f32.xlu0 %v4280
      %v4282 = vpop.xlane.xlu0 %4281
      %v4283 = vsel %vm2462, %v4269, 0.0
      %4284 = vadd.xlane.f32.xlu0 %v4283
      %v4285 = vpop.xlane.xlu0 %4284
      %v4286 = vsel %vm2462, %v4270, 0.0
      %4287 = vadd.xlane.f32.xlu0 %v4286
      %v4288 = vpop.xlane.xlu0 %4287
      %v4289 = vsel %vm2462, %v4271, 0.0
      %4290 = vadd.xlane.f32.xlu0 %v4289
      %v4291 = vpop.xlane.xlu0 %4290
      %v4292 = vsel %vm2462, %v4272, 0.0
      %4293 = vadd.xlane.f32.xlu0 %v4292
      %v4294 = vpop.xlane.xlu0 %4293
      %v4295 = vsel %vm2462, %v4273, 0.0
      %4296 = vadd.xlane.f32.xlu0 %v4295
      %v4297 = vpop.xlane.xlu0 %4296
      %v4298 = vmul.f32 %v4276, %v2487
      %v4299 = vmul.f32 %v4279, %v2487
      %v4300 = vmul.f32 %v4282, %v2487
      %v4301 = vmul.f32 %v4285, %v2487
      %v4302 = vmul.f32 %v4288, %v2487
      %v4303 = vmul.f32 %v4291, %v2487
      %v4304 = vmul.f32 %v4294, %v2487
      %v4305 = vmul.f32 %v4297, %v2487
      %v4306 = vadd.f32 %v4298, 1e-05
      %v4307 = vadd.f32 %v4299, 1e-05
      %v4308 = vadd.f32 %v4300, 1e-05
      %v4309 = vadd.f32 %v4301, 1e-05
      %v4310 = vadd.f32 %v4302, 1e-05
      %v4311 = vadd.f32 %v4303, 1e-05
      %v4312 = vadd.f32 %v4304, 1e-05
      %v4313 = vadd.f32 %v4305, 1e-05
      %v4314 = vrsqrt.pop %v4306
      %v4315 = vrsqrt.pop %v4307
      %v4316 = vrsqrt.pop %v4308
      %v4317 = vrsqrt.pop %v4309
      %v4318 = vrsqrt.pop %v4310
      %v4319 = vrsqrt.pop %v4311
      %v4320 = vrsqrt.pop %v4312
      %v4321 = vrsqrt.pop %v4313
      %v4322 = vmul.f32 %v4258, %v4314
      %v4323 = vmul.f32 %v4259, %v4315
      %v4324 = vmul.f32 %v4260, %v4316
      %v4325 = vmul.f32 %v4261, %v4317
      %v4326 = vmul.f32 %v4262, %v4318
      %v4327 = vmul.f32 %v4263, %v4319
      %v4328 = vmul.f32 %v4264, %v4320
      %v4329 = vmul.f32 %v4265, %v4321
      %v4331 = vlaneseq
      %v4332 = vshrl.u32 %v4331, 7
      %v4333 = vsub.s32 0, %v4332
      %v4334 = vrot.slane %v2789, %v4333
      %v4336 = vmul.f32 %v4322, %v4334
      %v4337 = vmul.f32 %v4323, %v4334
      %v4338 = vmul.f32 %v4324, %v4334
      %v4339 = vmul.f32 %v4325, %v4334
      %v4340 = vmul.f32 %v4326, %v4334
      %v4341 = vmul.f32 %v4327, %v4334
      %v4342 = vmul.f32 %v4328, %v4334
      %v4343 = vmul.f32 %v4329, %v4334
      %v4345 = vlaneseq
      %v4346 = vshrl.u32 %v4345, 7
      %v4347 = vsub.s32 0, %v4346
      %v4348 = vrot.slane %v2790, %v4347
      %v4350 = vadd.f32 %v4336, %v4348
      %v4351 = vadd.f32 %v4337, %v4348
      %v4352 = vadd.f32 %v4338, %v4348
      %v4353 = vadd.f32 %v4339, %v4348
      %v4354 = vadd.f32 %v4340, %v4348
      %v4355 = vadd.f32 %v4341, %v4348
      %v4356 = vadd.f32 %v4342, %v4348
      %v4357 = vadd.f32 %v4343, %v4348
      %v4358 = vadd.f32 %v948, %v4350
      %v4359 = vadd.f32 %v950, %v4351
      %v4360 = vadd.f32 %v952, %v4352
      %v4361 = vadd.f32 %v954, %v4353
      %v4362 = vadd.f32 %v956, %v4354
      %v4363 = vadd.f32 %v958, %v4355
      %v4364 = vadd.f32 %v960, %v4356
      %v4365 = vadd.f32 %v962, %v4357
      %4366 = vst.msk [vmem:[%s764] sm:$0xff] %vm2462, %v4358
      %4367 = vst.msk [vmem:[%s764 + $0x8] sm:$0xff] %vm2462, %v4359
      %4368 = vst.msk [vmem:[%s764 + $0x10] sm:$0xff] %vm2462, %v4360
      %4369 = vst.msk [vmem:[%s764 + $0x18] sm:$0xff] %vm2462, %v4361
      %4370 = vst.msk [vmem:[%s764 + $0x20] sm:$0xff] %vm2462, %v4362
      %4371 = vst.msk [vmem:[%s764 + $0x28] sm:$0xff] %vm2462, %v4363
      %4372 = vst.msk [vmem:[%s764 + $0x30] sm:$0xff] %vm2462, %v4364
      %4373 = vst.msk [vmem:[%s764 + $0x38] sm:$0xff] %vm2462, %v4365
      %p4374 = scmp.lt.s32.totalorder %s36, 1
      %s4375 = scalar_select %p4374, %s36, 1
      %s4376 = smul.addr %s4375, 8
      %s4377 = smul.addr %s4376, 8
      %s4378 = scalar_lea.vmem %s25, %s4377
      // Predicated region
      $region121: #{down_fwd.1} parent=119 // pred_check
        %p4379 = pneg %p584
      $region122: #{down_fwd.1} parent=119 // pred_check_branch
        %4381 = sbr.rel (%p4379) target = $region124
      $region123: #{down_fwd.1} parent=119 // pred_region
        _
      $region124: #{down_fwd.1} parent=119 // pred_fallthru
        _
    $region120: #{down_fwd.1} parent=5 // pred_fallthru
      _
    %p4382 = scmp.le.s32.totalorder 2, %s31
    // Predicated region
    $region125: #{down_fwd.1} parent=5 // pred_check
      %p4383 = pneg %p4382
    $region126: #{down_fwd.1} parent=5 // pred_check_branch
      %4385 = sbr.rel (%p4383) target = $region128
    $region127: #{down_fwd.1} parent=5 // pred_region
      %s4386 = ssub.s32 %s31, 2
      // Predicated region
      $region129: #{down_fwd.1} parent=127 // pred_check
        %p4387 = pneg %p590
      $region130: #{down_fwd.1} parent=127 // pred_check_branch
        %4389 = sbr.rel (%p4387) target = $region132
      $region131: #{down_fwd.1} parent=127 // pred_region
        %p4390 = scmp.lt.s32.totalorder %s37, 1
        %s4391 = scalar_select %p4390, %s37, 1
        %s4392 = smul.addr %s4391, 8
        %s4393 = smul.addr %s4392, 8
        %s4394 = scalar_lea.vmem %s25, %s4393
      $region132: #{down_fwd.1} parent=127 // pred_fallthru
        _
    $region128: #{down_fwd.1} parent=5 // pred_fallthru
      _
  $region6: #{down_fwd.1} parent=0 // loop_footer
    %s35 = sadd.s32 1, %s31
  $region7: #{down_fwd.1} parent=0 // loop_footer_branch
    %30 = sbr.rel target = $region3
  $region8: #{down_fwd.1} parent=0 // loop_exit
    _

</llo_original>
